<compile_context>
chip_gen: v7x
topology: tpu7x:2x2x1
jax: 0.10.0
libtpu: 0.0.40
codegen_flags: <defaults>
</compile_context>

<pallas_src>
import functools

import jax
import jax.numpy as jnp
from jax import lax
from jax.experimental import pallas as pl
from jax.experimental.pallas import tpu as pltpu

# Module hyper-parameters (match the PyTorch source)
K_SIZES = (8, 4, 3)
K_STRIDES = (2, 2, 1)
N_KERNELS = (32, 64, 64)

COMPUTE_DTYPE = jnp.bfloat16     # MXU inputs + inter-layer activations
LANE = 128                       # TPU lane width (head blocks pad to it)


@functools.lru_cache(maxsize=1)
def _vmem_limit():
    """Scoped-VMEM limit: half the chip's physical VMEM (64 MiB on v5e/v6e,
    32 MiB on v7x).  Falls back to a safe 32 MiB if the query fails."""
    try:
        cap = int(pltpu.get_tpu_info().vmem_capacity_bytes)
        return min(max(cap // 2, 32 * 1024 * 1024), 100 * 1024 * 1024)
    except Exception:
        return 32 * 1024 * 1024


# ---------------------------------------------------------------------------
# Pallas kernels
# ---------------------------------------------------------------------------
def _matmul_bias_relu_kernel(x_ref, w_ref, b_ref, o_ref):
    """o = relu(x @ w + b).  x:(M,K) bf16, w:(K,N) bf16, b:(1,N) f32, o:(M,N) bf16."""
    acc = jnp.dot(x_ref[...], w_ref[...], preferred_element_type=jnp.float32)
    o_ref[...] = jnp.maximum(acc + b_ref[...], 0.0).astype(o_ref.dtype)


def pallas_conv_matmul(patches, w, b, *, tm=1024):
    """im2col conv as a matmul.  Output has exactly Cout columns in bf16 (no
    padded-lane write-back / no XLA slice or cast between layers)."""
    M, K = patches.shape
    Kw, N = w.shape
    assert K == Kw
    ce = pl.CostEstimate(
        flops=int(2 * M * K * N),
        transcendentals=0,
        bytes_accessed=int(patches.size * patches.dtype.itemsize
                           + w.size * w.dtype.itemsize
                           + b.size * 4 + M * N * 2))
    if M <= tm:
        # Small patch matrices: one whole-array VMEM block, no grid.
        return pl.pallas_call(
            _matmul_bias_relu_kernel,
            out_shape=jax.ShapeDtypeStruct((M, N), COMPUTE_DTYPE),
            in_specs=[pl.BlockSpec(memory_space=pltpu.MemorySpace.VMEM)] * 3,
            out_specs=pl.BlockSpec(memory_space=pltpu.MemorySpace.VMEM),
            compiler_params=pltpu.CompilerParams(vmem_limit_bytes=_vmem_limit()),
            cost_estimate=ce,
        )(patches, w, b)
    # Large M: tile rows; "parallel" lets Mosaic shard across v7x's two TCs.
    return pl.pallas_call(
        _matmul_bias_relu_kernel,
        out_shape=jax.ShapeDtypeStruct((M, N), COMPUTE_DTYPE),
        grid=(pl.cdiv(M, tm),),
        in_specs=[pl.BlockSpec((tm, K), lambda i: (i, 0)),
                  pl.BlockSpec((K, N), lambda i: (0, 0)),
                  pl.BlockSpec((1, N), lambda i: (0, 0))],
        out_specs=pl.BlockSpec((tm, N), lambda i: (i, 0)),
        compiler_params=pltpu.CompilerParams(
            dimension_semantics=("parallel",), vmem_limit_bytes=_vmem_limit()),
        cost_estimate=ce,
    )(patches, w, b)


def _dueling_softmax_store(head, q_ref, n_actions, n_atoms):
    """Dueling mean-subtract + exact atom softmax; lane-dense stores into the
    2-D (B, A*128) output slab (one full 128-lane block per action)."""
    A = n_actions
    B = head.shape[0]
    mean = head[:, 0:LANE]
    for a in range(1, A):
        mean = mean + head[:, a * LANE:(a + 1) * LANE]
    mean = mean * (1.0 / A)
    ys = head[:, A * LANE:(A + 1) * LANE]
    valid = lax.broadcasted_iota(jnp.int32, (B, LANE), 1) < n_atoms
    for a in range(A):
        logits = head[:, a * LANE:(a + 1) * LANE] - mean + ys
        logits = jnp.where(valid, logits, -1e30)            # mask atom padding
        m = jnp.max(logits, axis=1, keepdims=True)
        e = jnp.where(valid, jnp.exp(logits - m), 0.0)
        denom = jnp.sum(e, axis=1, keepdims=True)
        q_ref[:, a * LANE:(a + 1) * LANE] = (e / denom).astype(q_ref.dtype)


def _fused_head_folded_kernel(x_ref, w3_ref, b3_ref, wm_ref, bm_ref,
                              wh_ref, bh_ref, q_ref, *, n_actions, n_atoms):
    """conv3 (1x1 output map) -> main FC (1024) + ReLU -> merged adv/value
    matmul -> dueling softmax, all in one launch."""
    h = jnp.dot(x_ref[...], w3_ref[...], preferred_element_type=jnp.float32)
    h = jnp.maximum(h + b3_ref[...], 0.0)
    h1 = jnp.dot(h.astype(wm_ref.dtype), wm_ref[...],
                 preferred_element_type=jnp.float32)
    h1 = jnp.maximum(h1 + bm_ref[...], 0.0)
    head = jnp.dot(h1.astype(wh_ref.dtype), wh_ref[...],
                   preferred_element_type=jnp.float32) + bh_ref[...]
    _dueling_softmax_store(head, q_ref, n_actions, n_atoms)


def _head_fc_kernel(x_ref, wm_ref, bm_ref, wh_ref, bh_ref, q_ref, acc_ref,
                    *, n_actions, n_atoms):
    """General head: K-tiled main FC (grid over K, f32 VMEM accumulator),
    then merged adv/value matmul + dueling softmax on the last K step."""
    k = pl.program_id(0)

    @pl.when(k == 0)
    def _():
        acc_ref[...] = jnp.zeros_like(acc_ref)

    acc_ref[...] += jnp.dot(x_ref[...], wm_ref[...],
                            preferred_element_type=jnp.float32)

    @pl.when(k == pl.num_programs(0) - 1)
    def _():
        h1 = jnp.maximum(acc_ref[...] + bm_ref[...], 0.0)
        head = jnp.dot(h1.astype(wh_ref.dtype), wh_ref[...],
                       preferred_element_type=jnp.float32) + bh_ref[...]
        _dueling_softmax_store(head, q_ref, n_actions, n_atoms)


def pallas_fused_head_folded(x, w3, b3, wm, bm, wh, bh, *, n_actions, n_atoms):
    """Folded path: conv3 output map is 1x1, everything past conv2 in one call."""
    B = x.shape[0]
    args = (x, w3, b3, wm, bm, wh, bh)
    flops = 2 * B * (x.shape[1] * w3.shape[1]
                     + wm.shape[0] * wm.shape[1] + wh.shape[0] * wh.shape[1])
    bytes_acc = sum(int(a.size) * a.dtype.itemsize for a in args) \
        + B * n_actions * LANE * 4
    # TODO(synk): give this a batch grid axis (parallel) once B is non-trivial
    # so the second v7x TensorCore is used.
    return pl.pallas_call(
        functools.partial(_fused_head_folded_kernel,
                          n_actions=n_actions, n_atoms=n_atoms),
        out_shape=jax.ShapeDtypeStruct((B, n_actions * LANE), jnp.float32),
        in_specs=[pl.BlockSpec(memory_space=pltpu.MemorySpace.VMEM)] * len(args),
        out_specs=pl.BlockSpec(memory_space=pltpu.MemorySpace.VMEM),
        compiler_params=pltpu.CompilerParams(vmem_limit_bytes=_vmem_limit()),
        cost_estimate=pl.CostEstimate(flops=int(flops),
                                      transcendentals=int(B * n_actions * LANE),
                                      bytes_accessed=int(bytes_acc)),
    )(*args)


def pallas_head_general(x, wm, bm, wh, bh, *, n_actions, n_atoms, fc_tk=None):
    """General path: K-tiled main FC so main_w never needs whole-array VMEM
    residency (Atari-scale input_size=16384 -> 32 MiB bf16)."""
    B, K = x.shape
    F = wm.shape[1]
    HN = wh.shape[1]
    if fc_tk is not None and K % fc_tk == 0:
        tk = fc_tk
    else:
        tk = K
        for cand in (1024, 512, 256):     # multiples of 128 (lane constraint)
            if K % cand == 0:
                tk = cand
                break
    kb = K // tk
    flops = 2 * B * (K * F + wh.shape[0] * HN)
    bytes_acc = (x.size * x.dtype.itemsize + wm.size * wm.dtype.itemsize
                 + bm.size * 4 + wh.size * wh.dtype.itemsize + bh.size * 4
                 + B * n_actions * LANE * 4)
    return pl.pallas_call(
        functools.partial(_head_fc_kernel, n_actions=n_actions, n_atoms=n_atoms),
        out_shape=jax.ShapeDtypeStruct((B, n_actions * LANE), jnp.float32),
        grid=(kb,),
        in_specs=[pl.BlockSpec((B, tk), lambda k: (0, k)),
                  pl.BlockSpec((tk, F), lambda k: (k, 0)),
                  pl.BlockSpec((1, F), lambda k: (0, 0)),
                  pl.BlockSpec((wh.shape[0], HN), lambda k: (0, 0)),
                  pl.BlockSpec((1, HN), lambda k: (0, 0))],
        out_specs=pl.BlockSpec((B, n_actions * LANE), lambda k: (0, 0)),
        scratch_shapes=[pltpu.VMEM((B, F), jnp.float32)],
        compiler_params=pltpu.CompilerParams(
            dimension_semantics=("arbitrary",), vmem_limit_bytes=_vmem_limit()),
        cost_estimate=pl.CostEstimate(flops=int(flops),
                                      transcendentals=int(B * n_actions * LANE),
                                      bytes_accessed=int(bytes_acc)),
    )(x, wm, bm, wh, bh)


# ---------------------------------------------------------------------------
# Glue: NHWC im2col (matches torch Conv2d "valid" semantics), weight prep.
# ---------------------------------------------------------------------------
def im2col_nhwc(x, ksize, stride):
    """x: (B, H, W, C) -> (B*OH*OW, ksize*ksize*C) with (kh, kw, c) feature order."""
    B, H, W, C = x.shape
    OH = (H - ksize) // stride + 1
    OW = (W - ksize) // stride + 1
    cols = []
    for kh in range(ksize):
        for kw in range(ksize):
            cols.append(x[:, kh:kh + stride * OH:stride,
                          kw:kw + stride * OW:stride, :])
    p = jnp.stack(cols, axis=3)                  # (B, OH, OW, k*k, C)
    return p.reshape(B * OH * OW, ksize * ksize * C), OH, OW


def _flatten_conv_weight(w):
    """torch (Cout, Cin, kh, kw) -> (kh*kw*Cin, Cout), matching im2col_nhwc order."""
    cout = w.shape[0]
    return jnp.transpose(w, (2, 3, 1, 0)).reshape(-1, cout)


def conv_output_size(input_width):
    s = input_width
    for kk, st in zip(K_SIZES, K_STRIDES):
        s = (s - kk) // st + 1
    return s


def init_params(key, n_actions, n_atoms, v_min, v_max, input_width,
                n_input_channels=4, bias=0.1):
    """f32 master params, PyTorch layouts (Conv2d OIHW; Linear stored as (in, out))."""
    assert n_atoms >= 2 and v_min < v_max
    ks = jax.random.split(key, 6)

    def lecun(k, shape, fan_in):                 # init_chainer_default
        return jax.random.normal(k, shape, jnp.float32) / jnp.sqrt(float(fan_in))

    conv_defs = [(n_input_channels, N_KERNELS[0], K_SIZES[0]),
                 (N_KERNELS[0], N_KERNELS[1], K_SIZES[1]),
                 (N_KERNELS[1], N_KERNELS[2], K_SIZES[2])]
    convs = []
    for i, (cin, cout, kk) in enumerate(conv_defs):
        w = lecun(ks[i], (cout, cin, kk, kk), cin * kk * kk)
        b = jnp.full((cout,), bias, jnp.float32)  # constant_bias_initializer(0.1)
        convs.append((w, b))

    feat = conv_output_size(input_width)
    input_size = feat * feat * N_KERNELS[2]
    return {
        "convs": convs,
        "main_w": lecun(ks[3], (input_size, 1024), input_size),
        "main_b": jnp.zeros((1024,), jnp.float32),
        "a_w": lecun(ks[4], (512, n_actions * n_atoms), 512),
        "a_b": jnp.zeros((n_actions * n_atoms,), jnp.float32),
        "v_w": lecun(ks[5], (512, n_atoms), 512),
        "v_b": jnp.zeros((n_atoms,), jnp.float32),
        "z_values": jnp.linspace(v_min, v_max, n_atoms, dtype=jnp.float32),
    }


def prepare_inference_params(params, n_actions, n_atoms, input_width):
    """Kernel-ready params: bf16 weights, f32 biases, merged dueling-head weight
    (one 128-lane block per action + one value block), conv3 folded into the
    head when its output map is 1x1."""
    assert n_atoms <= LANE, "per-action 128-lane block layout assumes n_atoms <= 128"
    feat = conv_output_size(input_width)
    fold_conv3 = (feat == 1)

    conv_params = params["convs"][:2] if fold_conv3 else params["convs"]
    prep = {"fold_conv3": fold_conv3, "z_values": params["z_values"], "convs": []}
    for w, b in conv_params:
        prep["convs"].append((
            _flatten_conv_weight(w).astype(COMPUTE_DTYPE),   # (K, Cout), no padding
            b.reshape(1, -1).astype(jnp.float32),
            int(w.shape[0]),
        ))
    if fold_conv3:
        w3, b3 = params["convs"][2]
        prep["conv3_w"] = _flatten_conv_weight(w3).astype(COMPUTE_DTYPE)  # (576, 64)
        prep["conv3_b"] = b3.reshape(1, -1).astype(jnp.float32)

    prep["main_w"] = params["main_w"].astype(COMPUTE_DTYPE)
    prep["main_b"] = params["main_b"].reshape(1, -1).astype(jnp.float32)

    # Merged advantage+value head: one 128-wide lane block per action plus one
    # block for the value stream -> a single lane-dense (1024, (A+1)*128) matmul.
    A, N = n_actions, n_atoms
    wh = jnp.zeros((1024, (A + 1) * LANE), jnp.float32)
    bh = jnp.zeros((1, (A + 1) * LANE), jnp.float32)
    for a in range(A):
        wh = wh.at[:512, a * LANE:a * LANE + N].set(params["a_w"][:, a * N:(a + 1) * N])
        bh = bh.at[0, a * LANE:a * LANE + N].set(params["a_b"][a * N:(a + 1) * N])
    wh = wh.at[512:, A * LANE:A * LANE + N].set(params["v_w"])
    bh = bh.at[0, A * LANE:A * LANE + N].set(params["v_b"])
    prep["head_w"] = wh.astype(COMPUTE_DTYPE)
    prep["head_b"] = bh
    return prep


def distributional_dueling_dqn_forward(prep, x, n_actions, n_atoms, *,
                                       conv_tm=1024, fc_tk=None):
    """Returns (q, z_values); q: (B, n_actions, n_atoms), rows sum to 1."""
    B = x.shape[0]
    # NCHW -> NHWC once, cast to bf16 BEFORE im2col (halves patch-matrix bytes).
    h = jnp.transpose(x, (0, 2, 3, 1)).astype(COMPUTE_DTYPE)
    for (wf, bf, cout), kk, st in zip(prep["convs"], K_SIZES, K_STRIDES):
        # TODO(synk): at production sizes (84x84) extract patches in-kernel from a
        # VMEM-resident input tile to remove the remaining ~K^2 HBM read
        # amplification of XLA-materialized im2col.
        patches, OH, OW = im2col_nhwc(h, kk, st)
        out = pallas_conv_matmul(patches, wf, bf, tm=conv_tm)   # bf16, exactly cout cols
        h = out.reshape(B, OH, OW, cout)

    if prep["fold_conv3"]:
        # conv3 output map is 1x1: conv3 + main FC + merged head + dueling softmax
        # fused into one kernel launch.  The conv3 im2col patch is just the whole
        # (3,3,64) feature map flattened in (h, w, c) order.
        patches, _, _ = im2col_nhwc(h, K_SIZES[2], K_STRIDES[2])   # (B, 576)
        q_pad = pallas_fused_head_folded(
            patches, prep["conv3_w"], prep["conv3_b"],
            prep["main_w"], prep["main_b"], prep["head_w"], prep["head_b"],
            n_actions=n_actions, n_atoms=n_atoms)
    else:
        # General path: flatten in torch's NCHW order, K-tiled main FC + fused head.
        flat = jnp.transpose(h, (0, 3, 1, 2)).reshape(B, -1)
        q_pad = pallas_head_general(
            flat, prep["main_w"], prep["main_b"], prep["head_w"], prep["head_b"],
            n_actions=n_actions, n_atoms=n_atoms, fc_tk=fc_tk)

    # (B, A*128) lane-dense slab -> (B, A, n_atoms): reshape + slice only (no transpose).
    q = q_pad.reshape(B, n_actions, LANE)[:, :, :n_atoms]
    # TODO(synk): DistributionalDiscreteActionValue wrapper has no Pallas
    # equivalent; return the (q, z_values) pair it would wrap.
    return q, prep["z_values"]


def reference_forward(params, x, n_actions, n_atoms):
    """Pure-JAX f32 reference replicating the PyTorch forward exactly."""
    h = x
    for (w, b), st in zip(params["convs"], K_STRIDES):
        h = lax.conv_general_dilated(h, w, (st, st), "VALID",
                                     dimension_numbers=("NCHW", "OIHW", "NCHW"))
        h = jnp.maximum(h + b.reshape(1, -1, 1, 1), 0.0)
    B = x.shape[0]
    flat = h.reshape(B, -1)
    h1 = jnp.maximum(flat @ params["main_w"] + params["main_b"], 0.0)
    h_a, h_v = h1[:, :512], h1[:, 512:]
    ya = (h_a @ params["a_w"] + params["a_b"]).reshape(B, n_actions, n_atoms)
    ys = (h_v @ params["v_w"] + params["v_b"]).reshape(B, 1, n_atoms)
    logits = ya - jnp.sum(ya, axis=1, keepdims=True) / n_actions + ys
    return jax.nn.softmax(logits, axis=-1)


if __name__ == "__main__":
    batch = 2
    n_input_channels = 4
    n_actions = 4
    n_atoms = 51
    v_min, v_max = -10.0, 10.0

    key = jax.random.PRNGKey(0)

    # Two small configs:
    #  - width 24: 24->9->3->1 feature map, exercises the fully fused folded head.
    #  - width 28: 28->11->4->2 feature map, exercises the row-tiled conv grid
    #    path (conv_tm=128) and the K-tiled main-FC head (fc_tk=128 -> 2 K steps).
    configs = [
        (24, 1024, None),
        (28, 128, 128),
    ]
    for input_width, conv_tm, fc_tk in configs:
        key, pkey, xkey = jax.random.split(key, 3)
        params = init_params(pkey, n_actions, n_atoms, v_min, v_max,
                             input_width, n_input_channels)
        prep = prepare_inference_params(params, n_actions, n_atoms, input_width)
        x = jax.random.normal(
            xkey, (batch, n_input_channels, input_width, input_width),
            dtype=jnp.float32)

        fwd = jax.jit(functools.partial(
            distributional_dueling_dqn_forward, prep,
            n_actions=n_actions, n_atoms=n_atoms, conv_tm=conv_tm, fc_tk=fc_tk))
        q, z = fwd(x)
        q = jax.block_until_ready(q)
        z = jax.block_until_ready(z)

        assert q.shape == (batch, n_actions, n_atoms)
        assert z.shape == (n_atoms,)
        # exact softmax divide -> rows sum to 1 tightly
        row_err = float(jnp.max(jnp.abs(jnp.sum(q, axis=-1) - 1.0)))
        assert row_err < 1e-3, f"width={input_width}: row-sum err {row_err}"

        # validate against the f32 pure-JAX reference of the PyTorch forward
        q_ref = reference_forward(params, x, n_actions, n_atoms)
        err = float(jnp.max(jnp.abs(q - q_ref)))
        assert err < 2.5e-2, f"width={input_width}: max |q - q_ref| = {err}"

    print("KERNEL_OK")
</pallas_src>

<mosaic_0001>
module attributes {stable_mosaic.version = 11 : i64} {
  func.func @_matmul_bias_relu_kernel(%arg0: memref<162x256xbf16, #tpu.memory_space<vmem>>, %arg1: memref<256x32xbf16, #tpu.memory_space<vmem>>, %arg2: memref<1x32xf32, #tpu.memory_space<vmem>>, %arg3: memref<162x32xbf16, #tpu.memory_space<vmem>>) attributes {dimension_semantics = [], scalar_prefetch = 0 : i64, scratch_operands = 0 : i64, tpu.core_type = #tpu.core_type<tc>} {
    %c0 = arith.constant 0 : index
    %c0_0 = arith.constant 0 : index
    %0 = vector.load %arg0[%c0, %c0_0] : memref<162x256xbf16, #tpu.memory_space<vmem>>, vector<162x256xbf16>
    %c0_1 = arith.constant 0 : index
    %c0_2 = arith.constant 0 : index
    %1 = vector.load %arg1[%c0_1, %c0_2] : memref<256x32xbf16, #tpu.memory_space<vmem>>, vector<256x32xbf16>
    %cst = arith.constant dense<0.000000e+00> : vector<162x32xf32>
    %2 = tpu.matmul %0, %1, %cst {dimension_numbers = #tpu.dot_dimension_numbers<[1], [0], [0], [1], [0, 0, 1, 1], [], []>} : vector<162x256xbf16>, vector<256x32xbf16>, vector<162x32xf32> -> vector<162x32xf32>
    %c0_3 = arith.constant 0 : index
    %c0_4 = arith.constant 0 : index
    %3 = vector.load %arg2[%c0_3, %c0_4] : memref<1x32xf32, #tpu.memory_space<vmem>>, vector<1x32xf32>
    %4 = vector.broadcast %3 : vector<1x32xf32> to vector<162x32xf32>
    %5 = arith.addf %2, %4 : vector<162x32xf32>
    %cst_5 = arith.constant 0.000000e+00 : f32
    %6 = vector.broadcast %cst_5 : f32 to vector<162x32xf32>
    %7 = arith.maximumf %5, %6 : vector<162x32xf32>
    %8 = arith.truncf %7 : vector<162x32xf32> to vector<162x32xbf16>
    %c0_6 = arith.constant 0 : index
    %c0_7 = arith.constant 0 : index
    %9 = vector.load %arg3[%c0_6, %c0_7] : memref<162x32xbf16, #tpu.memory_space<vmem>>, vector<162x32xbf16>
    tpu.vector_store %arg3[%c0_6, %c0_7], %8 {strides = array<i32>} : memref<162x32xbf16, #tpu.memory_space<vmem>>, vector<162x32xbf16>,
    return
  }
}

module attributes {stable_mosaic.version = 11 : i64} {
  func.func @_matmul_bias_relu_kernel(%arg0: memref<18x512xbf16, #tpu.memory_space<vmem>>, %arg1: memref<512x64xbf16, #tpu.memory_space<vmem>>, %arg2: memref<1x64xf32, #tpu.memory_space<vmem>>, %arg3: memref<18x64xbf16, #tpu.memory_space<vmem>>) attributes {dimension_semantics = [], scalar_prefetch = 0 : i64, scratch_operands = 0 : i64, tpu.core_type = #tpu.core_type<tc>} {
    %c0 = arith.constant 0 : index
    %c0_0 = arith.constant 0 : index
    %0 = vector.load %arg0[%c0, %c0_0] : memref<18x512xbf16, #tpu.memory_space<vmem>>, vector<18x512xbf16>
    %c0_1 = arith.constant 0 : index
    %c0_2 = arith.constant 0 : index
    %1 = vector.load %arg1[%c0_1, %c0_2] : memref<512x64xbf16, #tpu.memory_space<vmem>>, vector<512x64xbf16>
    %cst = arith.constant dense<0.000000e+00> : vector<18x64xf32>
    %2 = tpu.matmul %0, %1, %cst {dimension_numbers = #tpu.dot_dimension_numbers<[1], [0], [0], [1], [0, 0, 1, 1], [], []>} : vector<18x512xbf16>, vector<512x64xbf16>, vector<18x64xf32> -> vector<18x64xf32>
    %c0_3 = arith.constant 0 : index
    %c0_4 = arith.constant 0 : index
    %3 = vector.load %arg2[%c0_3, %c0_4] : memref<1x64xf32, #tpu.memory_space<vmem>>, vector<1x64xf32>
    %4 = vector.broadcast %3 : vector<1x64xf32> to vector<18x64xf32>
    %5 = arith.addf %2, %4 : vector<18x64xf32>
    %cst_5 = arith.constant 0.000000e+00 : f32
    %6 = vector.broadcast %cst_5 : f32 to vector<18x64xf32>
    %7 = arith.maximumf %5, %6 : vector<18x64xf32>
    %8 = arith.truncf %7 : vector<18x64xf32> to vector<18x64xbf16>
    %c0_6 = arith.constant 0 : index
    %c0_7 = arith.constant 0 : index
    %9 = vector.load %arg3[%c0_6, %c0_7] : memref<18x64xbf16, #tpu.memory_space<vmem>>, vector<18x64xbf16>
    tpu.vector_store %arg3[%c0_6, %c0_7], %8 {strides = array<i32>} : memref<18x64xbf16, #tpu.memory_space<vmem>>, vector<18x64xbf16>,
    return
  }
}

module attributes {stable_mosaic.version = 11 : i64} {
  func.func @_fused_head_folded_kernel(%arg0: memref<2x576xbf16, #tpu.memory_space<vmem>>, %arg1: memref<576x64xbf16, #tpu.memory_space<vmem>>, %arg2: memref<1x64xf32, #tpu.memory_space<vmem>>, %arg3: memref<64x1024xbf16, #tpu.memory_space<vmem>>, %arg4: memref<1x1024xf32, #tpu.memory_space<vmem>>, %arg5: memref<1024x640xbf16, #tpu.memory_space<vmem>>, %arg6: memref<1x640xf32, #tpu.memory_space<vmem>>, %arg7: memref<2x512xf32, #tpu.memory_space<vmem>>) attributes {dimension_semantics = [], scalar_prefetch = 0 : i64, scratch_operands = 0 : i64, tpu.core_type = #tpu.core_type<tc>} {
    %c0 = arith.constant 0 : index
    %c0_0 = arith.constant 0 : index
    %0 = vector.load %arg0[%c0, %c0_0] : memref<2x576xbf16, #tpu.memory_space<vmem>>, vector<2x576xbf16>
    %c0_1 = arith.constant 0 : index
    %c0_2 = arith.constant 0 : index
    %1 = vector.load %arg1[%c0_1, %c0_2] : memref<576x64xbf16, #tpu.memory_space<vmem>>, vector<576x64xbf16>
    %cst = arith.constant dense<0.000000e+00> : vector<2x64xf32>
    %2 = tpu.matmul %0, %1, %cst {dimension_numbers = #tpu.dot_dimension_numbers<[1], [0], [0], [1], [0, 0, 1, 1], [], []>} : vector<2x576xbf16>, vector<576x64xbf16>, vector<2x64xf32> -> vector<2x64xf32>
    %c0_3 = arith.constant 0 : index
    %c0_4 = arith.constant 0 : index
    %3 = vector.load %arg2[%c0_3, %c0_4] : memref<1x64xf32, #tpu.memory_space<vmem>>, vector<1x64xf32>
    %4 = vector.broadcast %3 : vector<1x64xf32> to vector<2x64xf32>
    %5 = arith.addf %2, %4 : vector<2x64xf32>
    %cst_5 = arith.constant 0.000000e+00 : f32
    %6 = vector.broadcast %cst_5 : f32 to vector<2x64xf32>
    %7 = arith.maximumf %5, %6 : vector<2x64xf32>
    %8 = arith.truncf %7 : vector<2x64xf32> to vector<2x64xbf16>
    %c0_6 = arith.constant 0 : index
    %c0_7 = arith.constant 0 : index
    %9 = vector.load %arg3[%c0_6, %c0_7] : memref<64x1024xbf16, #tpu.memory_space<vmem>>, vector<64x1024xbf16>
    %cst_8 = arith.constant dense<0.000000e+00> : vector<2x1024xf32>
    %10 = tpu.matmul %8, %9, %cst_8 {dimension_numbers = #tpu.dot_dimension_numbers<[1], [0], [0], [1], [0, 0, 1, 1], [], []>} : vector<2x64xbf16>, vector<64x1024xbf16>, vector<2x1024xf32> -> vector<2x1024xf32>
    %c0_9 = arith.constant 0 : index
    %c0_10 = arith.constant 0 : index
    %11 = vector.load %arg4[%c0_9, %c0_10] : memref<1x1024xf32, #tpu.memory_space<vmem>>, vector<1x1024xf32>
    %12 = vector.broadcast %11 : vector<1x1024xf32> to vector<2x1024xf32>
    %13 = arith.addf %10, %12 : vector<2x1024xf32>
    %cst_11 = arith.constant 0.000000e+00 : f32
    %14 = vector.broadcast %cst_11 : f32 to vector<2x1024xf32>
    %15 = arith.maximumf %13, %14 : vector<2x1024xf32>
    %16 = arith.truncf %15 : vector<2x1024xf32> to vector<2x1024xbf16>
    %c0_12 = arith.constant 0 : index
    %c0_13 = arith.constant 0 : index
    %17 = vector.load %arg5[%c0_12, %c0_13] : memref<1024x640xbf16, #tpu.memory_space<vmem>>, vector<1024x640xbf16>
    %cst_14 = arith.constant dense<0.000000e+00> : vector<2x640xf32>
    %18 = tpu.matmul %16, %17, %cst_14 {dimension_numbers = #tpu.dot_dimension_numbers<[1], [0], [0], [1], [0, 0, 1, 1], [], []>} : vector<2x1024xbf16>, vector<1024x640xbf16>, vector<2x640xf32> -> vector<2x640xf32>
    %c0_15 = arith.constant 0 : index
    %c0_16 = arith.constant 0 : index
    %19 = vector.load %arg6[%c0_15, %c0_16] : memref<1x640xf32, #tpu.memory_space<vmem>>, vector<1x640xf32>
    %20 = vector.broadcast %19 : vector<1x640xf32> to vector<2x640xf32>
    %21 = arith.addf %18, %20 : vector<2x640xf32>
    %22 = vector.extract_strided_slice %21 {offsets = [0, 0], sizes = [2, 128], strides = [1, 1]} : vector<2x640xf32> to vector<2x128xf32>
    %23 = vector.extract_strided_slice %21 {offsets = [0, 128], sizes = [2, 128], strides = [1, 1]} : vector<2x640xf32> to vector<2x128xf32>
    %24 = arith.addf %22, %23 : vector<2x128xf32>
    %25 = vector.extract_strided_slice %21 {offsets = [0, 256], sizes = [2, 128], strides = [1, 1]} : vector<2x640xf32> to vector<2x128xf32>
    %26 = arith.addf %24, %25 : vector<2x128xf32>
    %27 = vector.extract_strided_slice %21 {offsets = [0, 384], sizes = [2, 128], strides = [1, 1]} : vector<2x640xf32> to vector<2x128xf32>
    %28 = arith.addf %26, %27 : vector<2x128xf32>
    %cst_17 = arith.constant 2.500000e-01 : f32
    %29 = vector.broadcast %cst_17 : f32 to vector<2x128xf32>
    %30 = arith.mulf %28, %29 : vector<2x128xf32>
    %31 = vector.extract_strided_slice %21 {offsets = [0, 512], sizes = [2, 128], strides = [1, 1]} : vector<2x640xf32> to vector<2x128xf32>
    %32 = tpu.iota {dimensions = array<i32: 1>} : vector<2x128xi32>
    %c51_i32 = arith.constant 51 : i32
    %33 = vector.broadcast %c51_i32 : i32 to vector<2x128xi32>
    %34 = arith.cmpi slt, %32, %33 : vector<2x128xi32>
    %35 = vector.extract_strided_slice %21 {offsets = [0, 0], sizes = [2, 128], strides = [1, 1]} : vector<2x640xf32> to vector<2x128xf32>
    %36 = arith.subf %35, %30 : vector<2x128xf32>
    %37 = arith.addf %36, %31 : vector<2x128xf32>
    %cst_18 = arith.constant -1.000000e+30 : f32
    %38 = vector.broadcast %cst_18 : f32 to vector<2x128xf32>
    %39 = arith.select %34, %37, %38 : vector<2x128xi1>, vector<2x128xf32>
    %cst_19 = arith.constant dense<0xFF800000> : vector<2xf32>
    %40 = vector.multi_reduction <maximumf>, %39, %cst_19 [1] : vector<2x128xf32> to vector<2xf32>
    %41 = vector.shape_cast %40 : vector<2xf32> to vector<2x1xf32>
    %42 = vector.broadcast %41 : vector<2x1xf32> to vector<2x128xf32>
    %43 = arith.subf %39, %42 : vector<2x128xf32>
    %44 = math.exp %43 : vector<2x128xf32>
    %cst_20 = arith.constant 0.000000e+00 : f32
    %45 = vector.broadcast %cst_20 : f32 to vector<2x128xf32>
    %46 = arith.select %34, %44, %45 : vector<2x128xi1>, vector<2x128xf32>
    %cst_21 = arith.constant dense<0.000000e+00> : vector<2xf32>
    %47 = vector.multi_reduction <add>, %46, %cst_21 [1] : vector<2x128xf32> to vector<2xf32>
    %48 = vector.shape_cast %47 : vector<2xf32> to vector<2x1xf32>
    %49 = vector.broadcast %48 : vector<2x1xf32> to vector<2x128xf32>
    %50 = arith.divf %46, %49 : vector<2x128xf32>
    %c0_22 = arith.constant 0 : index
    %c0_23 = arith.constant 0 : index
    %51 = vector.load %arg7[%c0_22, %c0_23] : memref<2x512xf32, #tpu.memory_space<vmem>>, vector<2x128xf32>
    tpu.vector_store %arg7[%c0_22, %c0_23], %50 {strides = array<i32>} : memref<2x512xf32, #tpu.memory_space<vmem>>, vector<2x128xf32>,
    %52 = vector.extract_strided_slice %21 {offsets = [0, 128], sizes = [2, 128], strides = [1, 1]} : vector<2x640xf32> to vector<2x128xf32>
    %53 = arith.subf %52, %30 : vector<2x128xf32>
    %54 = arith.addf %53, %31 : vector<2x128xf32>
    %cst_24 = arith.constant -1.000000e+30 : f32
    %55 = vector.broadcast %cst_24 : f32 to vector<2x128xf32>
    %56 = arith.select %34, %54, %55 : vector<2x128xi1>, vector<2x128xf32>
    %cst_25 = arith.constant dense<0xFF800000> : vector<2xf32>
    %57 = vector.multi_reduction <maximumf>, %56, %cst_25 [1] : vector<2x128xf32> to vector<2xf32>
    %58 = vector.shape_cast %57 : vector<2xf32> to vector<2x1xf32>
    %59 = vector.broadcast %58 : vector<2x1xf32> to vector<2x128xf32>
    %60 = arith.subf %56, %59 : vector<2x128xf32>
    %61 = math.exp %60 : vector<2x128xf32>
    %cst_26 = arith.constant 0.000000e+00 : f32
    %62 = vector.broadcast %cst_26 : f32 to vector<2x128xf32>
    %63 = arith.select %34, %61, %62 : vector<2x128xi1>, vector<2x128xf32>
    %cst_27 = arith.constant dense<0.000000e+00> : vector<2xf32>
    %64 = vector.multi_reduction <add>, %63, %cst_27 [1] : vector<2x128xf32> to vector<2xf32>
    %65 = vector.shape_cast %64 : vector<2xf32> to vector<2x1xf32>
    %66 = vector.broadcast %65 : vector<2x1xf32> to vector<2x128xf32>
    %67 = arith.divf %63, %66 : vector<2x128xf32>
    %c0_28 = arith.constant 0 : index
    %c128 = arith.constant 128 : index
    %68 = vector.load %arg7[%c0_28, %c128] : memref<2x512xf32, #tpu.memory_space<vmem>>, vector<2x128xf32>
    tpu.vector_store %arg7[%c0_28, %c128], %67 {strides = array<i32>} : memref<2x512xf32, #tpu.memory_space<vmem>>, vector<2x128xf32>,
    %69 = vector.extract_strided_slice %21 {offsets = [0, 256], sizes = [2, 128], strides = [1, 1]} : vector<2x640xf32> to vector<2x128xf32>
    %70 = arith.subf %69, %30 : vector<2x128xf32>
    %71 = arith.addf %70, %31 : vector<2x128xf32>
    %cst_29 = arith.constant -1.000000e+30 : f32
    %72 = vector.broadcast %cst_29 : f32 to vector<2x128xf32>
    %73 = arith.select %34, %71, %72 : vector<2x128xi1>, vector<2x128xf32>
    %cst_30 = arith.constant dense<0xFF800000> : vector<2xf32>
    %74 = vector.multi_reduction <maximumf>, %73, %cst_30 [1] : vector<2x128xf32> to vector<2xf32>
    %75 = vector.shape_cast %74 : vector<2xf32> to vector<2x1xf32>
    %76 = vector.broadcast %75 : vector<2x1xf32> to vector<2x128xf32>
    %77 = arith.subf %73, %76 : vector<2x128xf32>
    %78 = math.exp %77 : vector<2x128xf32>
    %cst_31 = arith.constant 0.000000e+00 : f32
    %79 = vector.broadcast %cst_31 : f32 to vector<2x128xf32>
    %80 = arith.select %34, %78, %79 : vector<2x128xi1>, vector<2x128xf32>
    %cst_32 = arith.constant dense<0.000000e+00> : vector<2xf32>
    %81 = vector.multi_reduction <add>, %80, %cst_32 [1] : vector<2x128xf32> to vector<2xf32>
    %82 = vector.shape_cast %81 : vector<2xf32> to vector<2x1xf32>
    %83 = vector.broadcast %82 : vector<2x1xf32> to vector<2x128xf32>
    %84 = arith.divf %80, %83 : vector<2x128xf32>
    %c0_33 = arith.constant 0 : index
    %c256 = arith.constant 256 : index
    %85 = vector.load %arg7[%c0_33, %c256] : memref<2x512xf32, #tpu.memory_space<vmem>>, vector<2x128xf32>
    tpu.vector_store %arg7[%c0_33, %c256], %84 {strides = array<i32>} : memref<2x512xf32, #tpu.memory_space<vmem>>, vector<2x128xf32>,
    %86 = vector.extract_strided_slice %21 {offsets = [0, 384], sizes = [2, 128], strides = [1, 1]} : vector<2x640xf32> to vector<2x128xf32>
    %87 = arith.subf %86, %30 : vector<2x128xf32>
    %88 = arith.addf %87, %31 : vector<2x128xf32>
    %cst_34 = arith.constant -1.000000e+30 : f32
    %89 = vector.broadcast %cst_34 : f32 to vector<2x128xf32>
    %90 = arith.select %34, %88, %89 : vector<2x128xi1>, vector<2x128xf32>
    %cst_35 = arith.constant dense<0xFF800000> : vector<2xf32>
    %91 = vector.multi_reduction <maximumf>, %90, %cst_35 [1] : vector<2x128xf32> to vector<2xf32>
    %92 = vector.shape_cast %91 : vector<2xf32> to vector<2x1xf32>
    %93 = vector.broadcast %92 : vector<2x1xf32> to vector<2x128xf32>
    %94 = arith.subf %90, %93 : vector<2x128xf32>
    %95 = math.exp %94 : vector<2x128xf32>
    %cst_36 = arith.constant 0.000000e+00 : f32
    %96 = vector.broadcast %cst_36 : f32 to vector<2x128xf32>
    %97 = arith.select %34, %95, %96 : vector<2x128xi1>, vector<2x128xf32>
    %cst_37 = arith.constant dense<0.000000e+00> : vector<2xf32>
    %98 = vector.multi_reduction <add>, %97, %cst_37 [1] : vector<2x128xf32> to vector<2xf32>
    %99 = vector.shape_cast %98 : vector<2xf32> to vector<2x1xf32>
    %100 = vector.broadcast %99 : vector<2x1xf32> to vector<2x128xf32>
    %101 = arith.divf %97, %100 : vector<2x128xf32>
    %c0_38 = arith.constant 0 : index
    %c384 = arith.constant 384 : index
    %102 = vector.load %arg7[%c0_38, %c384] : memref<2x512xf32, #tpu.memory_space<vmem>>, vector<2x128xf32>
    tpu.vector_store %arg7[%c0_38, %c384], %101 {strides = array<i32>} : memref<2x512xf32, #tpu.memory_space<vmem>>, vector<2x128xf32>,
    return
  }
}

</mosaic_0001>

<llo_original>
// kernel: distributional_dueling_dqn_forward.3
$region0: #{distributional_dueling_dqn_forward.3}
  #allocation0 [shape = 'u32[]', space=smem, size = 0x4, offset = 0x4, fixed_abs, tag = 'smem constant byte address 0x4 - core index']
  #allocation1 [shape = 'u32[144,128]{1,0:T(1,128)}', space=vmem, size = 0x12000, scoped, tag = 'internal scratch']
  %s0 = inlined_call_operand.vmem [shape: bf16[162,256], index: 0, kind: input, shape index: {}]
  %s1 = inlined_call_operand.vmem [shape: bf16[256,32], index: 1, kind: input, shape index: {}]
  %s2 = inlined_call_operand.vmem [shape: f32[1,32], index: 2, kind: input, shape index: {}]
  %s3 = inlined_call_operand.vmem [shape: bf16[162,32], index: 3, kind: output, shape index: {}]
  %s4 = sld [smem:[#allocation0]]
  $region22: #{distributional_dueling_dqn_forward.3} parent=0
    _
  %s6 = ssub.s32 1, %s4
  %s7 = scalar_select 0, %s6, %s4
  // Predicated region
  $region2: #{distributional_dueling_dqn_forward.3} parent=0 // pred_check
    _
  $region3: #{distributional_dueling_dqn_forward.3} parent=0 // pred_check_branch
    %9 = sbr.rel (0) target = $region5
  $region4: #{distributional_dueling_dqn_forward.3} parent=0 // pred_region
    _
  $region5: #{distributional_dueling_dqn_forward.3} parent=0 // pred_fallthru
    _
  // Predicated region
  $region6: #{distributional_dueling_dqn_forward.3} parent=0 // pred_check
    _
  $region7: #{distributional_dueling_dqn_forward.3} parent=0 // pred_check_branch
    %11 = sbr.rel (0) target = $region9
  $region8: #{distributional_dueling_dqn_forward.3} parent=0 // pred_region
    _
  $region9: #{distributional_dueling_dqn_forward.3} parent=0 // pred_fallthru
    _
  // Predicated region
  $region10: #{distributional_dueling_dqn_forward.3} parent=0 // pred_check
    _
  $region11: #{distributional_dueling_dqn_forward.3} parent=0 // pred_check_branch
    %13 = sbr.rel (0) target = $region13
  $region12: #{distributional_dueling_dqn_forward.3} parent=0 // pred_region
    _
  $region13: #{distributional_dueling_dqn_forward.3} parent=0 // pred_fallthru
    _
  %v15 = vld [vmem:[%s0] sm:$0xff]
  %v16 = vld [vmem:[%s0 + $0x8] sm:$0xff]
  %v17 = vld [vmem:[%s0 + $0x10] sm:$0xff]
  %v18 = vld [vmem:[%s0 + $0x18] sm:$0xff]
  %v19 = vld [vmem:[%s0 + $0x20] sm:$0xff]
  %v20 = vld [vmem:[%s0 + $0x28] sm:$0xff]
  %v21 = vld [vmem:[%s0 + $0x30] sm:$0xff]
  %v22 = vld [vmem:[%s0 + $0x38] sm:$0xff]
  %v23 = vld [vmem:[%s0 + $0x40] sm:$0xff]
  %v24 = vld [vmem:[%s0 + $0x48] sm:$0xff]
  %v25 = vld [vmem:[%s0 + $0x50] sm:$0xff]
  %v26 = vld [vmem:[%s0 + $0x58] sm:$0xff]
  %v27 = vld [vmem:[%s0 + $0x60] sm:$0xff]
  %v28 = vld [vmem:[%s0 + $0x68] sm:$0xff]
  %v29 = vld [vmem:[%s0 + $0x70] sm:$0xff]
  %v30 = vld [vmem:[%s0 + $0x78] sm:$0xff]
  %v31 = vld [vmem:[%s0 + $0x80] sm:$0xff]
  %v32 = vld [vmem:[%s0 + $0x88] sm:$0xff]
  %v33 = vld [vmem:[%s0 + $0x90] sm:$0xff]
  %v34 = vld [vmem:[%s0 + $0x98] sm:$0xff]
  %v35 = vld [vmem:[%s0 + $0xa0] sm:$0x11]
  %v36 = vld [vmem:[%s1] sm:$0xf]
  %v37 = vld [vmem:[%s1 + $0x4] sm:$0xf]
  %v38 = vld [vmem:[%s1 + $0x8] sm:$0xf]
  %v39 = vld [vmem:[%s1 + $0xc] sm:$0xf]
  %v40 = vld [vmem:[%s1 + $0x10] sm:$0xf]
  %v41 = vld [vmem:[%s1 + $0x14] sm:$0xf]
  %v42 = vld [vmem:[%s1 + $0x18] sm:$0xf]
  %v43 = vld [vmem:[%s1 + $0x1c] sm:$0xf]
  %v44 = vld [vmem:[%s1 + $0x20] sm:$0xf]
  %v45 = vld [vmem:[%s1 + $0x24] sm:$0xf]
  %v46 = vld [vmem:[%s1 + $0x28] sm:$0xf]
  %v47 = vld [vmem:[%s1 + $0x2c] sm:$0xf]
  %v48 = vld [vmem:[%s1 + $0x30] sm:$0xf]
  %v49 = vld [vmem:[%s1 + $0x34] sm:$0xf]
  %v50 = vld [vmem:[%s1 + $0x38] sm:$0xf]
  %v51 = vld [vmem:[%s1 + $0x3c] sm:$0xf]
  %v52 = vld [vmem:[%s1 + $0x40] sm:$0xf]
  %v53 = vld [vmem:[%s1 + $0x44] sm:$0xf]
  %v54 = vld [vmem:[%s1 + $0x48] sm:$0xf]
  %v55 = vld [vmem:[%s1 + $0x4c] sm:$0xf]
  %v56 = vld [vmem:[%s1 + $0x50] sm:$0xf]
  %v57 = vld [vmem:[%s1 + $0x54] sm:$0xf]
  %v58 = vld [vmem:[%s1 + $0x58] sm:$0xf]
  %v59 = vld [vmem:[%s1 + $0x5c] sm:$0xf]
  %v60 = vld [vmem:[%s1 + $0x60] sm:$0xf]
  %v61 = vld [vmem:[%s1 + $0x64] sm:$0xf]
  %v62 = vld [vmem:[%s1 + $0x68] sm:$0xf]
  %v63 = vld [vmem:[%s1 + $0x6c] sm:$0xf]
  %v64 = vld [vmem:[%s1 + $0x70] sm:$0xf]
  %v65 = vld [vmem:[%s1 + $0x74] sm:$0xf]
  %v66 = vld [vmem:[%s1 + $0x78] sm:$0xf]
  %v67 = vld [vmem:[%s1 + $0x7c] sm:$0xf]
  %v68 = vld [vmem:[%s2] sm:$0x1]
  %v70 = vlaneseq
  %v71 = vshrl.u32 %v70, 7
  %v72 = vsub.s32 0, %v71
  %v73 = vrot.slane %v68, %v72
  %v96 = vunpack.c.l.b16 %v15
  %v97 = vunpack.c.h.b16 %v15
  %v98 = vunpack.c.l.b16 %v16
  %v99 = vunpack.c.h.b16 %v16
  %v100 = vunpack.c.l.b16 %v17
  %v101 = vunpack.c.h.b16 %v17
  %v102 = vunpack.c.l.b16 %v18
  %v103 = vunpack.c.h.b16 %v18
  %v104 = vunpack.c.l.b16 %v19
  %v105 = vunpack.c.h.b16 %v19
  %v106 = vunpack.c.l.b16 %v20
  %v107 = vunpack.c.h.b16 %v20
  %v108 = vunpack.c.l.b16 %v21
  %v109 = vunpack.c.h.b16 %v21
  %v110 = vunpack.c.l.b16 %v22
  %v111 = vunpack.c.h.b16 %v22
  %v112 = vunpack.c.l.b16 %v23
  %v113 = vunpack.c.h.b16 %v23
  %v114 = vunpack.c.l.b16 %v24
  %v115 = vunpack.c.h.b16 %v24
  %v116 = vunpack.c.l.b16 %v25
  %v117 = vunpack.c.h.b16 %v25
  %v118 = vunpack.c.l.b16 %v26
  %v119 = vunpack.c.h.b16 %v26
  %v120 = vunpack.c.l.b16 %v27
  %v121 = vunpack.c.h.b16 %v27
  %v122 = vunpack.c.l.b16 %v28
  %v123 = vunpack.c.h.b16 %v28
  %v124 = vunpack.c.l.b16 %v29
  %v125 = vunpack.c.h.b16 %v29
  %v126 = vunpack.c.l.b16 %v30
  %v127 = vunpack.c.h.b16 %v30
  %v128 = vunpack.c.l.b16 %v31
  %v129 = vunpack.c.h.b16 %v31
  %v130 = vunpack.c.l.b16 %v32
  %v131 = vunpack.c.h.b16 %v32
  %v132 = vunpack.c.l.b16 %v33
  %v133 = vunpack.c.h.b16 %v33
  %v134 = vunpack.c.l.b16 %v34
  %v135 = vunpack.c.h.b16 %v34
  %v136 = vunpack.c.l.b16 %v35
  %v137 = vunpack.c.h.b16 %v35
  %v138 = vpack.c.b16 %v98, %v96
  %v139 = vpack.c.b16 %v99, %v97
  %v140 = vpack.c.b16 %v102, %v100
  %v141 = vpack.c.b16 %v103, %v101
  %v142 = vpack.c.b16 %v106, %v104
  %v143 = vpack.c.b16 %v107, %v105
  %v144 = vpack.c.b16 %v110, %v108
  %v145 = vpack.c.b16 %v111, %v109
  %v146 = vpack.c.b16 %v114, %v112
  %v147 = vpack.c.b16 %v115, %v113
  %v148 = vpack.c.b16 %v118, %v116
  %v149 = vpack.c.b16 %v119, %v117
  %v150 = vpack.c.b16 %v122, %v120
  %v151 = vpack.c.b16 %v123, %v121
  %v152 = vpack.c.b16 %v126, %v124
  %v153 = vpack.c.b16 %v127, %v125
  %v154 = vpack.c.b16 %v130, %v128
  %v155 = vpack.c.b16 %v131, %v129
  %v156 = vpack.c.b16 %v134, %v132
  %v157 = vpack.c.b16 %v135, %v133
  %v158 = vpack.c.b16 %v136, %v136
  %v159 = vpack.c.b16 %v137, %v137
  %v214 = vunpack.c.l.b16 %v36
  %v215 = vunpack.c.l.b16 %v37
  %v216 = vunpack.c.l.b16 %v38
  %v217 = vunpack.c.l.b16 %v39
  %v218 = vunpack.c.l.b16 %v40
  %v219 = vunpack.c.l.b16 %v41
  %v220 = vunpack.c.l.b16 %v42
  %v221 = vunpack.c.l.b16 %v43
  %v222 = vunpack.c.l.b16 %v44
  %v223 = vunpack.c.l.b16 %v45
  %v224 = vunpack.c.l.b16 %v46
  %v225 = vunpack.c.l.b16 %v47
  %v226 = vunpack.c.l.b16 %v48
  %v227 = vunpack.c.l.b16 %v49
  %v228 = vunpack.c.l.b16 %v50
  %v229 = vunpack.c.l.b16 %v51
  %v230 = vunpack.c.l.b16 %v52
  %v231 = vunpack.c.l.b16 %v53
  %v232 = vunpack.c.l.b16 %v54
  %v233 = vunpack.c.l.b16 %v55
  %v234 = vunpack.c.l.b16 %v56
  %v235 = vunpack.c.l.b16 %v57
  %v236 = vunpack.c.l.b16 %v58
  %v237 = vunpack.c.l.b16 %v59
  %v238 = vunpack.c.l.b16 %v60
  %v239 = vunpack.c.l.b16 %v61
  %v240 = vunpack.c.l.b16 %v62
  %v241 = vunpack.c.l.b16 %v63
  %v242 = vunpack.c.l.b16 %v64
  %v243 = vunpack.c.l.b16 %v65
  %v244 = vunpack.c.l.b16 %v66
  %v245 = vunpack.c.l.b16 %v67
  %v246 = vpack.c.b16 %v215, %v214
  %v247 = vpack.c.b16 %v217, %v216
  %v248 = vpack.c.b16 %v219, %v218
  %v249 = vpack.c.b16 %v221, %v220
  %v250 = vpack.c.b16 %v223, %v222
  %v251 = vpack.c.b16 %v225, %v224
  %v252 = vpack.c.b16 %v227, %v226
  %v253 = vpack.c.b16 %v229, %v228
  %v254 = vpack.c.b16 %v231, %v230
  %v255 = vpack.c.b16 %v233, %v232
  %v256 = vpack.c.b16 %v235, %v234
  %v257 = vpack.c.b16 %v237, %v236
  %v258 = vpack.c.b16 %v239, %v238
  %v259 = vpack.c.b16 %v241, %v240
  %v260 = vpack.c.b16 %v243, %v242
  %v261 = vpack.c.b16 %v245, %v244
  %278 = vmatprep.subr.bf16.mxu0 0
  %279 = vmatpush1.bf16.msra.mxu0 %v246
  %280 = vmatprep.subr.bf16.mxu0 0
  %281 = vmatpush1.bf16.msra.mxu0 %v247
  %282 = vmatprep.subr.bf16.mxu0 0
  %283 = vmatpush1.bf16.msra.mxu0 %v248
  %284 = vmatprep.subr.bf16.mxu0 0
  %285 = vmatpush1.bf16.msra.mxu0 %v249
  %286 = vmatprep.subr.bf16.mxu0 0
  %287 = vmatpush1.bf16.msra.mxu0 %v250
  %288 = vmatprep.subr.bf16.mxu0 0
  %289 = vmatpush1.bf16.msra.mxu0 %v251
  %290 = vmatprep.subr.bf16.mxu0 0
  %291 = vmatpush1.bf16.msra.mxu0 %v252
  %292 = vmatprep.subr.bf16.mxu0 0
  %293 = vmatpush1.bf16.msra.mxu0 %v253
  %294 = vmatprep.subr.bf16.mxu0 0
  %295 = vmatpush1.bf16.msra.mxu0 %v254
  %296 = vmatprep.subr.bf16.mxu0 0
  %297 = vmatpush1.bf16.msra.mxu0 %v255
  %298 = vmatprep.subr.bf16.mxu0 0
  %299 = vmatpush1.bf16.msra.mxu0 %v256
  %300 = vmatprep.subr.bf16.mxu0 0
  %301 = vmatpush1.bf16.msra.mxu0 %v257
  %302 = vmatprep.subr.bf16.mxu0 0
  %303 = vmatpush1.bf16.msra.mxu0 %v258
  %304 = vmatprep.subr.bf16.mxu0 0
  %305 = vmatpush1.bf16.msra.mxu0 %v259
  %306 = vmatprep.subr.bf16.mxu0 0
  %307 = vmatpush1.bf16.msra.mxu0 %v260
  %308 = vmatprep.subr.bf16.mxu0 0
  %309 = vmatpush1.bf16.msra.mxu0 %v261
  %310 = vmatprep.mubr.bf16.mxu0 %v139
  %311 = vmatmul.mubr.bf16.gmra.mrb[0].mxu0 %v138
  %v312 = vpop.f32.mrb[0].mxu0
  %v313 = vadd.f32 %v73, %v312
  %v314 = vpop.f32.mrb[0].mxu0
  %v315 = vpop.f32.mrb[0].mxu0
  %v316 = vadd.f32 %v73, %v315
  %v317 = vpop.f32.mrb[0].mxu0
  %318 = vmatprep.mubr.bf16.mxu0 %v141
  %319 = vmatmul.mubr.bf16.gmra.mrb[0].mxu0 %v140
  %v320 = vpop.f32.mrb[0].mxu0
  %v321 = vadd.f32 %v73, %v320
  %v322 = vpop.f32.mrb[0].mxu0
  %v323 = vpop.f32.mrb[0].mxu0
  %v324 = vadd.f32 %v73, %v323
  %v325 = vpop.f32.mrb[0].mxu0
  %326 = vmatprep.mubr.bf16.mxu0 %v143
  %327 = vmatmul.mubr.bf16.gmra.mrb[0].mxu0 %v142
  %v328 = vpop.f32.mrb[0].mxu0
  %v329 = vadd.f32 %v73, %v328
  %v330 = vpop.f32.mrb[0].mxu0
  %v331 = vpop.f32.mrb[0].mxu0
  %v332 = vadd.f32 %v73, %v331
  %v333 = vpop.f32.mrb[0].mxu0
  %334 = vmatprep.mubr.bf16.mxu0 %v145
  %335 = vmatmul.mubr.bf16.gmra.mrb[0].mxu0 %v144
  %v336 = vpop.f32.mrb[0].mxu0
  %v337 = vadd.f32 %v73, %v336
  %v338 = vpop.f32.mrb[0].mxu0
  %v339 = vpop.f32.mrb[0].mxu0
  %v340 = vadd.f32 %v73, %v339
  %v341 = vpop.f32.mrb[0].mxu0
  %342 = vmatprep.mubr.bf16.mxu0 %v147
  %343 = vmatmul.mubr.bf16.gmra.mrb[0].mxu0 %v146
  %v344 = vpop.f32.mrb[0].mxu0
  %v345 = vadd.f32 %v73, %v344
  %v346 = vpop.f32.mrb[0].mxu0
  %v347 = vpop.f32.mrb[0].mxu0
  %v348 = vadd.f32 %v73, %v347
  %v349 = vpop.f32.mrb[0].mxu0
  %350 = vmatprep.mubr.bf16.mxu0 %v149
  %351 = vmatmul.mubr.bf16.gmra.mrb[0].mxu0 %v148
  %v352 = vpop.f32.mrb[0].mxu0
  %v353 = vadd.f32 %v73, %v352
  %v354 = vpop.f32.mrb[0].mxu0
  %v355 = vpop.f32.mrb[0].mxu0
  %v356 = vadd.f32 %v73, %v355
  %v357 = vpop.f32.mrb[0].mxu0
  %358 = vmatprep.mubr.bf16.mxu0 %v151
  %359 = vmatmul.mubr.bf16.gmra.mrb[0].mxu0 %v150
  %v360 = vpop.f32.mrb[0].mxu0
  %v361 = vadd.f32 %v73, %v360
  %v362 = vpop.f32.mrb[0].mxu0
  %v363 = vpop.f32.mrb[0].mxu0
  %v364 = vadd.f32 %v73, %v363
  %v365 = vpop.f32.mrb[0].mxu0
  %366 = vmatprep.mubr.bf16.mxu0 %v153
  %367 = vmatmul.mubr.bf16.gmra.mrb[0].mxu0 %v152
  %v368 = vpop.f32.mrb[0].mxu0
  %v369 = vadd.f32 %v73, %v368
  %v370 = vpop.f32.mrb[0].mxu0
  %v371 = vpop.f32.mrb[0].mxu0
  %v372 = vadd.f32 %v73, %v371
  %v373 = vpop.f32.mrb[0].mxu0
  %374 = vmatprep.mubr.bf16.mxu0 %v155
  %375 = vmatmul.mubr.bf16.gmra.mrb[0].mxu0 %v154
  %v376 = vpop.f32.mrb[0].mxu0
  %v377 = vadd.f32 %v73, %v376
  %v378 = vpop.f32.mrb[0].mxu0
  %v379 = vpop.f32.mrb[0].mxu0
  %v380 = vadd.f32 %v73, %v379
  %v381 = vpop.f32.mrb[0].mxu0
  %382 = vmatprep.mubr.bf16.mxu0 %v157
  %383 = vmatmul.mubr.bf16.gmra.mrb[0].mxu0 %v156
  %v384 = vpop.f32.mrb[0].mxu0
  %v385 = vadd.f32 %v73, %v384
  %v386 = vpop.f32.mrb[0].mxu0
  %v387 = vpop.f32.mrb[0].mxu0
  %v388 = vadd.f32 %v73, %v387
  %v389 = vpop.f32.mrb[0].mxu0
  %390 = vmatprep.mubr.bf16.mxu0 %v159
  %391 = vmatmul.mubr.bf16.gmra.mrb[0].mxu0 %v158
  %v392 = vpop.f32.mrb[0].mxu0
  %v393 = vadd.f32 %v73, %v392
  %v394 = vpop.f32.mrb[0].mxu0
  %v395 = vpop.f32.mrb[0].mxu0
  %v396 = vpop.f32.mrb[0].mxu0
  %397 = vdwg.mxu0
  %v398 = vmax.f32 %v313, 0.0
  %v399 = vmax.f32 %v316, 0.0
  %v400 = vmax.f32 %v321, 0.0
  %v401 = vmax.f32 %v324, 0.0
  %v402 = vmax.f32 %v329, 0.0
  %v403 = vmax.f32 %v332, 0.0
  %v404 = vmax.f32 %v337, 0.0
  %v405 = vmax.f32 %v340, 0.0
  %v406 = vmax.f32 %v345, 0.0
  %v407 = vmax.f32 %v348, 0.0
  %v408 = vmax.f32 %v353, 0.0
  %v409 = vmax.f32 %v356, 0.0
  %v410 = vmax.f32 %v361, 0.0
  %v411 = vmax.f32 %v364, 0.0
  %v412 = vmax.f32 %v369, 0.0
  %v413 = vmax.f32 %v372, 0.0
  %v414 = vmax.f32 %v377, 0.0
  %v415 = vmax.f32 %v380, 0.0
  %v416 = vmax.f32 %v385, 0.0
  %v417 = vmax.f32 %v388, 0.0
  %v418 = vmax.f32 %v393, 0.0
  %v419 = vpack.c.bf16 %v399, %v398
  %v420 = vpack.c.bf16 %v401, %v400
  %v421 = vpack.c.bf16 %v403, %v402
  %v422 = vpack.c.bf16 %v405, %v404
  %v423 = vpack.c.bf16 %v407, %v406
  %v424 = vpack.c.bf16 %v409, %v408
  %v425 = vpack.c.bf16 %v411, %v410
  %v426 = vpack.c.bf16 %v413, %v412
  %v427 = vpack.c.bf16 %v415, %v414
  %v428 = vpack.c.bf16 %v417, %v416
  %v429 = vpack.c.bf16 %v418, %v418
  %v441 = vunpack.c.l.b16 %v419
  %v442 = vunpack.c.h.b16 %v419
  %v443 = vunpack.c.l.b16 %v420
  %v444 = vunpack.c.h.b16 %v420
  %v445 = vunpack.c.l.b16 %v421
  %v446 = vunpack.c.h.b16 %v421
  %v447 = vunpack.c.l.b16 %v422
  %v448 = vunpack.c.h.b16 %v422
  %v449 = vunpack.c.l.b16 %v423
  %v450 = vunpack.c.h.b16 %v423
  %v451 = vunpack.c.l.b16 %v424
  %v452 = vunpack.c.h.b16 %v424
  %v453 = vunpack.c.l.b16 %v425
  %v454 = vunpack.c.h.b16 %v425
  %v455 = vunpack.c.l.b16 %v426
  %v456 = vunpack.c.h.b16 %v426
  %v457 = vunpack.c.l.b16 %v427
  %v458 = vunpack.c.h.b16 %v427
  %v459 = vunpack.c.l.b16 %v428
  %v460 = vunpack.c.h.b16 %v428
  %v461 = vunpack.c.l.b16 %v429
  %v462 = vpack.c.b16 %v441, %v441
  %v463 = vpack.c.b16 %v442, %v442
  %v464 = vpack.c.b16 %v443, %v443
  %v465 = vpack.c.b16 %v444, %v444
  %v466 = vpack.c.b16 %v445, %v445
  %v467 = vpack.c.b16 %v446, %v446
  %v468 = vpack.c.b16 %v447, %v447
  %v469 = vpack.c.b16 %v448, %v448
  %v470 = vpack.c.b16 %v449, %v449
  %v471 = vpack.c.b16 %v450, %v450
  %v472 = vpack.c.b16 %v451, %v451
  %v473 = vpack.c.b16 %v452, %v452
  %v474 = vpack.c.b16 %v453, %v453
  %v475 = vpack.c.b16 %v454, %v454
  %v476 = vpack.c.b16 %v455, %v455
  %v477 = vpack.c.b16 %v456, %v456
  %v478 = vpack.c.b16 %v457, %v457
  %v479 = vpack.c.b16 %v458, %v458
  %v480 = vpack.c.b16 %v459, %v459
  %v481 = vpack.c.b16 %v460, %v460
  %v482 = vpack.c.b16 %v461, %v461
  %vm504 = vcmask 257024
  %505 = vst.msk [vmem:[%s3] sm:$0xf] %vm504, %v462
  %506 = vst.msk [vmem:[%s3 + $0x4] sm:$0xf] %vm504, %v463
  %507 = vst.msk [vmem:[%s3 + $0x8] sm:$0xf] %vm504, %v464
  %508 = vst.msk [vmem:[%s3 + $0xc] sm:$0xf] %vm504, %v465
  %509 = vst.msk [vmem:[%s3 + $0x10] sm:$0xf] %vm504, %v466
  %510 = vst.msk [vmem:[%s3 + $0x14] sm:$0xf] %vm504, %v467
  %511 = vst.msk [vmem:[%s3 + $0x18] sm:$0xf] %vm504, %v468
  %512 = vst.msk [vmem:[%s3 + $0x1c] sm:$0xf] %vm504, %v469
  %513 = vst.msk [vmem:[%s3 + $0x20] sm:$0xf] %vm504, %v470
  %514 = vst.msk [vmem:[%s3 + $0x24] sm:$0xf] %vm504, %v471
  %515 = vst.msk [vmem:[%s3 + $0x28] sm:$0xf] %vm504, %v472
  %516 = vst.msk [vmem:[%s3 + $0x2c] sm:$0xf] %vm504, %v473
  %517 = vst.msk [vmem:[%s3 + $0x30] sm:$0xf] %vm504, %v474
  %518 = vst.msk [vmem:[%s3 + $0x34] sm:$0xf] %vm504, %v475
  %519 = vst.msk [vmem:[%s3 + $0x38] sm:$0xf] %vm504, %v476
  %520 = vst.msk [vmem:[%s3 + $0x3c] sm:$0xf] %vm504, %v477
  %521 = vst.msk [vmem:[%s3 + $0x40] sm:$0xf] %vm504, %v478
  %522 = vst.msk [vmem:[%s3 + $0x44] sm:$0xf] %vm504, %v479
  %523 = vst.msk [vmem:[%s3 + $0x48] sm:$0xf] %vm504, %v480
  %524 = vst.msk [vmem:[%s3 + $0x4c] sm:$0xf] %vm504, %v481
  %vm525 = vcmask 253952
  %526 = vst.msk [vmem:[%s3 + $0x50] sm:$0x1] %vm525, %v482
  // Predicated region
  $region14: #{distributional_dueling_dqn_forward.3} parent=0 // pred_check
    _
  $region15: #{distributional_dueling_dqn_forward.3} parent=0 // pred_check_branch
    %528 = sbr.rel (0) target = $region17
  $region16: #{distributional_dueling_dqn_forward.3} parent=0 // pred_region
    _
  $region17: #{distributional_dueling_dqn_forward.3} parent=0 // pred_fallthru
    _
  // Predicated region
  $region18: #{distributional_dueling_dqn_forward.3} parent=0 // pred_check
    _
  $region19: #{distributional_dueling_dqn_forward.3} parent=0 // pred_check_branch
    %530 = sbr.rel (0) target = $region21
  $region20: #{distributional_dueling_dqn_forward.3} parent=0 // pred_region
    _
  $region21: #{distributional_dueling_dqn_forward.3} parent=0 // pred_fallthru
    _

// kernel: distributional_dueling_dqn_forward.4
$region0: #{distributional_dueling_dqn_forward.4}
  #allocation0 [shape = 'u32[]', space=smem, size = 0x4, offset = 0x4, fixed_abs, tag = 'smem constant byte address 0x4 - core index']
  #allocation1 [shape = 'u32[144,128]{1,0:T(1,128)}', space=vmem, size = 0x12000, scoped, tag = 'internal scratch']
  %s0 = inlined_call_operand.vmem [shape: bf16[18,512], index: 0, kind: input, shape index: {}]
  %s1 = inlined_call_operand.vmem [shape: bf16[512,64], index: 1, kind: input, shape index: {}]
  %s2 = inlined_call_operand.vmem [shape: f32[1,64], index: 2, kind: input, shape index: {}]
  %s3 = inlined_call_operand.vmem [shape: bf16[18,64], index: 3, kind: output, shape index: {}]
  %s4 = sld [smem:[#allocation0]]
  $region22: #{distributional_dueling_dqn_forward.4} parent=0
    _
  %s6 = ssub.s32 1, %s4
  %s7 = scalar_select 0, %s6, %s4
  // Predicated region
  $region2: #{distributional_dueling_dqn_forward.4} parent=0 // pred_check
    _
  $region3: #{distributional_dueling_dqn_forward.4} parent=0 // pred_check_branch
    %9 = sbr.rel (0) target = $region5
  $region4: #{distributional_dueling_dqn_forward.4} parent=0 // pred_region
    _
  $region5: #{distributional_dueling_dqn_forward.4} parent=0 // pred_fallthru
    _
  // Predicated region
  $region6: #{distributional_dueling_dqn_forward.4} parent=0 // pred_check
    _
  $region7: #{distributional_dueling_dqn_forward.4} parent=0 // pred_check_branch
    %11 = sbr.rel (0) target = $region9
  $region8: #{distributional_dueling_dqn_forward.4} parent=0 // pred_region
    _
  $region9: #{distributional_dueling_dqn_forward.4} parent=0 // pred_fallthru
    _
  // Predicated region
  $region10: #{distributional_dueling_dqn_forward.4} parent=0 // pred_check
    _
  $region11: #{distributional_dueling_dqn_forward.4} parent=0 // pred_check_branch
    %13 = sbr.rel (0) target = $region13
  $region12: #{distributional_dueling_dqn_forward.4} parent=0 // pred_region
    _
  $region13: #{distributional_dueling_dqn_forward.4} parent=0 // pred_fallthru
    _
  %v15 = vld [vmem:[%s0] sm:$0xff]
  %v16 = vld [vmem:[%s0 + $0x8] sm:$0xff]
  %v17 = vld [vmem:[%s0 + $0x10] sm:$0xff]
  %v18 = vld [vmem:[%s0 + $0x18] sm:$0xff]
  %v19 = vld [vmem:[%s0 + $0x20] sm:$0x11]
  %v20 = vld [vmem:[%s0 + $0x28] sm:$0x11]
  %v21 = vld [vmem:[%s1] sm:$0xf]
  %v22 = vld [vmem:[%s1 + $0x4] sm:$0xf]
  %v23 = vld [vmem:[%s1 + $0x8] sm:$0xf]
  %v24 = vld [vmem:[%s1 + $0xc] sm:$0xf]
  %v25 = vld [vmem:[%s1 + $0x10] sm:$0xf]
  %v26 = vld [vmem:[%s1 + $0x14] sm:$0xf]
  %v27 = vld [vmem:[%s1 + $0x18] sm:$0xf]
  %v28 = vld [vmem:[%s1 + $0x1c] sm:$0xf]
  %v29 = vld [vmem:[%s1 + $0x20] sm:$0xf]
  %v30 = vld [vmem:[%s1 + $0x24] sm:$0xf]
  %v31 = vld [vmem:[%s1 + $0x28] sm:$0xf]
  %v32 = vld [vmem:[%s1 + $0x2c] sm:$0xf]
  %v33 = vld [vmem:[%s1 + $0x30] sm:$0xf]
  %v34 = vld [vmem:[%s1 + $0x34] sm:$0xf]
  %v35 = vld [vmem:[%s1 + $0x38] sm:$0xf]
  %v36 = vld [vmem:[%s1 + $0x3c] sm:$0xf]
  %v37 = vld [vmem:[%s1 + $0x40] sm:$0xf]
  %v38 = vld [vmem:[%s1 + $0x44] sm:$0xf]
  %v39 = vld [vmem:[%s1 + $0x48] sm:$0xf]
  %v40 = vld [vmem:[%s1 + $0x4c] sm:$0xf]
  %v41 = vld [vmem:[%s1 + $0x50] sm:$0xf]
  %v42 = vld [vmem:[%s1 + $0x54] sm:$0xf]
  %v43 = vld [vmem:[%s1 + $0x58] sm:$0xf]
  %v44 = vld [vmem:[%s1 + $0x5c] sm:$0xf]
  %v45 = vld [vmem:[%s1 + $0x60] sm:$0xf]
  %v46 = vld [vmem:[%s1 + $0x64] sm:$0xf]
  %v47 = vld [vmem:[%s1 + $0x68] sm:$0xf]
  %v48 = vld [vmem:[%s1 + $0x6c] sm:$0xf]
  %v49 = vld [vmem:[%s1 + $0x70] sm:$0xf]
  %v50 = vld [vmem:[%s1 + $0x74] sm:$0xf]
  %v51 = vld [vmem:[%s1 + $0x78] sm:$0xf]
  %v52 = vld [vmem:[%s1 + $0x7c] sm:$0xf]
  %v53 = vld [vmem:[%s1 + $0x80] sm:$0xf]
  %v54 = vld [vmem:[%s1 + $0x84] sm:$0xf]
  %v55 = vld [vmem:[%s1 + $0x88] sm:$0xf]
  %v56 = vld [vmem:[%s1 + $0x8c] sm:$0xf]
  %v57 = vld [vmem:[%s1 + $0x90] sm:$0xf]
  %v58 = vld [vmem:[%s1 + $0x94] sm:$0xf]
  %v59 = vld [vmem:[%s1 + $0x98] sm:$0xf]
  %v60 = vld [vmem:[%s1 + $0x9c] sm:$0xf]
  %v61 = vld [vmem:[%s1 + $0xa0] sm:$0xf]
  %v62 = vld [vmem:[%s1 + $0xa4] sm:$0xf]
  %v63 = vld [vmem:[%s1 + $0xa8] sm:$0xf]
  %v64 = vld [vmem:[%s1 + $0xac] sm:$0xf]
  %v65 = vld [vmem:[%s1 + $0xb0] sm:$0xf]
  %v66 = vld [vmem:[%s1 + $0xb4] sm:$0xf]
  %v67 = vld [vmem:[%s1 + $0xb8] sm:$0xf]
  %v68 = vld [vmem:[%s1 + $0xbc] sm:$0xf]
  %v69 = vld [vmem:[%s1 + $0xc0] sm:$0xf]
  %v70 = vld [vmem:[%s1 + $0xc4] sm:$0xf]
  %v71 = vld [vmem:[%s1 + $0xc8] sm:$0xf]
  %v72 = vld [vmem:[%s1 + $0xcc] sm:$0xf]
  %v73 = vld [vmem:[%s1 + $0xd0] sm:$0xf]
  %v74 = vld [vmem:[%s1 + $0xd4] sm:$0xf]
  %v75 = vld [vmem:[%s1 + $0xd8] sm:$0xf]
  %v76 = vld [vmem:[%s1 + $0xdc] sm:$0xf]
  %v77 = vld [vmem:[%s1 + $0xe0] sm:$0xf]
  %v78 = vld [vmem:[%s1 + $0xe4] sm:$0xf]
  %v79 = vld [vmem:[%s1 + $0xe8] sm:$0xf]
  %v80 = vld [vmem:[%s1 + $0xec] sm:$0xf]
  %v81 = vld [vmem:[%s1 + $0xf0] sm:$0xf]
  %v82 = vld [vmem:[%s1 + $0xf4] sm:$0xf]
  %v83 = vld [vmem:[%s1 + $0xf8] sm:$0xf]
  %v84 = vld [vmem:[%s1 + $0xfc] sm:$0xf]
  %v85 = vld [vmem:[%s2] sm:$0x1]
  %v87 = vlaneseq
  %v88 = vshrl.u32 %v87, 7
  %v89 = vsub.s32 0, %v88
  %v90 = vrot.slane %v85, %v89
  %v98 = vunpack.c.l.b16 %v15
  %v99 = vunpack.c.h.b16 %v15
  %v100 = vunpack.c.l.b16 %v16
  %v101 = vunpack.c.h.b16 %v16
  %v102 = vunpack.c.l.b16 %v17
  %v103 = vunpack.c.h.b16 %v17
  %v104 = vunpack.c.l.b16 %v18
  %v105 = vunpack.c.h.b16 %v18
  %v106 = vunpack.c.l.b16 %v19
  %v107 = vunpack.c.h.b16 %v19
  %v108 = vunpack.c.l.b16 %v20
  %v109 = vunpack.c.h.b16 %v20
  %v110 = vpack.c.b16 %v102, %v98
  %v111 = vpack.c.b16 %v103, %v99
  %v112 = vpack.c.b16 %v104, %v100
  %v113 = vpack.c.b16 %v105, %v101
  %v114 = vpack.c.b16 %v106, %v106
  %v115 = vpack.c.b16 %v107, %v107
  %v116 = vpack.c.b16 %v108, %v108
  %v117 = vpack.c.b16 %v109, %v109
  %v190 = vunpack.c.l.b16 %v21
  %v191 = vunpack.c.l.b16 %v22
  %v192 = vunpack.c.l.b16 %v23
  %v193 = vunpack.c.l.b16 %v24
  %v194 = vunpack.c.l.b16 %v25
  %v195 = vunpack.c.l.b16 %v26
  %v196 = vunpack.c.l.b16 %v27
  %v197 = vunpack.c.l.b16 %v28
  %v198 = vunpack.c.l.b16 %v29
  %v199 = vunpack.c.l.b16 %v30
  %v200 = vunpack.c.l.b16 %v31
  %v201 = vunpack.c.l.b16 %v32
  %v202 = vunpack.c.l.b16 %v33
  %v203 = vunpack.c.l.b16 %v34
  %v204 = vunpack.c.l.b16 %v35
  %v205 = vunpack.c.l.b16 %v36
  %v206 = vunpack.c.l.b16 %v37
  %v207 = vunpack.c.l.b16 %v38
  %v208 = vunpack.c.l.b16 %v39
  %v209 = vunpack.c.l.b16 %v40
  %v210 = vunpack.c.l.b16 %v41
  %v211 = vunpack.c.l.b16 %v42
  %v212 = vunpack.c.l.b16 %v43
  %v213 = vunpack.c.l.b16 %v44
  %v214 = vunpack.c.l.b16 %v45
  %v215 = vunpack.c.l.b16 %v46
  %v216 = vunpack.c.l.b16 %v47
  %v217 = vunpack.c.l.b16 %v48
  %v218 = vunpack.c.l.b16 %v49
  %v219 = vunpack.c.l.b16 %v50
  %v220 = vunpack.c.l.b16 %v51
  %v221 = vunpack.c.l.b16 %v52
  %v222 = vunpack.c.l.b16 %v53
  %v223 = vunpack.c.l.b16 %v54
  %v224 = vunpack.c.l.b16 %v55
  %v225 = vunpack.c.l.b16 %v56
  %v226 = vunpack.c.l.b16 %v57
  %v227 = vunpack.c.l.b16 %v58
  %v228 = vunpack.c.l.b16 %v59
  %v229 = vunpack.c.l.b16 %v60
  %v230 = vunpack.c.l.b16 %v61
  %v231 = vunpack.c.l.b16 %v62
  %v232 = vunpack.c.l.b16 %v63
  %v233 = vunpack.c.l.b16 %v64
  %v234 = vunpack.c.l.b16 %v65
  %v235 = vunpack.c.l.b16 %v66
  %v236 = vunpack.c.l.b16 %v67
  %v237 = vunpack.c.l.b16 %v68
  %v238 = vunpack.c.l.b16 %v69
  %v239 = vunpack.c.l.b16 %v70
  %v240 = vunpack.c.l.b16 %v71
  %v241 = vunpack.c.l.b16 %v72
  %v242 = vunpack.c.l.b16 %v73
  %v243 = vunpack.c.l.b16 %v74
  %v244 = vunpack.c.l.b16 %v75
  %v245 = vunpack.c.l.b16 %v76
  %v246 = vunpack.c.l.b16 %v77
  %v247 = vunpack.c.l.b16 %v78
  %v248 = vunpack.c.l.b16 %v79
  %v249 = vunpack.c.l.b16 %v80
  %v250 = vunpack.c.l.b16 %v81
  %v251 = vunpack.c.l.b16 %v82
  %v252 = vunpack.c.l.b16 %v83
  %v253 = vunpack.c.l.b16 %v84
  %v254 = vpack.c.b16 %v191, %v190
  %v255 = vpack.c.b16 %v193, %v192
  %v256 = vpack.c.b16 %v195, %v194
  %v257 = vpack.c.b16 %v197, %v196
  %v258 = vpack.c.b16 %v199, %v198
  %v259 = vpack.c.b16 %v201, %v200
  %v260 = vpack.c.b16 %v203, %v202
  %v261 = vpack.c.b16 %v205, %v204
  %v262 = vpack.c.b16 %v207, %v206
  %v263 = vpack.c.b16 %v209, %v208
  %v264 = vpack.c.b16 %v211, %v210
  %v265 = vpack.c.b16 %v213, %v212
  %v266 = vpack.c.b16 %v215, %v214
  %v267 = vpack.c.b16 %v217, %v216
  %v268 = vpack.c.b16 %v219, %v218
  %v269 = vpack.c.b16 %v221, %v220
  %v270 = vpack.c.b16 %v223, %v222
  %v271 = vpack.c.b16 %v225, %v224
  %v272 = vpack.c.b16 %v227, %v226
  %v273 = vpack.c.b16 %v229, %v228
  %v274 = vpack.c.b16 %v231, %v230
  %v275 = vpack.c.b16 %v233, %v232
  %v276 = vpack.c.b16 %v235, %v234
  %v277 = vpack.c.b16 %v237, %v236
  %v278 = vpack.c.b16 %v239, %v238
  %v279 = vpack.c.b16 %v241, %v240
  %v280 = vpack.c.b16 %v243, %v242
  %v281 = vpack.c.b16 %v245, %v244
  %v282 = vpack.c.b16 %v247, %v246
  %v283 = vpack.c.b16 %v249, %v248
  %v284 = vpack.c.b16 %v251, %v250
  %v285 = vpack.c.b16 %v253, %v252
  %318 = vmatprep.subr.bf16.mxu0 0
  %319 = vmatpush1.bf16.msra.mxu0 %v254
  %320 = vmatprep.subr.bf16.mxu0 0
  %321 = vmatpush1.bf16.msra.mxu0 %v255
  %322 = vmatprep.subr.bf16.mxu0 0
  %323 = vmatpush1.bf16.msra.mxu0 %v256
  %324 = vmatprep.subr.bf16.mxu0 0
  %325 = vmatpush1.bf16.msra.mxu0 %v257
  %326 = vmatprep.subr.bf16.mxu0 0
  %327 = vmatpush1.bf16.msra.mxu0 %v258
  %328 = vmatprep.subr.bf16.mxu0 0
  %329 = vmatpush1.bf16.msra.mxu0 %v259
  %330 = vmatprep.subr.bf16.mxu0 0
  %331 = vmatpush1.bf16.msra.mxu0 %v260
  %332 = vmatprep.subr.bf16.mxu0 0
  %333 = vmatpush1.bf16.msra.mxu0 %v261
  %334 = vmatprep.subr.bf16.mxu0 0
  %335 = vmatpush1.bf16.msra.mxu0 %v262
  %336 = vmatprep.subr.bf16.mxu0 0
  %337 = vmatpush1.bf16.msra.mxu0 %v263
  %338 = vmatprep.subr.bf16.mxu0 0
  %339 = vmatpush1.bf16.msra.mxu0 %v264
  %340 = vmatprep.subr.bf16.mxu0 0
  %341 = vmatpush1.bf16.msra.mxu0 %v265
  %342 = vmatprep.subr.bf16.mxu0 0
  %343 = vmatpush1.bf16.msra.mxu0 %v266
  %344 = vmatprep.subr.bf16.mxu0 0
  %345 = vmatpush1.bf16.msra.mxu0 %v267
  %346 = vmatprep.subr.bf16.mxu0 0
  %347 = vmatpush1.bf16.msra.mxu0 %v268
  %348 = vmatprep.subr.bf16.mxu0 0
  %349 = vmatpush1.bf16.msra.mxu0 %v269
  %350 = vmatprep.mubr.bf16.mxu0 %v111
  %351 = vmatmul.mubr.bf16.gmra.mrb[0].mxu0 %v110
  %v352 = vpop.f32.mrb[0].mxu0
  %v353 = vadd.f32 %v90, %v352
  %v354 = vpop.f32.mrb[0].mxu0
  %v355 = vpop.f32.mrb[0].mxu0
  %v356 = vadd.f32 %v90, %v355
  %v357 = vpop.f32.mrb[0].mxu0
  %358 = vmatprep.mubr.bf16.mxu0 %v115
  %359 = vmatmul.mubr.bf16.gmra.mrb[0].mxu0 %v114
  %v360 = vpop.f32.mrb[0].mxu0
  %v361 = vadd.f32 %v90, %v360
  %v362 = vpop.f32.mrb[0].mxu0
  %v363 = vpop.f32.mrb[0].mxu0
  %v364 = vpop.f32.mrb[0].mxu0
  %365 = vdwg.mxu0
  %366 = vmatprep.subr.bf16.mxu0 0
  %367 = vmatpush1.bf16.msra.mxu0 %v270
  %368 = vmatprep.subr.bf16.mxu0 0
  %369 = vmatpush1.bf16.msra.mxu0 %v271
  %370 = vmatprep.subr.bf16.mxu0 0
  %371 = vmatpush1.bf16.msra.mxu0 %v272
  %372 = vmatprep.subr.bf16.mxu0 0
  %373 = vmatpush1.bf16.msra.mxu0 %v273
  %374 = vmatprep.subr.bf16.mxu0 0
  %375 = vmatpush1.bf16.msra.mxu0 %v274
  %376 = vmatprep.subr.bf16.mxu0 0
  %377 = vmatpush1.bf16.msra.mxu0 %v275
  %378 = vmatprep.subr.bf16.mxu0 0
  %379 = vmatpush1.bf16.msra.mxu0 %v276
  %380 = vmatprep.subr.bf16.mxu0 0
  %381 = vmatpush1.bf16.msra.mxu0 %v277
  %382 = vmatprep.subr.bf16.mxu0 0
  %383 = vmatpush1.bf16.msra.mxu0 %v278
  %384 = vmatprep.subr.bf16.mxu0 0
  %385 = vmatpush1.bf16.msra.mxu0 %v279
  %386 = vmatprep.subr.bf16.mxu0 0
  %387 = vmatpush1.bf16.msra.mxu0 %v280
  %388 = vmatprep.subr.bf16.mxu0 0
  %389 = vmatpush1.bf16.msra.mxu0 %v281
  %390 = vmatprep.subr.bf16.mxu0 0
  %391 = vmatpush1.bf16.msra.mxu0 %v282
  %392 = vmatprep.subr.bf16.mxu0 0
  %393 = vmatpush1.bf16.msra.mxu0 %v283
  %394 = vmatprep.subr.bf16.mxu0 0
  %395 = vmatpush1.bf16.msra.mxu0 %v284
  %396 = vmatprep.subr.bf16.mxu0 0
  %397 = vmatpush1.bf16.msra.mxu0 %v285
  %398 = vmatprep.mubr.bf16.mxu0 %v113
  %399 = vmatmul.mubr.bf16.gmra.mrb[0].mxu0 %v112
  %v400 = vpop.f32.mrb[0].mxu0
  %v401 = vadd.f32 %v353, %v400
  %v402 = vpop.f32.mrb[0].mxu0
  %v403 = vpop.f32.mrb[0].mxu0
  %v404 = vadd.f32 %v356, %v403
  %v405 = vpop.f32.mrb[0].mxu0
  %406 = vmatprep.mubr.bf16.mxu0 %v117
  %407 = vmatmul.mubr.bf16.gmra.mrb[0].mxu0 %v116
  %v408 = vpop.f32.mrb[0].mxu0
  %v409 = vadd.f32 %v361, %v408
  %v410 = vpop.f32.mrb[0].mxu0
  %v411 = vpop.f32.mrb[0].mxu0
  %v412 = vpop.f32.mrb[0].mxu0
  %413 = vdwg.mxu0
  %v414 = vmax.f32 %v401, 0.0
  %v415 = vmax.f32 %v404, 0.0
  %v416 = vmax.f32 %v409, 0.0
  %v417 = vpack.c.bf16 %v415, %v414
  %v418 = vpack.c.bf16 %v416, %v416
  %v421 = vunpack.c.l.b16 %v417
  %v422 = vunpack.c.h.b16 %v417
  %v423 = vunpack.c.l.b16 %v418
  %v424 = vpack.c.b16 %v421, %v421
  %v425 = vpack.c.b16 %v422, %v422
  %v426 = vpack.c.b16 %v423, %v423
  %vm430 = vcmask 519168
  %431 = vst.msk [vmem:[%s3] sm:$0xf] %vm430, %v424
  %432 = vst.msk [vmem:[%s3 + $0x4] sm:$0xf] %vm430, %v425
  %vm433 = vcmask 516096
  %434 = vst.msk [vmem:[%s3 + $0x8] sm:$0x1] %vm433, %v426
  // Predicated region
  $region14: #{distributional_dueling_dqn_forward.4} parent=0 // pred_check
    _
  $region15: #{distributional_dueling_dqn_forward.4} parent=0 // pred_check_branch
    %436 = sbr.rel (0) target = $region17
  $region16: #{distributional_dueling_dqn_forward.4} parent=0 // pred_region
    _
  $region17: #{distributional_dueling_dqn_forward.4} parent=0 // pred_fallthru
    _
  // Predicated region
  $region18: #{distributional_dueling_dqn_forward.4} parent=0 // pred_check
    _
  $region19: #{distributional_dueling_dqn_forward.4} parent=0 // pred_check_branch
    %438 = sbr.rel (0) target = $region21
  $region20: #{distributional_dueling_dqn_forward.4} parent=0 // pred_region
    _
  $region21: #{distributional_dueling_dqn_forward.4} parent=0 // pred_fallthru
    _

// kernel: distributional_dueling_dqn_forward.5
$region0: #{distributional_dueling_dqn_forward.5}
  #allocation0 [shape = 'u32[]', space=smem, size = 0x4, offset = 0x4, fixed_abs, tag = 'smem constant byte address 0x4 - core index']
  #allocation1 [shape = 'u32[144,128]{1,0:T(1,128)}', space=vmem, size = 0x12000, scoped, tag = 'internal scratch']
  %s0 = inlined_call_operand.vmem [shape: bf16[2,576], index: 0, kind: input, shape index: {}]
  %s1 = inlined_call_operand.vmem [shape: bf16[576,64], index: 1, kind: input, shape index: {}]
  %s2 = inlined_call_operand.vmem [shape: f32[1,64], index: 2, kind: input, shape index: {}]
  %s3 = inlined_call_operand.vmem [shape: bf16[64,1024], index: 3, kind: input, shape index: {}]
  %s4 = inlined_call_operand.vmem [shape: f32[1,1024], index: 4, kind: input, shape index: {}]
  %s5 = inlined_call_operand.vmem [shape: bf16[1024,640], index: 5, kind: input, shape index: {}]
  %s6 = inlined_call_operand.vmem [shape: f32[1,640], index: 6, kind: input, shape index: {}]
  %s7 = inlined_call_operand.vmem [shape: f32[2,512], index: 7, kind: output, shape index: {}]
  %s8 = sld [smem:[#allocation0]]
  $region38: #{distributional_dueling_dqn_forward.5} parent=0
    _
  %s10 = ssub.s32 1, %s8
  %s11 = scalar_select 0, %s10, %s8
  // Predicated region
  $region2: #{distributional_dueling_dqn_forward.5} parent=0 // pred_check
    _
  $region3: #{distributional_dueling_dqn_forward.5} parent=0 // pred_check_branch
    %13 = sbr.rel (0) target = $region5
  $region4: #{distributional_dueling_dqn_forward.5} parent=0 // pred_region
    _
  $region5: #{distributional_dueling_dqn_forward.5} parent=0 // pred_fallthru
    _
  // Predicated region
  $region6: #{distributional_dueling_dqn_forward.5} parent=0 // pred_check
    _
  $region7: #{distributional_dueling_dqn_forward.5} parent=0 // pred_check_branch
    %15 = sbr.rel (0) target = $region9
  $region8: #{distributional_dueling_dqn_forward.5} parent=0 // pred_region
    _
  $region9: #{distributional_dueling_dqn_forward.5} parent=0 // pred_fallthru
    _
  // Predicated region
  $region10: #{distributional_dueling_dqn_forward.5} parent=0 // pred_check
    _
  $region11: #{distributional_dueling_dqn_forward.5} parent=0 // pred_check_branch
    %17 = sbr.rel (0) target = $region13
  $region12: #{distributional_dueling_dqn_forward.5} parent=0 // pred_region
    _
  $region13: #{distributional_dueling_dqn_forward.5} parent=0 // pred_fallthru
    _
  // Predicated region
  $region14: #{distributional_dueling_dqn_forward.5} parent=0 // pred_check
    _
  $region15: #{distributional_dueling_dqn_forward.5} parent=0 // pred_check_branch
    %19 = sbr.rel (0) target = $region17
  $region16: #{distributional_dueling_dqn_forward.5} parent=0 // pred_region
    _
  $region17: #{distributional_dueling_dqn_forward.5} parent=0 // pred_fallthru
    _
  // Predicated region
  $region18: #{distributional_dueling_dqn_forward.5} parent=0 // pred_check
    _
  $region19: #{distributional_dueling_dqn_forward.5} parent=0 // pred_check_branch
    %21 = sbr.rel (0) target = $region21
  $region20: #{distributional_dueling_dqn_forward.5} parent=0 // pred_region
    _
  $region21: #{distributional_dueling_dqn_forward.5} parent=0 // pred_fallthru
    _
  // Predicated region
  $region22: #{distributional_dueling_dqn_forward.5} parent=0 // pred_check
    _
  $region23: #{distributional_dueling_dqn_forward.5} parent=0 // pred_check_branch
    %23 = sbr.rel (0) target = $region25
  $region24: #{distributional_dueling_dqn_forward.5} parent=0 // pred_region
    _
  $region25: #{distributional_dueling_dqn_forward.5} parent=0 // pred_fallthru
    _
  // Predicated region
  $region26: #{distributional_dueling_dqn_forward.5} parent=0 // pred_check
    _
  $region27: #{distributional_dueling_dqn_forward.5} parent=0 // pred_check_branch
    %25 = sbr.rel (0) target = $region29
  $region28: #{distributional_dueling_dqn_forward.5} parent=0 // pred_region
    _
  $region29: #{distributional_dueling_dqn_forward.5} parent=0 // pred_fallthru
    _
  %v27 = vld [vmem:[%s0] sm:$0x1f]
  %v28 = vld [vmem:[%s1] sm:$0xf]
  %v29 = vld [vmem:[%s1 + $0x4] sm:$0xf]
  %v30 = vld [vmem:[%s1 + $0x8] sm:$0xf]
  %v31 = vld [vmem:[%s1 + $0xc] sm:$0xf]
  %v32 = vld [vmem:[%s1 + $0x10] sm:$0xf]
  %v33 = vld [vmem:[%s1 + $0x14] sm:$0xf]
  %v34 = vld [vmem:[%s1 + $0x18] sm:$0xf]
  %v35 = vld [vmem:[%s1 + $0x1c] sm:$0xf]
  %v36 = vld [vmem:[%s1 + $0x20] sm:$0xf]
  %v37 = vld [vmem:[%s1 + $0x24] sm:$0xf]
  %v38 = vld [vmem:[%s1 + $0x28] sm:$0xf]
  %v39 = vld [vmem:[%s1 + $0x2c] sm:$0xf]
  %v40 = vld [vmem:[%s1 + $0x30] sm:$0xf]
  %v41 = vld [vmem:[%s1 + $0x34] sm:$0xf]
  %v42 = vld [vmem:[%s1 + $0x38] sm:$0xf]
  %v43 = vld [vmem:[%s1 + $0x3c] sm:$0xf]
  %v44 = vld [vmem:[%s1 + $0x40] sm:$0xf]
  %v45 = vld [vmem:[%s1 + $0x44] sm:$0xf]
  %v46 = vld [vmem:[%s1 + $0x48] sm:$0xf]
  %v47 = vld [vmem:[%s1 + $0x4c] sm:$0xf]
  %v48 = vld [vmem:[%s1 + $0x50] sm:$0xf]
  %v49 = vld [vmem:[%s1 + $0x54] sm:$0xf]
  %v50 = vld [vmem:[%s1 + $0x58] sm:$0xf]
  %v51 = vld [vmem:[%s1 + $0x5c] sm:$0xf]
  %v52 = vld [vmem:[%s1 + $0x60] sm:$0xf]
  %v53 = vld [vmem:[%s1 + $0x64] sm:$0xf]
  %v54 = vld [vmem:[%s1 + $0x68] sm:$0xf]
  %v55 = vld [vmem:[%s1 + $0x6c] sm:$0xf]
  %v56 = vld [vmem:[%s1 + $0x70] sm:$0xf]
  %v57 = vld [vmem:[%s1 + $0x74] sm:$0xf]
  %v58 = vld [vmem:[%s1 + $0x78] sm:$0xf]
  %v59 = vld [vmem:[%s1 + $0x7c] sm:$0xf]
  %v60 = vld [vmem:[%s1 + $0x80] sm:$0xf]
  %v61 = vld [vmem:[%s1 + $0x84] sm:$0xf]
  %v62 = vld [vmem:[%s1 + $0x88] sm:$0xf]
  %v63 = vld [vmem:[%s1 + $0x8c] sm:$0xf]
  %v64 = vld [vmem:[%s1 + $0x90] sm:$0xf]
  %v65 = vld [vmem:[%s1 + $0x94] sm:$0xf]
  %v66 = vld [vmem:[%s1 + $0x98] sm:$0xf]
  %v67 = vld [vmem:[%s1 + $0x9c] sm:$0xf]
  %v68 = vld [vmem:[%s1 + $0xa0] sm:$0xf]
  %v69 = vld [vmem:[%s1 + $0xa4] sm:$0xf]
  %v70 = vld [vmem:[%s1 + $0xa8] sm:$0xf]
  %v71 = vld [vmem:[%s1 + $0xac] sm:$0xf]
  %v72 = vld [vmem:[%s1 + $0xb0] sm:$0xf]
  %v73 = vld [vmem:[%s1 + $0xb4] sm:$0xf]
  %v74 = vld [vmem:[%s1 + $0xb8] sm:$0xf]
  %v75 = vld [vmem:[%s1 + $0xbc] sm:$0xf]
  %v76 = vld [vmem:[%s1 + $0xc0] sm:$0xf]
  %v77 = vld [vmem:[%s1 + $0xc4] sm:$0xf]
  %v78 = vld [vmem:[%s1 + $0xc8] sm:$0xf]
  %v79 = vld [vmem:[%s1 + $0xcc] sm:$0xf]
  %v80 = vld [vmem:[%s1 + $0xd0] sm:$0xf]
  %v81 = vld [vmem:[%s1 + $0xd4] sm:$0xf]
  %v82 = vld [vmem:[%s1 + $0xd8] sm:$0xf]
  %v83 = vld [vmem:[%s1 + $0xdc] sm:$0xf]
  %v84 = vld [vmem:[%s1 + $0xe0] sm:$0xf]
  %v85 = vld [vmem:[%s1 + $0xe4] sm:$0xf]
  %v86 = vld [vmem:[%s1 + $0xe8] sm:$0xf]
  %v87 = vld [vmem:[%s1 + $0xec] sm:$0xf]
  %v88 = vld [vmem:[%s1 + $0xf0] sm:$0xf]
  %v89 = vld [vmem:[%s1 + $0xf4] sm:$0xf]
  %v90 = vld [vmem:[%s1 + $0xf8] sm:$0xf]
  %v91 = vld [vmem:[%s1 + $0xfc] sm:$0xf]
  %v92 = vld [vmem:[%s1 + $0x100] sm:$0xf]
  %v93 = vld [vmem:[%s1 + $0x104] sm:$0xf]
  %v94 = vld [vmem:[%s1 + $0x108] sm:$0xf]
  %v95 = vld [vmem:[%s1 + $0x10c] sm:$0xf]
  %v96 = vld [vmem:[%s1 + $0x110] sm:$0xf]
  %v97 = vld [vmem:[%s1 + $0x114] sm:$0xf]
  %v98 = vld [vmem:[%s1 + $0x118] sm:$0xf]
  %v99 = vld [vmem:[%s1 + $0x11c] sm:$0xf]
  %v100 = vld [vmem:[%s2] sm:$0x1]
  %v102 = vlaneseq
  %v103 = vshrl.u32 %v102, 7
  %v104 = vsub.s32 0, %v103
  %v105 = vrot.slane %v100, %v104
  %v108 = vcombine.high %v27, %v27
  %v110 = vunpack.c.l.s4 1966171168
  %v111 = vunpack.c.0.s8 %v110
  %v112 = vlaneseq
  %v113 = vshrl.u32 %v112, 7
  %v114 = vsub.s32 %v111, %v113
  %v115 = vrot.slane %v27, %v114
  %v117 = vunpack.c.l.s4 1966171168
  %v118 = vunpack.c.0.s8 %v117
  %v119 = vlaneseq
  %v120 = vshrl.u32 %v119, 7
  %v121 = vsub.s32 %v118, %v120
  %v122 = vrot.slane %v108, %v121
  %v123 = vcombine.high %v115, %v115
  %v125 = vunpack.c.l.s4 1966171168
  %v126 = vunpack.c.0.s8 %v125
  %v127 = vlaneseq
  %v128 = vshrl.u32 %v127, 7
  %v129 = vsub.s32 %v126, %v128
  %v130 = vrot.slane %v115, %v129
  %v132 = vunpack.c.l.s4 1966171168
  %v133 = vunpack.c.0.s8 %v132
  %v134 = vlaneseq
  %v135 = vshrl.u32 %v134, 7
  %v136 = vsub.s32 %v133, %v135
  %v137 = vrot.slane %v122, %v136
  %v139 = vunpack.c.l.s4 1966171168
  %v140 = vunpack.c.0.s8 %v139
  %v141 = vlaneseq
  %v142 = vshrl.u32 %v141, 7
  %v143 = vsub.s32 %v140, %v142
  %v144 = vrot.slane %v123, %v143
  %v145 = vcombine.high %v130, %v130
  %v146 = vcombine.high %v144, %v144
  %v223 = vunpack.c.l.b16 %v28
  %v224 = vunpack.c.l.b16 %v29
  %v225 = vunpack.c.l.b16 %v30
  %v226 = vunpack.c.l.b16 %v31
  %v227 = vunpack.c.l.b16 %v32
  %v228 = vunpack.c.l.b16 %v33
  %v229 = vunpack.c.l.b16 %v34
  %v230 = vunpack.c.l.b16 %v35
  %v231 = vunpack.c.l.b16 %v36
  %v232 = vunpack.c.l.b16 %v37
  %v233 = vunpack.c.l.b16 %v38
  %v234 = vunpack.c.l.b16 %v39
  %v235 = vunpack.c.l.b16 %v40
  %v236 = vunpack.c.l.b16 %v41
  %v237 = vunpack.c.l.b16 %v42
  %v238 = vunpack.c.l.b16 %v43
  %v239 = vunpack.c.l.b16 %v44
  %v240 = vunpack.c.l.b16 %v45
  %v241 = vunpack.c.l.b16 %v46
  %v242 = vunpack.c.l.b16 %v47
  %v243 = vunpack.c.l.b16 %v48
  %v244 = vunpack.c.l.b16 %v49
  %v245 = vunpack.c.l.b16 %v50
  %v246 = vunpack.c.l.b16 %v51
  %v247 = vunpack.c.l.b16 %v52
  %v248 = vunpack.c.l.b16 %v53
  %v249 = vunpack.c.l.b16 %v54
  %v250 = vunpack.c.l.b16 %v55
  %v251 = vunpack.c.l.b16 %v56
  %v252 = vunpack.c.l.b16 %v57
  %v253 = vunpack.c.l.b16 %v58
  %v254 = vunpack.c.l.b16 %v59
  %v255 = vunpack.c.l.b16 %v60
  %v256 = vunpack.c.l.b16 %v61
  %v257 = vunpack.c.l.b16 %v62
  %v258 = vunpack.c.l.b16 %v63
  %v259 = vunpack.c.l.b16 %v64
  %v260 = vunpack.c.l.b16 %v65
  %v261 = vunpack.c.l.b16 %v66
  %v262 = vunpack.c.l.b16 %v67
  %v263 = vunpack.c.l.b16 %v68
  %v264 = vunpack.c.l.b16 %v69
  %v265 = vunpack.c.l.b16 %v70
  %v266 = vunpack.c.l.b16 %v71
  %v267 = vunpack.c.l.b16 %v72
  %v268 = vunpack.c.l.b16 %v73
  %v269 = vunpack.c.l.b16 %v74
  %v270 = vunpack.c.l.b16 %v75
  %v271 = vunpack.c.l.b16 %v76
  %v272 = vunpack.c.l.b16 %v77
  %v273 = vunpack.c.l.b16 %v78
  %v274 = vunpack.c.l.b16 %v79
  %v275 = vunpack.c.l.b16 %v80
  %v276 = vunpack.c.l.b16 %v81
  %v277 = vunpack.c.l.b16 %v82
  %v278 = vunpack.c.l.b16 %v83
  %v279 = vunpack.c.l.b16 %v84
  %v280 = vunpack.c.l.b16 %v85
  %v281 = vunpack.c.l.b16 %v86
  %v282 = vunpack.c.l.b16 %v87
  %v283 = vunpack.c.l.b16 %v88
  %v284 = vunpack.c.l.b16 %v89
  %v285 = vunpack.c.l.b16 %v90
  %v286 = vunpack.c.l.b16 %v91
  %v287 = vunpack.c.l.b16 %v92
  %v288 = vunpack.c.l.b16 %v93
  %v289 = vunpack.c.l.b16 %v94
  %v290 = vunpack.c.l.b16 %v95
  %v291 = vunpack.c.l.b16 %v96
  %v292 = vunpack.c.l.b16 %v97
  %v293 = vunpack.c.l.b16 %v98
  %v294 = vunpack.c.l.b16 %v99
  %v295 = vpack.c.b16 %v224, %v223
  %v296 = vpack.c.b16 %v226, %v225
  %v297 = vpack.c.b16 %v228, %v227
  %v298 = vpack.c.b16 %v230, %v229
  %v299 = vpack.c.b16 %v232, %v231
  %v300 = vpack.c.b16 %v234, %v233
  %v301 = vpack.c.b16 %v236, %v235
  %v302 = vpack.c.b16 %v238, %v237
  %v303 = vpack.c.b16 %v240, %v239
  %v304 = vpack.c.b16 %v242, %v241
  %v305 = vpack.c.b16 %v244, %v243
  %v306 = vpack.c.b16 %v246, %v245
  %v307 = vpack.c.b16 %v248, %v247
  %v308 = vpack.c.b16 %v250, %v249
  %v309 = vpack.c.b16 %v252, %v251
  %v310 = vpack.c.b16 %v254, %v253
  %v311 = vpack.c.b16 %v256, %v255
  %v312 = vpack.c.b16 %v258, %v257
  %v313 = vpack.c.b16 %v260, %v259
  %v314 = vpack.c.b16 %v262, %v261
  %v315 = vpack.c.b16 %v264, %v263
  %v316 = vpack.c.b16 %v266, %v265
  %v317 = vpack.c.b16 %v268, %v267
  %v318 = vpack.c.b16 %v270, %v269
  %v319 = vpack.c.b16 %v272, %v271
  %v320 = vpack.c.b16 %v274, %v273
  %v321 = vpack.c.b16 %v276, %v275
  %v322 = vpack.c.b16 %v278, %v277
  %v323 = vpack.c.b16 %v280, %v279
  %v324 = vpack.c.b16 %v282, %v281
  %v325 = vpack.c.b16 %v284, %v283
  %v326 = vpack.c.b16 %v286, %v285
  %v327 = vpack.c.b16 %v288, %v287
  %v328 = vpack.c.b16 %v290, %v289
  %v329 = vpack.c.b16 %v292, %v291
  %v330 = vpack.c.b16 %v294, %v293
  %vm367 = vcmask 523264
  %v369 = vsel %vm367, %v137, 0
  %371 = vmatprep.subr.bf16.mxu0 0
  %372 = vmatpush1.bf16.msra.mxu0 %v295
  %373 = vmatprep.subr.bf16.mxu0 0
  %374 = vmatpush1.bf16.msra.mxu0 %v296
  %375 = vmatprep.subr.bf16.mxu0 0
  %376 = vmatpush1.bf16.msra.mxu0 %v297
  %377 = vmatprep.subr.bf16.mxu0 0
  %378 = vmatpush1.bf16.msra.mxu0 %v298
  %379 = vmatprep.subr.bf16.mxu0 0
  %380 = vmatpush1.bf16.msra.mxu0 %v299
  %381 = vmatprep.subr.bf16.mxu0 0
  %382 = vmatpush1.bf16.msra.mxu0 %v300
  %383 = vmatprep.subr.bf16.mxu0 0
  %384 = vmatpush1.bf16.msra.mxu0 %v301
  %385 = vmatprep.subr.bf16.mxu0 0
  %386 = vmatpush1.bf16.msra.mxu0 %v302
  %387 = vmatprep.subr.bf16.mxu0 0
  %388 = vmatpush1.bf16.msra.mxu0 %v303
  %389 = vmatprep.subr.bf16.mxu0 0
  %390 = vmatpush1.bf16.msra.mxu0 %v304
  %391 = vmatprep.subr.bf16.mxu0 0
  %392 = vmatpush1.bf16.msra.mxu0 %v305
  %393 = vmatprep.subr.bf16.mxu0 0
  %394 = vmatpush1.bf16.msra.mxu0 %v306
  %395 = vmatprep.subr.bf16.mxu0 0
  %396 = vmatpush1.bf16.msra.mxu0 %v307
  %397 = vmatprep.subr.bf16.mxu0 0
  %398 = vmatpush1.bf16.msra.mxu0 %v308
  %399 = vmatprep.subr.bf16.mxu0 0
  %400 = vmatpush1.bf16.msra.mxu0 %v309
  %401 = vmatprep.subr.bf16.mxu0 0
  %402 = vmatpush1.bf16.msra.mxu0 %v310
  %403 = vmatprep.mubr.bf16.mxu0 %v144
  %404 = vmatmul.mubr.bf16.gmra.mrb[0].mxu0 %v130
  %v405 = vpop.f32.mrb[0].mxu0
  %v406 = vadd.f32 %v105, %v405
  %v407 = vpop.f32.mrb[0].mxu0
  %v408 = vpop.f32.mrb[0].mxu0
  %v409 = vpop.f32.mrb[0].mxu0
  %410 = vdwg.mxu0
  %411 = vmatprep.subr.bf16.mxu0 0
  %412 = vmatpush1.bf16.msra.mxu0 %v311
  %413 = vmatprep.subr.bf16.mxu0 0
  %414 = vmatpush1.bf16.msra.mxu0 %v312
  %415 = vmatprep.subr.bf16.mxu0 0
  %416 = vmatpush1.bf16.msra.mxu0 %v313
  %417 = vmatprep.subr.bf16.mxu0 0
  %418 = vmatpush1.bf16.msra.mxu0 %v314
  %419 = vmatprep.subr.bf16.mxu0 0
  %420 = vmatpush1.bf16.msra.mxu0 %v315
  %421 = vmatprep.subr.bf16.mxu0 0
  %422 = vmatpush1.bf16.msra.mxu0 %v316
  %423 = vmatprep.subr.bf16.mxu0 0
  %424 = vmatpush1.bf16.msra.mxu0 %v317
  %425 = vmatprep.subr.bf16.mxu0 0
  %426 = vmatpush1.bf16.msra.mxu0 %v318
  %427 = vmatprep.subr.bf16.mxu0 0
  %428 = vmatpush1.bf16.msra.mxu0 %v319
  %429 = vmatprep.subr.bf16.mxu0 0
  %430 = vmatpush1.bf16.msra.mxu0 %v320
  %431 = vmatprep.subr.bf16.mxu0 0
  %432 = vmatpush1.bf16.msra.mxu0 %v321
  %433 = vmatprep.subr.bf16.mxu0 0
  %434 = vmatpush1.bf16.msra.mxu0 %v322
  %435 = vmatprep.subr.bf16.mxu0 0
  %436 = vmatpush1.bf16.msra.mxu0 %v323
  %437 = vmatprep.subr.bf16.mxu0 0
  %438 = vmatpush1.bf16.msra.mxu0 %v324
  %439 = vmatprep.subr.bf16.mxu0 0
  %440 = vmatpush1.bf16.msra.mxu0 %v325
  %441 = vmatprep.subr.bf16.mxu0 0
  %442 = vmatpush1.bf16.msra.mxu0 %v326
  %443 = vmatprep.mubr.bf16.mxu0 %v146
  %444 = vmatmul.mubr.bf16.gmra.mrb[0].mxu0 %v145
  %v445 = vpop.f32.mrb[0].mxu0
  %v446 = vadd.f32 %v406, %v445
  %v447 = vpop.f32.mrb[0].mxu0
  %v448 = vpop.f32.mrb[0].mxu0
  %v449 = vpop.f32.mrb[0].mxu0
  %450 = vdwg.mxu0
  %451 = vmatprep.subr.bf16.mxu0 0
  %452 = vmatpush1.bf16.msra.mxu0 %v327
  %453 = vmatprep.subr.bf16.mxu0 0
  %454 = vmatpush1.bf16.msra.mxu0 %v328
  %455 = vmatprep.subr.bf16.mxu0 0
  %456 = vmatpush1.bf16.msra.mxu0 %v329
  %457 = vmatprep.subr.bf16.mxu0 0
  %458 = vmatpush1.bf16.msra.mxu0 %v330
  %459 = vmatprep.subr.bf16.mxu0 0
  %460 = vmatpush1.bf16.msra.mxu0 0
  %461 = vmatprep.subr.bf16.mxu0 0
  %462 = vmatpush1.bf16.msra.mxu0 0
  %463 = vmatprep.subr.bf16.mxu0 0
  %464 = vmatpush1.bf16.msra.mxu0 0
  %465 = vmatprep.subr.bf16.mxu0 0
  %466 = vmatpush1.bf16.msra.mxu0 0
  %467 = vmatprep.subr.bf16.mxu0 0
  %468 = vmatpush1.bf16.msra.mxu0 0
  %469 = vmatprep.subr.bf16.mxu0 0
  %470 = vmatpush1.bf16.msra.mxu0 0
  %471 = vmatprep.subr.bf16.mxu0 0
  %472 = vmatpush1.bf16.msra.mxu0 0
  %473 = vmatprep.subr.bf16.mxu0 0
  %474 = vmatpush1.bf16.msra.mxu0 0
  %475 = vmatprep.subr.bf16.mxu0 0
  %476 = vmatpush1.bf16.msra.mxu0 0
  %477 = vmatprep.subr.bf16.mxu0 0
  %478 = vmatpush1.bf16.msra.mxu0 0
  %479 = vmatprep.subr.bf16.mxu0 0
  %480 = vmatpush1.bf16.msra.mxu0 0
  %481 = vmatprep.subr.bf16.mxu0 0
  %482 = vmatpush1.bf16.msra.mxu0 0
  %483 = vmatprep.mubr.bf16.mxu0 0
  %484 = vmatmul.mubr.bf16.gmra.mrb[0].mxu0 %v369
  %v485 = vpop.f32.mrb[0].mxu0
  %v486 = vadd.f32 %v446, %v485
  %v487 = vpop.f32.mrb[0].mxu0
  %v488 = vpop.f32.mrb[0].mxu0
  %v489 = vpop.f32.mrb[0].mxu0
  %490 = vdwg.mxu0
  %v491 = vmax.f32 %v486, 0.0
  %v492 = vpack.c.bf16 %v491, %v491
  %v493 = vld [vmem:[%s3] sm:$0xff]
  %v494 = vld [vmem:[%s3 + $0x8] sm:$0xff]
  %v495 = vld [vmem:[%s3 + $0x10] sm:$0xff]
  %v496 = vld [vmem:[%s3 + $0x18] sm:$0xff]
  %v497 = vld [vmem:[%s3 + $0x20] sm:$0xff]
  %v498 = vld [vmem:[%s3 + $0x28] sm:$0xff]
  %v499 = vld [vmem:[%s3 + $0x30] sm:$0xff]
  %v500 = vld [vmem:[%s3 + $0x38] sm:$0xff]
  %v501 = vld [vmem:[%s3 + $0x40] sm:$0xff]
  %v502 = vld [vmem:[%s3 + $0x48] sm:$0xff]
  %v503 = vld [vmem:[%s3 + $0x50] sm:$0xff]
  %v504 = vld [vmem:[%s3 + $0x58] sm:$0xff]
  %v505 = vld [vmem:[%s3 + $0x60] sm:$0xff]
  %v506 = vld [vmem:[%s3 + $0x68] sm:$0xff]
  %v507 = vld [vmem:[%s3 + $0x70] sm:$0xff]
  %v508 = vld [vmem:[%s3 + $0x78] sm:$0xff]
  %v509 = vld [vmem:[%s3 + $0x80] sm:$0xff]
  %v510 = vld [vmem:[%s3 + $0x88] sm:$0xff]
  %v511 = vld [vmem:[%s3 + $0x90] sm:$0xff]
  %v512 = vld [vmem:[%s3 + $0x98] sm:$0xff]
  %v513 = vld [vmem:[%s3 + $0xa0] sm:$0xff]
  %v514 = vld [vmem:[%s3 + $0xa8] sm:$0xff]
  %v515 = vld [vmem:[%s3 + $0xb0] sm:$0xff]
  %v516 = vld [vmem:[%s3 + $0xb8] sm:$0xff]
  %v517 = vld [vmem:[%s3 + $0xc0] sm:$0xff]
  %v518 = vld [vmem:[%s3 + $0xc8] sm:$0xff]
  %v519 = vld [vmem:[%s3 + $0xd0] sm:$0xff]
  %v520 = vld [vmem:[%s3 + $0xd8] sm:$0xff]
  %v521 = vld [vmem:[%s3 + $0xe0] sm:$0xff]
  %v522 = vld [vmem:[%s3 + $0xe8] sm:$0xff]
  %v523 = vld [vmem:[%s3 + $0xf0] sm:$0xff]
  %v524 = vld [vmem:[%s3 + $0xf8] sm:$0xff]
  %v525 = vld [vmem:[%s4] sm:$0xff]
  %v527 = vlaneseq
  %v528 = vshrl.u32 %v527, 7
  %v529 = vsub.s32 0, %v528
  %v530 = vrot.slane %v525, %v529
  %v531 = vlaneseq
  %v532 = vshrl.u32 %v531, 7
  %v533 = vsub.s32 1, %v532
  %v534 = vrot.slane %v525, %v533
  %v535 = vlaneseq
  %v536 = vshrl.u32 %v535, 7
  %v537 = vsub.s32 2, %v536
  %v538 = vrot.slane %v525, %v537
  %v539 = vlaneseq
  %v540 = vshrl.u32 %v539, 7
  %v541 = vsub.s32 3, %v540
  %v542 = vrot.slane %v525, %v541
  %v543 = vlaneseq
  %v544 = vshrl.u32 %v543, 7
  %v545 = vsub.s32 4, %v544
  %v546 = vrot.slane %v525, %v545
  %v547 = vlaneseq
  %v548 = vshrl.u32 %v547, 7
  %v549 = vsub.s32 5, %v548
  %v550 = vrot.slane %v525, %v549
  %v551 = vlaneseq
  %v552 = vshrl.u32 %v551, 7
  %v553 = vsub.s32 6, %v552
  %v554 = vrot.slane %v525, %v553
  %v555 = vlaneseq
  %v556 = vshrl.u32 %v555, 7
  %v557 = vsub.s32 7, %v556
  %v558 = vrot.slane %v525, %v557
  %v599 = vunpack.c.l.b16 %v493
  %v600 = vunpack.c.h.b16 %v493
  %v601 = vunpack.c.l.b16 %v494
  %v602 = vunpack.c.h.b16 %v494
  %v603 = vunpack.c.l.b16 %v495
  %v604 = vunpack.c.h.b16 %v495
  %v605 = vunpack.c.l.b16 %v496
  %v606 = vunpack.c.h.b16 %v496
  %v607 = vunpack.c.l.b16 %v497
  %v608 = vunpack.c.h.b16 %v497
  %v609 = vunpack.c.l.b16 %v498
  %v610 = vunpack.c.h.b16 %v498
  %v611 = vunpack.c.l.b16 %v499
  %v612 = vunpack.c.h.b16 %v499
  %v613 = vunpack.c.l.b16 %v500
  %v614 = vunpack.c.h.b16 %v500
  %v615 = vunpack.c.l.b16 %v501
  %v616 = vunpack.c.h.b16 %v501
  %v617 = vunpack.c.l.b16 %v502
  %v618 = vunpack.c.h.b16 %v502
  %v619 = vunpack.c.l.b16 %v503
  %v620 = vunpack.c.h.b16 %v503
  %v621 = vunpack.c.l.b16 %v504
  %v622 = vunpack.c.h.b16 %v504
  %v623 = vunpack.c.l.b16 %v505
  %v624 = vunpack.c.h.b16 %v505
  %v625 = vunpack.c.l.b16 %v506
  %v626 = vunpack.c.h.b16 %v506
  %v627 = vunpack.c.l.b16 %v507
  %v628 = vunpack.c.h.b16 %v507
  %v629 = vunpack.c.l.b16 %v508
  %v630 = vunpack.c.h.b16 %v508
  %v631 = vunpack.c.l.b16 %v509
  %v632 = vunpack.c.h.b16 %v509
  %v633 = vunpack.c.l.b16 %v510
  %v634 = vunpack.c.h.b16 %v510
  %v635 = vunpack.c.l.b16 %v511
  %v636 = vunpack.c.h.b16 %v511
  %v637 = vunpack.c.l.b16 %v512
  %v638 = vunpack.c.h.b16 %v512
  %v639 = vunpack.c.l.b16 %v513
  %v640 = vunpack.c.h.b16 %v513
  %v641 = vunpack.c.l.b16 %v514
  %v642 = vunpack.c.h.b16 %v514
  %v643 = vunpack.c.l.b16 %v515
  %v644 = vunpack.c.h.b16 %v515
  %v645 = vunpack.c.l.b16 %v516
  %v646 = vunpack.c.h.b16 %v516
  %v647 = vunpack.c.l.b16 %v517
  %v648 = vunpack.c.h.b16 %v517
  %v649 = vunpack.c.l.b16 %v518
  %v650 = vunpack.c.h.b16 %v518
  %v651 = vunpack.c.l.b16 %v519
  %v652 = vunpack.c.h.b16 %v519
  %v653 = vunpack.c.l.b16 %v520
  %v654 = vunpack.c.h.b16 %v520
  %v655 = vunpack.c.l.b16 %v521
  %v656 = vunpack.c.h.b16 %v521
  %v657 = vunpack.c.l.b16 %v522
  %v658 = vunpack.c.h.b16 %v522
  %v659 = vunpack.c.l.b16 %v523
  %v660 = vunpack.c.h.b16 %v523
  %v661 = vunpack.c.l.b16 %v524
  %v662 = vunpack.c.h.b16 %v524
  %v663 = vpack.c.b16 %v607, %v599
  %v664 = vpack.c.b16 %v608, %v600
  %v665 = vpack.c.b16 %v609, %v601
  %v666 = vpack.c.b16 %v610, %v602
  %v667 = vpack.c.b16 %v611, %v603
  %v668 = vpack.c.b16 %v612, %v604
  %v669 = vpack.c.b16 %v613, %v605
  %v670 = vpack.c.b16 %v614, %v606
  %v671 = vpack.c.b16 %v623, %v615
  %v672 = vpack.c.b16 %v624, %v616
  %v673 = vpack.c.b16 %v625, %v617
  %v674 = vpack.c.b16 %v626, %v618
  %v675 = vpack.c.b16 %v627, %v619
  %v676 = vpack.c.b16 %v628, %v620
  %v677 = vpack.c.b16 %v629, %v621
  %v678 = vpack.c.b16 %v630, %v622
  %v679 = vpack.c.b16 %v639, %v631
  %v680 = vpack.c.b16 %v640, %v632
  %v681 = vpack.c.b16 %v641, %v633
  %v682 = vpack.c.b16 %v642, %v634
  %v683 = vpack.c.b16 %v643, %v635
  %v684 = vpack.c.b16 %v644, %v636
  %v685 = vpack.c.b16 %v645, %v637
  %v686 = vpack.c.b16 %v646, %v638
  %v687 = vpack.c.b16 %v655, %v647
  %v688 = vpack.c.b16 %v656, %v648
  %v689 = vpack.c.b16 %v657, %v649
  %v690 = vpack.c.b16 %v658, %v650
  %v691 = vpack.c.b16 %v659, %v651
  %v692 = vpack.c.b16 %v660, %v652
  %v693 = vpack.c.b16 %v661, %v653
  %v694 = vpack.c.b16 %v662, %v654
  %v728 = vsel %vm367, %v492, 0
  %730 = vmatprep.subr.bf16.mxu0 %v664
  %731 = vmatpush1.bf16.msra.mxu0 %v663
  %732 = vmatprep.subr.bf16.mxu0 %v672
  %733 = vmatpush1.bf16.msra.mxu0 %v671
  %734 = vmatprep.subr.bf16.mxu0 %v680
  %735 = vmatpush1.bf16.msra.mxu0 %v679
  %736 = vmatprep.subr.bf16.mxu0 %v688
  %737 = vmatpush1.bf16.msra.mxu0 %v687
  %738 = vmatprep.subr.bf16.mxu0 0
  %739 = vmatpush1.bf16.msra.mxu0 0
  %740 = vmatprep.subr.bf16.mxu0 0
  %741 = vmatpush1.bf16.msra.mxu0 0
  %742 = vmatprep.subr.bf16.mxu0 0
  %743 = vmatpush1.bf16.msra.mxu0 0
  %744 = vmatprep.subr.bf16.mxu0 0
  %745 = vmatpush1.bf16.msra.mxu0 0
  %746 = vmatprep.subr.bf16.mxu0 0
  %747 = vmatpush1.bf16.msra.mxu0 0
  %748 = vmatprep.subr.bf16.mxu0 0
  %749 = vmatpush1.bf16.msra.mxu0 0
  %750 = vmatprep.subr.bf16.mxu0 0
  %751 = vmatpush1.bf16.msra.mxu0 0
  %752 = vmatprep.subr.bf16.mxu0 0
  %753 = vmatpush1.bf16.msra.mxu0 0
  %754 = vmatprep.subr.bf16.mxu0 0
  %755 = vmatpush1.bf16.msra.mxu0 0
  %756 = vmatprep.subr.bf16.mxu0 0
  %757 = vmatpush1.bf16.msra.mxu0 0
  %758 = vmatprep.subr.bf16.mxu0 0
  %759 = vmatpush1.bf16.msra.mxu0 0
  %760 = vmatprep.subr.bf16.mxu0 0
  %761 = vmatpush1.bf16.msra.mxu0 0
  %762 = vmatprep.mubr.bf16.mxu0 0
  %763 = vmatmul.mubr.bf16.gmra.mrb[0].mxu0 %v728
  %v764 = vpop.f32.mrb[0].mxu0
  %v765 = vadd.f32 %v530, %v764
  %v766 = vpop.f32.mrb[0].mxu0
  %v767 = vadd.f32 %v534, %v766
  %v768 = vpop.f32.mrb[0].mxu0
  %v769 = vpop.f32.mrb[0].mxu0
  %770 = vdwg.mxu0
  %771 = vmatprep.subr.bf16.mxu0 %v666
  %772 = vmatpush1.bf16.msra.mxu0 %v665
  %773 = vmatprep.subr.bf16.mxu0 %v674
  %774 = vmatpush1.bf16.msra.mxu0 %v673
  %775 = vmatprep.subr.bf16.mxu0 %v682
  %776 = vmatpush1.bf16.msra.mxu0 %v681
  %777 = vmatprep.subr.bf16.mxu0 %v690
  %778 = vmatpush1.bf16.msra.mxu0 %v689
  %779 = vmatprep.subr.bf16.mxu0 0
  %780 = vmatpush1.bf16.msra.mxu0 0
  %781 = vmatprep.subr.bf16.mxu0 0
  %782 = vmatpush1.bf16.msra.mxu0 0
  %783 = vmatprep.subr.bf16.mxu0 0
  %784 = vmatpush1.bf16.msra.mxu0 0
  %785 = vmatprep.subr.bf16.mxu0 0
  %786 = vmatpush1.bf16.msra.mxu0 0
  %787 = vmatprep.subr.bf16.mxu0 0
  %788 = vmatpush1.bf16.msra.mxu0 0
  %789 = vmatprep.subr.bf16.mxu0 0
  %790 = vmatpush1.bf16.msra.mxu0 0
  %791 = vmatprep.subr.bf16.mxu0 0
  %792 = vmatpush1.bf16.msra.mxu0 0
  %793 = vmatprep.subr.bf16.mxu0 0
  %794 = vmatpush1.bf16.msra.mxu0 0
  %795 = vmatprep.subr.bf16.mxu0 0
  %796 = vmatpush1.bf16.msra.mxu0 0
  %797 = vmatprep.subr.bf16.mxu0 0
  %798 = vmatpush1.bf16.msra.mxu0 0
  %799 = vmatprep.subr.bf16.mxu0 0
  %800 = vmatpush1.bf16.msra.mxu0 0
  %801 = vmatprep.subr.bf16.mxu0 0
  %802 = vmatpush1.bf16.msra.mxu0 0
  %803 = vmatprep.mubr.bf16.mxu0 0
  %804 = vmatmul.mubr.bf16.gmra.mrb[0].mxu0 %v728
  %v805 = vpop.f32.mrb[0].mxu0
  %v806 = vadd.f32 %v538, %v805
  %v807 = vpop.f32.mrb[0].mxu0
  %v808 = vadd.f32 %v542, %v807
  %v809 = vpop.f32.mrb[0].mxu0
  %v810 = vpop.f32.mrb[0].mxu0
  %811 = vdwg.mxu0
  %812 = vmatprep.subr.bf16.mxu0 %v668
  %813 = vmatpush1.bf16.msra.mxu0 %v667
  %814 = vmatprep.subr.bf16.mxu0 %v676
  %815 = vmatpush1.bf16.msra.mxu0 %v675
  %816 = vmatprep.subr.bf16.mxu0 %v684
  %817 = vmatpush1.bf16.msra.mxu0 %v683
  %818 = vmatprep.subr.bf16.mxu0 %v692
  %819 = vmatpush1.bf16.msra.mxu0 %v691
  %820 = vmatprep.subr.bf16.mxu0 0
  %821 = vmatpush1.bf16.msra.mxu0 0
  %822 = vmatprep.subr.bf16.mxu0 0
  %823 = vmatpush1.bf16.msra.mxu0 0
  %824 = vmatprep.subr.bf16.mxu0 0
  %825 = vmatpush1.bf16.msra.mxu0 0
  %826 = vmatprep.subr.bf16.mxu0 0
  %827 = vmatpush1.bf16.msra.mxu0 0
  %828 = vmatprep.subr.bf16.mxu0 0
  %829 = vmatpush1.bf16.msra.mxu0 0
  %830 = vmatprep.subr.bf16.mxu0 0
  %831 = vmatpush1.bf16.msra.mxu0 0
  %832 = vmatprep.subr.bf16.mxu0 0
  %833 = vmatpush1.bf16.msra.mxu0 0
  %834 = vmatprep.subr.bf16.mxu0 0
  %835 = vmatpush1.bf16.msra.mxu0 0
  %836 = vmatprep.subr.bf16.mxu0 0
  %837 = vmatpush1.bf16.msra.mxu0 0
  %838 = vmatprep.subr.bf16.mxu0 0
  %839 = vmatpush1.bf16.msra.mxu0 0
  %840 = vmatprep.subr.bf16.mxu0 0
  %841 = vmatpush1.bf16.msra.mxu0 0
  %842 = vmatprep.subr.bf16.mxu0 0
  %843 = vmatpush1.bf16.msra.mxu0 0
  %844 = vmatprep.mubr.bf16.mxu0 0
  %845 = vmatmul.mubr.bf16.gmra.mrb[0].mxu0 %v728
  %v846 = vpop.f32.mrb[0].mxu0
  %v847 = vadd.f32 %v546, %v846
  %v848 = vpop.f32.mrb[0].mxu0
  %v849 = vadd.f32 %v550, %v848
  %v850 = vpop.f32.mrb[0].mxu0
  %v851 = vpop.f32.mrb[0].mxu0
  %852 = vdwg.mxu0
  %853 = vmatprep.subr.bf16.mxu0 %v670
  %854 = vmatpush1.bf16.msra.mxu0 %v669
  %855 = vmatprep.subr.bf16.mxu0 %v678
  %856 = vmatpush1.bf16.msra.mxu0 %v677
  %857 = vmatprep.subr.bf16.mxu0 %v686
  %858 = vmatpush1.bf16.msra.mxu0 %v685
  %859 = vmatprep.subr.bf16.mxu0 %v694
  %860 = vmatpush1.bf16.msra.mxu0 %v693
  %861 = vmatprep.subr.bf16.mxu0 0
  %862 = vmatpush1.bf16.msra.mxu0 0
  %863 = vmatprep.subr.bf16.mxu0 0
  %864 = vmatpush1.bf16.msra.mxu0 0
  %865 = vmatprep.subr.bf16.mxu0 0
  %866 = vmatpush1.bf16.msra.mxu0 0
  %867 = vmatprep.subr.bf16.mxu0 0
  %868 = vmatpush1.bf16.msra.mxu0 0
  %869 = vmatprep.subr.bf16.mxu0 0
  %870 = vmatpush1.bf16.msra.mxu0 0
  %871 = vmatprep.subr.bf16.mxu0 0
  %872 = vmatpush1.bf16.msra.mxu0 0
  %873 = vmatprep.subr.bf16.mxu0 0
  %874 = vmatpush1.bf16.msra.mxu0 0
  %875 = vmatprep.subr.bf16.mxu0 0
  %876 = vmatpush1.bf16.msra.mxu0 0
  %877 = vmatprep.subr.bf16.mxu0 0
  %878 = vmatpush1.bf16.msra.mxu0 0
  %879 = vmatprep.subr.bf16.mxu0 0
  %880 = vmatpush1.bf16.msra.mxu0 0
  %881 = vmatprep.subr.bf16.mxu0 0
  %882 = vmatpush1.bf16.msra.mxu0 0
  %883 = vmatprep.subr.bf16.mxu0 0
  %884 = vmatpush1.bf16.msra.mxu0 0
  %885 = vmatprep.mubr.bf16.mxu0 0
  %886 = vmatmul.mubr.bf16.gmra.mrb[0].mxu0 %v728
  %v887 = vpop.f32.mrb[0].mxu0
  %v888 = vadd.f32 %v554, %v887
  %v889 = vpop.f32.mrb[0].mxu0
  %v890 = vadd.f32 %v558, %v889
  %v891 = vpop.f32.mrb[0].mxu0
  %v892 = vpop.f32.mrb[0].mxu0
  %893 = vdwg.mxu0
  %v894 = vmax.f32 %v765, 0.0
  %v895 = vmax.f32 %v767, 0.0
  %v896 = vmax.f32 %v806, 0.0
  %v897 = vmax.f32 %v808, 0.0
  %v898 = vmax.f32 %v847, 0.0
  %v899 = vmax.f32 %v849, 0.0
  %v900 = vmax.f32 %v888, 0.0
  %v901 = vmax.f32 %v890, 0.0
  %v902 = vpack.c.bf16 %v894, %v894
  %v903 = vpack.c.bf16 %v895, %v895
  %v904 = vpack.c.bf16 %v896, %v896
  %v905 = vpack.c.bf16 %v897, %v897
  %v906 = vpack.c.bf16 %v898, %v898
  %v907 = vpack.c.bf16 %v899, %v899
  %v908 = vpack.c.bf16 %v900, %v900
  %v909 = vpack.c.bf16 %v901, %v901
  %v910 = vld [vmem:[%s5] sm:$0xff]
  %v911 = vld [vmem:[%s5 + $0x8] sm:$0xff]
  %v912 = vld [vmem:[%s5 + $0x10] sm:$0xf]
  %v913 = vld [vmem:[%s5 + $0x14] sm:$0xff]
  %v914 = vld [vmem:[%s5 + $0x1c] sm:$0xff]
  %v915 = vld [vmem:[%s5 + $0x24] sm:$0xf]
  %v916 = vld [vmem:[%s5 + $0x28] sm:$0xff]
  %v917 = vld [vmem:[%s5 + $0x30] sm:$0xff]
  %v918 = vld [vmem:[%s5 + $0x38] sm:$0xf]
  %v919 = vld [vmem:[%s5 + $0x3c] sm:$0xff]
  %v920 = vld [vmem:[%s5 + $0x44] sm:$0xff]
  %v921 = vld [vmem:[%s5 + $0x4c] sm:$0xf]
  %v922 = vld [vmem:[%s5 + $0x50] sm:$0xff]
  %v923 = vld [vmem:[%s5 + $0x58] sm:$0xff]
  %v924 = vld [vmem:[%s5 + $0x60] sm:$0xf]
  %v925 = vld [vmem:[%s5 + $0x64] sm:$0xff]
  %v926 = vld [vmem:[%s5 + $0x6c] sm:$0xff]
  %v927 = vld [vmem:[%s5 + $0x74] sm:$0xf]
  %v928 = vld [vmem:[%s5 + $0x78] sm:$0xff]
  %v929 = vld [vmem:[%s5 + $0x80] sm:$0xff]
  %v930 = vld [vmem:[%s5 + $0x88] sm:$0xf]
  %v931 = vld [vmem:[%s5 + $0x8c] sm:$0xff]
  %v932 = vld [vmem:[%s5 + $0x94] sm:$0xff]
  %v933 = vld [vmem:[%s5 + $0x9c] sm:$0xf]
  %v934 = vld [vmem:[%s5 + $0xa0] sm:$0xff]
  %v935 = vld [vmem:[%s5 + $0xa8] sm:$0xff]
  %v936 = vld [vmem:[%s5 + $0xb0] sm:$0xf]
  %v937 = vld [vmem:[%s5 + $0xb4] sm:$0xff]
  %v938 = vld [vmem:[%s5 + $0xbc] sm:$0xff]
  %v939 = vld [vmem:[%s5 + $0xc4] sm:$0xf]
  %v940 = vld [vmem:[%s5 + $0xc8] sm:$0xff]
  %v941 = vld [vmem:[%s5 + $0xd0] sm:$0xff]
  %v942 = vld [vmem:[%s5 + $0xd8] sm:$0xf]
  %v943 = vld [vmem:[%s5 + $0xdc] sm:$0xff]
  %v944 = vld [vmem:[%s5 + $0xe4] sm:$0xff]
  %v945 = vld [vmem:[%s5 + $0xec] sm:$0xf]
  %v946 = vld [vmem:[%s5 + $0xf0] sm:$0xff]
  %v947 = vld [vmem:[%s5 + $0xf8] sm:$0xff]
  %v948 = vld [vmem:[%s5 + $0x100] sm:$0xf]
  %v949 = vld [vmem:[%s5 + $0x104] sm:$0xff]
  %v950 = vld [vmem:[%s5 + $0x10c] sm:$0xff]
  %v951 = vld [vmem:[%s5 + $0x114] sm:$0xf]
  %v952 = vld [vmem:[%s5 + $0x118] sm:$0xff]
  %v953 = vld [vmem:[%s5 + $0x120] sm:$0xff]
  %v954 = vld [vmem:[%s5 + $0x128] sm:$0xf]
  %v955 = vld [vmem:[%s5 + $0x12c] sm:$0xff]
  %v956 = vld [vmem:[%s5 + $0x134] sm:$0xff]
  %v957 = vld [vmem:[%s5 + $0x13c] sm:$0xf]
  %v958 = vld [vmem:[%s5 + $0x140] sm:$0xff]
  %v959 = vld [vmem:[%s5 + $0x148] sm:$0xff]
  %v960 = vld [vmem:[%s5 + $0x150] sm:$0xf]
  %v961 = vld [vmem:[%s5 + $0x154] sm:$0xff]
  %v962 = vld [vmem:[%s5 + $0x15c] sm:$0xff]
  %v963 = vld [vmem:[%s5 + $0x164] sm:$0xf]
  %v964 = vld [vmem:[%s5 + $0x168] sm:$0xff]
  %v965 = vld [vmem:[%s5 + $0x170] sm:$0xff]
  %v966 = vld [vmem:[%s5 + $0x178] sm:$0xf]
  %v967 = vld [vmem:[%s5 + $0x17c] sm:$0xff]
  %v968 = vld [vmem:[%s5 + $0x184] sm:$0xff]
  %v969 = vld [vmem:[%s5 + $0x18c] sm:$0xf]
  %v970 = vld [vmem:[%s5 + $0x190] sm:$0xff]
  %v971 = vld [vmem:[%s5 + $0x198] sm:$0xff]
  %v972 = vld [vmem:[%s5 + $0x1a0] sm:$0xf]
  %v973 = vld [vmem:[%s5 + $0x1a4] sm:$0xff]
  %v974 = vld [vmem:[%s5 + $0x1ac] sm:$0xff]
  %v975 = vld [vmem:[%s5 + $0x1b4] sm:$0xf]
  %v976 = vld [vmem:[%s5 + $0x1b8] sm:$0xff]
  %v977 = vld [vmem:[%s5 + $0x1c0] sm:$0xff]
  %v978 = vld [vmem:[%s5 + $0x1c8] sm:$0xf]
  %v979 = vld [vmem:[%s5 + $0x1cc] sm:$0xff]
  %v980 = vld [vmem:[%s5 + $0x1d4] sm:$0xff]
  %v981 = vld [vmem:[%s5 + $0x1dc] sm:$0xf]
  %v982 = vld [vmem:[%s5 + $0x1e0] sm:$0xff]
  %v983 = vld [vmem:[%s5 + $0x1e8] sm:$0xff]
  %v984 = vld [vmem:[%s5 + $0x1f0] sm:$0xf]
  %v985 = vld [vmem:[%s5 + $0x1f4] sm:$0xff]
  %v986 = vld [vmem:[%s5 + $0x1fc] sm:$0xff]
  %v987 = vld [vmem:[%s5 + $0x204] sm:$0xf]
  %v988 = vld [vmem:[%s5 + $0x208] sm:$0xff]
  %v989 = vld [vmem:[%s5 + $0x210] sm:$0xff]
  %v990 = vld [vmem:[%s5 + $0x218] sm:$0xf]
  %v991 = vld [vmem:[%s5 + $0x21c] sm:$0xff]
  %v992 = vld [vmem:[%s5 + $0x224] sm:$0xff]
  %v993 = vld [vmem:[%s5 + $0x22c] sm:$0xf]
  %v994 = vld [vmem:[%s5 + $0x230] sm:$0xff]
  %v995 = vld [vmem:[%s5 + $0x238] sm:$0xff]
  %v996 = vld [vmem:[%s5 + $0x240] sm:$0xf]
  %v997 = vld [vmem:[%s5 + $0x244] sm:$0xff]
  %v998 = vld [vmem:[%s5 + $0x24c] sm:$0xff]
  %v999 = vld [vmem:[%s5 + $0x254] sm:$0xf]
  %v1000 = vld [vmem:[%s5 + $0x258] sm:$0xff]
  %v1001 = vld [vmem:[%s5 + $0x260] sm:$0xff]
  %v1002 = vld [vmem:[%s5 + $0x268] sm:$0xf]
  %v1003 = vld [vmem:[%s5 + $0x26c] sm:$0xff]
  %v1004 = vld [vmem:[%s5 + $0x274] sm:$0xff]
  %v1005 = vld [vmem:[%s5 + $0x27c] sm:$0xf]
  %v1006 = vld [vmem:[%s5 + $0x280] sm:$0xff]
  %v1007 = vld [vmem:[%s5 + $0x288] sm:$0xff]
  %v1008 = vld [vmem:[%s5 + $0x290] sm:$0xf]
  %v1009 = vld [vmem:[%s5 + $0x294] sm:$0xff]
  %v1010 = vld [vmem:[%s5 + $0x29c] sm:$0xff]
  %v1011 = vld [vmem:[%s5 + $0x2a4] sm:$0xf]
  %v1012 = vld [vmem:[%s5 + $0x2a8] sm:$0xff]
  %v1013 = vld [vmem:[%s5 + $0x2b0] sm:$0xff]
  %v1014 = vld [vmem:[%s5 + $0x2b8] sm:$0xf]
  %v1015 = vld [vmem:[%s5 + $0x2bc] sm:$0xff]
  %v1016 = vld [vmem:[%s5 + $0x2c4] sm:$0xff]
  %v1017 = vld [vmem:[%s5 + $0x2cc] sm:$0xf]
  %v1018 = vld [vmem:[%s5 + $0x2d0] sm:$0xff]
  %v1019 = vld [vmem:[%s5 + $0x2d8] sm:$0xff]
  %v1020 = vld [vmem:[%s5 + $0x2e0] sm:$0xf]
  %v1021 = vld [vmem:[%s5 + $0x2e4] sm:$0xff]
  %v1022 = vld [vmem:[%s5 + $0x2ec] sm:$0xff]
  %v1023 = vld [vmem:[%s5 + $0x2f4] sm:$0xf]
  %v1024 = vld [vmem:[%s5 + $0x2f8] sm:$0xff]
  %v1025 = vld [vmem:[%s5 + $0x300] sm:$0xff]
  %v1026 = vld [vmem:[%s5 + $0x308] sm:$0xf]
  %v1027 = vld [vmem:[%s5 + $0x30c] sm:$0xff]
  %v1028 = vld [vmem:[%s5 + $0x314] sm:$0xff]
  %v1029 = vld [vmem:[%s5 + $0x31c] sm:$0xf]
  %v1030 = vld [vmem:[%s5 + $0x320] sm:$0xff]
  %v1031 = vld [vmem:[%s5 + $0x328] sm:$0xff]
  %v1032 = vld [vmem:[%s5 + $0x330] sm:$0xf]
  %v1033 = vld [vmem:[%s5 + $0x334] sm:$0xff]
  %v1034 = vld [vmem:[%s5 + $0x33c] sm:$0xff]
  %v1035 = vld [vmem:[%s5 + $0x344] sm:$0xf]
  %v1036 = vld [vmem:[%s5 + $0x348] sm:$0xff]
  %v1037 = vld [vmem:[%s5 + $0x350] sm:$0xff]
  %v1038 = vld [vmem:[%s5 + $0x358] sm:$0xf]
  %v1039 = vld [vmem:[%s5 + $0x35c] sm:$0xff]
  %v1040 = vld [vmem:[%s5 + $0x364] sm:$0xff]
  %v1041 = vld [vmem:[%s5 + $0x36c] sm:$0xf]
  %v1042 = vld [vmem:[%s5 + $0x370] sm:$0xff]
  %v1043 = vld [vmem:[%s5 + $0x378] sm:$0xff]
  %v1044 = vld [vmem:[%s5 + $0x380] sm:$0xf]
  %v1045 = vld [vmem:[%s5 + $0x384] sm:$0xff]
  %v1046 = vld [vmem:[%s5 + $0x38c] sm:$0xff]
  %v1047 = vld [vmem:[%s5 + $0x394] sm:$0xf]
  %v1048 = vld [vmem:[%s5 + $0x398] sm:$0xff]
  %v1049 = vld [vmem:[%s5 + $0x3a0] sm:$0xff]
  %v1050 = vld [vmem:[%s5 + $0x3a8] sm:$0xf]
  %v1051 = vld [vmem:[%s5 + $0x3ac] sm:$0xff]
  %v1052 = vld [vmem:[%s5 + $0x3b4] sm:$0xff]
  %v1053 = vld [vmem:[%s5 + $0x3bc] sm:$0xf]
  %v1054 = vld [vmem:[%s5 + $0x3c0] sm:$0xff]
  %v1055 = vld [vmem:[%s5 + $0x3c8] sm:$0xff]
  %v1056 = vld [vmem:[%s5 + $0x3d0] sm:$0xf]
  %v1057 = vld [vmem:[%s5 + $0x3d4] sm:$0xff]
  %v1058 = vld [vmem:[%s5 + $0x3dc] sm:$0xff]
  %v1059 = vld [vmem:[%s5 + $0x3e4] sm:$0xf]
  %v1060 = vld [vmem:[%s5 + $0x3e8] sm:$0xff]
  %v1061 = vld [vmem:[%s5 + $0x3f0] sm:$0xff]
  %v1062 = vld [vmem:[%s5 + $0x3f8] sm:$0xf]
  %v1063 = vld [vmem:[%s5 + $0x3fc] sm:$0xff]
  %v1064 = vld [vmem:[%s5 + $0x404] sm:$0xff]
  %v1065 = vld [vmem:[%s5 + $0x40c] sm:$0xf]
  %v1066 = vld [vmem:[%s5 + $0x410] sm:$0xff]
  %v1067 = vld [vmem:[%s5 + $0x418] sm:$0xff]
  %v1068 = vld [vmem:[%s5 + $0x420] sm:$0xf]
  %v1069 = vld [vmem:[%s5 + $0x424] sm:$0xff]
  %v1070 = vld [vmem:[%s5 + $0x42c] sm:$0xff]
  %v1071 = vld [vmem:[%s5 + $0x434] sm:$0xf]
  %v1072 = vld [vmem:[%s5 + $0x438] sm:$0xff]
  %v1073 = vld [vmem:[%s5 + $0x440] sm:$0xff]
  %v1074 = vld [vmem:[%s5 + $0x448] sm:$0xf]
  %v1075 = vld [vmem:[%s5 + $0x44c] sm:$0xff]
  %v1076 = vld [vmem:[%s5 + $0x454] sm:$0xff]
  %v1077 = vld [vmem:[%s5 + $0x45c] sm:$0xf]
  %v1078 = vld [vmem:[%s5 + $0x460] sm:$0xff]
  %v1079 = vld [vmem:[%s5 + $0x468] sm:$0xff]
  %v1080 = vld [vmem:[%s5 + $0x470] sm:$0xf]
  %v1081 = vld [vmem:[%s5 + $0x474] sm:$0xff]
  %v1082 = vld [vmem:[%s5 + $0x47c] sm:$0xff]
  %v1083 = vld [vmem:[%s5 + $0x484] sm:$0xf]
  %v1084 = vld [vmem:[%s5 + $0x488] sm:$0xff]
  %v1085 = vld [vmem:[%s5 + $0x490] sm:$0xff]
  %v1086 = vld [vmem:[%s5 + $0x498] sm:$0xf]
  %v1087 = vld [vmem:[%s5 + $0x49c] sm:$0xff]
  %v1088 = vld [vmem:[%s5 + $0x4a4] sm:$0xff]
  %v1089 = vld [vmem:[%s5 + $0x4ac] sm:$0xf]
  %v1090 = vld [vmem:[%s5 + $0x4b0] sm:$0xff]
  %v1091 = vld [vmem:[%s5 + $0x4b8] sm:$0xff]
  %v1092 = vld [vmem:[%s5 + $0x4c0] sm:$0xf]
  %v1093 = vld [vmem:[%s5 + $0x4c4] sm:$0xff]
  %v1094 = vld [vmem:[%s5 + $0x4cc] sm:$0xff]
  %v1095 = vld [vmem:[%s5 + $0x4d4] sm:$0xf]
  %v1096 = vld [vmem:[%s5 + $0x4d8] sm:$0xff]
  %v1097 = vld [vmem:[%s5 + $0x4e0] sm:$0xff]
  %v1098 = vld [vmem:[%s5 + $0x4e8] sm:$0xf]
  %v1099 = vld [vmem:[%s5 + $0x4ec] sm:$0xff]
  %v1100 = vld [vmem:[%s5 + $0x4f4] sm:$0xff]
  %v1101 = vld [vmem:[%s5 + $0x4fc] sm:$0xf]
  %v1102 = vld [vmem:[%s5 + $0x500] sm:$0xff]
  %v1103 = vld [vmem:[%s5 + $0x508] sm:$0xff]
  %v1104 = vld [vmem:[%s5 + $0x510] sm:$0xf]
  %v1105 = vld [vmem:[%s5 + $0x514] sm:$0xff]
  %v1106 = vld [vmem:[%s5 + $0x51c] sm:$0xff]
  %v1107 = vld [vmem:[%s5 + $0x524] sm:$0xf]
  %v1108 = vld [vmem:[%s5 + $0x528] sm:$0xff]
  %v1109 = vld [vmem:[%s5 + $0x530] sm:$0xff]
  %v1110 = vld [vmem:[%s5 + $0x538] sm:$0xf]
  %v1111 = vld [vmem:[%s5 + $0x53c] sm:$0xff]
  %v1112 = vld [vmem:[%s5 + $0x544] sm:$0xff]
  %v1113 = vld [vmem:[%s5 + $0x54c] sm:$0xf]
  %v1114 = vld [vmem:[%s5 + $0x550] sm:$0xff]
  %v1115 = vld [vmem:[%s5 + $0x558] sm:$0xff]
  %v1116 = vld [vmem:[%s5 + $0x560] sm:$0xf]
  %v1117 = vld [vmem:[%s5 + $0x564] sm:$0xff]
  %v1118 = vld [vmem:[%s5 + $0x56c] sm:$0xff]
  %v1119 = vld [vmem:[%s5 + $0x574] sm:$0xf]
  %v1120 = vld [vmem:[%s5 + $0x578] sm:$0xff]
  %v1121 = vld [vmem:[%s5 + $0x580] sm:$0xff]
  %v1122 = vld [vmem:[%s5 + $0x588] sm:$0xf]
  %v1123 = vld [vmem:[%s5 + $0x58c] sm:$0xff]
  %v1124 = vld [vmem:[%s5 + $0x594] sm:$0xff]
  %v1125 = vld [vmem:[%s5 + $0x59c] sm:$0xf]
  %v1126 = vld [vmem:[%s5 + $0x5a0] sm:$0xff]
  %v1127 = vld [vmem:[%s5 + $0x5a8] sm:$0xff]
  %v1128 = vld [vmem:[%s5 + $0x5b0] sm:$0xf]
  %v1129 = vld [vmem:[%s5 + $0x5b4] sm:$0xff]
  %v1130 = vld [vmem:[%s5 + $0x5bc] sm:$0xff]
  %v1131 = vld [vmem:[%s5 + $0x5c4] sm:$0xf]
  %v1132 = vld [vmem:[%s5 + $0x5c8] sm:$0xff]
  %v1133 = vld [vmem:[%s5 + $0x5d0] sm:$0xff]
  %v1134 = vld [vmem:[%s5 + $0x5d8] sm:$0xf]
  %v1135 = vld [vmem:[%s5 + $0x5dc] sm:$0xff]
  %v1136 = vld [vmem:[%s5 + $0x5e4] sm:$0xff]
  %v1137 = vld [vmem:[%s5 + $0x5ec] sm:$0xf]
  %v1138 = vld [vmem:[%s5 + $0x5f0] sm:$0xff]
  %v1139 = vld [vmem:[%s5 + $0x5f8] sm:$0xff]
  %v1140 = vld [vmem:[%s5 + $0x600] sm:$0xf]
  %v1141 = vld [vmem:[%s5 + $0x604] sm:$0xff]
  %v1142 = vld [vmem:[%s5 + $0x60c] sm:$0xff]
  %v1143 = vld [vmem:[%s5 + $0x614] sm:$0xf]
  %v1144 = vld [vmem:[%s5 + $0x618] sm:$0xff]
  %v1145 = vld [vmem:[%s5 + $0x620] sm:$0xff]
  %v1146 = vld [vmem:[%s5 + $0x628] sm:$0xf]
  %v1147 = vld [vmem:[%s5 + $0x62c] sm:$0xff]
  %v1148 = vld [vmem:[%s5 + $0x634] sm:$0xff]
  %v1149 = vld [vmem:[%s5 + $0x63c] sm:$0xf]
  %v1150 = vld [vmem:[%s5 + $0x640] sm:$0xff]
  %v1151 = vld [vmem:[%s5 + $0x648] sm:$0xff]
  %v1152 = vld [vmem:[%s5 + $0x650] sm:$0xf]
  %v1153 = vld [vmem:[%s5 + $0x654] sm:$0xff]
  %v1154 = vld [vmem:[%s5 + $0x65c] sm:$0xff]
  %v1155 = vld [vmem:[%s5 + $0x664] sm:$0xf]
  %v1156 = vld [vmem:[%s5 + $0x668] sm:$0xff]
  %v1157 = vld [vmem:[%s5 + $0x670] sm:$0xff]
  %v1158 = vld [vmem:[%s5 + $0x678] sm:$0xf]
  %v1159 = vld [vmem:[%s5 + $0x67c] sm:$0xff]
  %v1160 = vld [vmem:[%s5 + $0x684] sm:$0xff]
  %v1161 = vld [vmem:[%s5 + $0x68c] sm:$0xf]
  %v1162 = vld [vmem:[%s5 + $0x690] sm:$0xff]
  %v1163 = vld [vmem:[%s5 + $0x698] sm:$0xff]
  %v1164 = vld [vmem:[%s5 + $0x6a0] sm:$0xf]
  %v1165 = vld [vmem:[%s5 + $0x6a4] sm:$0xff]
  %v1166 = vld [vmem:[%s5 + $0x6ac] sm:$0xff]
  %v1167 = vld [vmem:[%s5 + $0x6b4] sm:$0xf]
  %v1168 = vld [vmem:[%s5 + $0x6b8] sm:$0xff]
  %v1169 = vld [vmem:[%s5 + $0x6c0] sm:$0xff]
  %v1170 = vld [vmem:[%s5 + $0x6c8] sm:$0xf]
  %v1171 = vld [vmem:[%s5 + $0x6cc] sm:$0xff]
  %v1172 = vld [vmem:[%s5 + $0x6d4] sm:$0xff]
  %v1173 = vld [vmem:[%s5 + $0x6dc] sm:$0xf]
  %v1174 = vld [vmem:[%s5 + $0x6e0] sm:$0xff]
  %v1175 = vld [vmem:[%s5 + $0x6e8] sm:$0xff]
  %v1176 = vld [vmem:[%s5 + $0x6f0] sm:$0xf]
  %v1177 = vld [vmem:[%s5 + $0x6f4] sm:$0xff]
  %v1178 = vld [vmem:[%s5 + $0x6fc] sm:$0xff]
  %v1179 = vld [vmem:[%s5 + $0x704] sm:$0xf]
  %v1180 = vld [vmem:[%s5 + $0x708] sm:$0xff]
  %v1181 = vld [vmem:[%s5 + $0x710] sm:$0xff]
  %v1182 = vld [vmem:[%s5 + $0x718] sm:$0xf]
  %v1183 = vld [vmem:[%s5 + $0x71c] sm:$0xff]
  %v1184 = vld [vmem:[%s5 + $0x724] sm:$0xff]
  %v1185 = vld [vmem:[%s5 + $0x72c] sm:$0xf]
  %v1186 = vld [vmem:[%s5 + $0x730] sm:$0xff]
  %v1187 = vld [vmem:[%s5 + $0x738] sm:$0xff]
  %v1188 = vld [vmem:[%s5 + $0x740] sm:$0xf]
  %v1189 = vld [vmem:[%s5 + $0x744] sm:$0xff]
  %v1190 = vld [vmem:[%s5 + $0x74c] sm:$0xff]
  %v1191 = vld [vmem:[%s5 + $0x754] sm:$0xf]
  %v1192 = vld [vmem:[%s5 + $0x758] sm:$0xff]
  %v1193 = vld [vmem:[%s5 + $0x760] sm:$0xff]
  %v1194 = vld [vmem:[%s5 + $0x768] sm:$0xf]
  %v1195 = vld [vmem:[%s5 + $0x76c] sm:$0xff]
  %v1196 = vld [vmem:[%s5 + $0x774] sm:$0xff]
  %v1197 = vld [vmem:[%s5 + $0x77c] sm:$0xf]
  %v1198 = vld [vmem:[%s5 + $0x780] sm:$0xff]
  %v1199 = vld [vmem:[%s5 + $0x788] sm:$0xff]
  %v1200 = vld [vmem:[%s5 + $0x790] sm:$0xf]
  %v1201 = vld [vmem:[%s5 + $0x794] sm:$0xff]
  %v1202 = vld [vmem:[%s5 + $0x79c] sm:$0xff]
  %v1203 = vld [vmem:[%s5 + $0x7a4] sm:$0xf]
  %v1204 = vld [vmem:[%s5 + $0x7a8] sm:$0xff]
  %v1205 = vld [vmem:[%s5 + $0x7b0] sm:$0xff]
  %v1206 = vld [vmem:[%s5 + $0x7b8] sm:$0xf]
  %v1207 = vld [vmem:[%s5 + $0x7bc] sm:$0xff]
  %v1208 = vld [vmem:[%s5 + $0x7c4] sm:$0xff]
  %v1209 = vld [vmem:[%s5 + $0x7cc] sm:$0xf]
  %v1210 = vld [vmem:[%s5 + $0x7d0] sm:$0xff]
  %v1211 = vld [vmem:[%s5 + $0x7d8] sm:$0xff]
  %v1212 = vld [vmem:[%s5 + $0x7e0] sm:$0xf]
  %v1213 = vld [vmem:[%s5 + $0x7e4] sm:$0xff]
  %v1214 = vld [vmem:[%s5 + $0x7ec] sm:$0xff]
  %v1215 = vld [vmem:[%s5 + $0x7f4] sm:$0xf]
  %v1216 = vld [vmem:[%s5 + $0x7f8] sm:$0xff]
  %v1217 = vld [vmem:[%s5 + $0x800] sm:$0xff]
  %v1218 = vld [vmem:[%s5 + $0x808] sm:$0xf]
  %v1219 = vld [vmem:[%s5 + $0x80c] sm:$0xff]
  %v1220 = vld [vmem:[%s5 + $0x814] sm:$0xff]
  %v1221 = vld [vmem:[%s5 + $0x81c] sm:$0xf]
  %v1222 = vld [vmem:[%s5 + $0x820] sm:$0xff]
  %v1223 = vld [vmem:[%s5 + $0x828] sm:$0xff]
  %v1224 = vld [vmem:[%s5 + $0x830] sm:$0xf]
  %v1225 = vld [vmem:[%s5 + $0x834] sm:$0xff]
  %v1226 = vld [vmem:[%s5 + $0x83c] sm:$0xff]
  %v1227 = vld [vmem:[%s5 + $0x844] sm:$0xf]
  %v1228 = vld [vmem:[%s5 + $0x848] sm:$0xff]
  %v1229 = vld [vmem:[%s5 + $0x850] sm:$0xff]
  %v1230 = vld [vmem:[%s5 + $0x858] sm:$0xf]
  %v1231 = vld [vmem:[%s5 + $0x85c] sm:$0xff]
  %v1232 = vld [vmem:[%s5 + $0x864] sm:$0xff]
  %v1233 = vld [vmem:[%s5 + $0x86c] sm:$0xf]
  %v1234 = vld [vmem:[%s5 + $0x870] sm:$0xff]
  %v1235 = vld [vmem:[%s5 + $0x878] sm:$0xff]
  %v1236 = vld [vmem:[%s5 + $0x880] sm:$0xf]
  %v1237 = vld [vmem:[%s5 + $0x884] sm:$0xff]
  %v1238 = vld [vmem:[%s5 + $0x88c] sm:$0xff]
  %v1239 = vld [vmem:[%s5 + $0x894] sm:$0xf]
  %v1240 = vld [vmem:[%s5 + $0x898] sm:$0xff]
  %v1241 = vld [vmem:[%s5 + $0x8a0] sm:$0xff]
  %v1242 = vld [vmem:[%s5 + $0x8a8] sm:$0xf]
  %v1243 = vld [vmem:[%s5 + $0x8ac] sm:$0xff]
  %v1244 = vld [vmem:[%s5 + $0x8b4] sm:$0xff]
  %v1245 = vld [vmem:[%s5 + $0x8bc] sm:$0xf]
  %v1246 = vld [vmem:[%s5 + $0x8c0] sm:$0xff]
  %v1247 = vld [vmem:[%s5 + $0x8c8] sm:$0xff]
  %v1248 = vld [vmem:[%s5 + $0x8d0] sm:$0xf]
  %v1249 = vld [vmem:[%s5 + $0x8d4] sm:$0xff]
  %v1250 = vld [vmem:[%s5 + $0x8dc] sm:$0xff]
  %v1251 = vld [vmem:[%s5 + $0x8e4] sm:$0xf]
  %v1252 = vld [vmem:[%s5 + $0x8e8] sm:$0xff]
  %v1253 = vld [vmem:[%s5 + $0x8f0] sm:$0xff]
  %v1254 = vld [vmem:[%s5 + $0x8f8] sm:$0xf]
  %v1255 = vld [vmem:[%s5 + $0x8fc] sm:$0xff]
  %v1256 = vld [vmem:[%s5 + $0x904] sm:$0xff]
  %v1257 = vld [vmem:[%s5 + $0x90c] sm:$0xf]
  %v1258 = vld [vmem:[%s5 + $0x910] sm:$0xff]
  %v1259 = vld [vmem:[%s5 + $0x918] sm:$0xff]
  %v1260 = vld [vmem:[%s5 + $0x920] sm:$0xf]
  %v1261 = vld [vmem:[%s5 + $0x924] sm:$0xff]
  %v1262 = vld [vmem:[%s5 + $0x92c] sm:$0xff]
  %v1263 = vld [vmem:[%s5 + $0x934] sm:$0xf]
  %v1264 = vld [vmem:[%s5 + $0x938] sm:$0xff]
  %v1265 = vld [vmem:[%s5 + $0x940] sm:$0xff]
  %v1266 = vld [vmem:[%s5 + $0x948] sm:$0xf]
  %v1267 = vld [vmem:[%s5 + $0x94c] sm:$0xff]
  %v1268 = vld [vmem:[%s5 + $0x954] sm:$0xff]
  %v1269 = vld [vmem:[%s5 + $0x95c] sm:$0xf]
  %v1270 = vld [vmem:[%s5 + $0x960] sm:$0xff]
  %v1271 = vld [vmem:[%s5 + $0x968] sm:$0xff]
  %v1272 = vld [vmem:[%s5 + $0x970] sm:$0xf]
  %v1273 = vld [vmem:[%s5 + $0x974] sm:$0xff]
  %v1274 = vld [vmem:[%s5 + $0x97c] sm:$0xff]
  %v1275 = vld [vmem:[%s5 + $0x984] sm:$0xf]
  %v1276 = vld [vmem:[%s5 + $0x988] sm:$0xff]
  %v1277 = vld [vmem:[%s5 + $0x990] sm:$0xff]
  %v1278 = vld [vmem:[%s5 + $0x998] sm:$0xf]
  %v1279 = vld [vmem:[%s5 + $0x99c] sm:$0xff]
  %v1280 = vld [vmem:[%s5 + $0x9a4] sm:$0xff]
  %v1281 = vld [vmem:[%s5 + $0x9ac] sm:$0xf]
  %v1282 = vld [vmem:[%s5 + $0x9b0] sm:$0xff]
  %v1283 = vld [vmem:[%s5 + $0x9b8] sm:$0xff]
  %v1284 = vld [vmem:[%s5 + $0x9c0] sm:$0xf]
  %v1285 = vld [vmem:[%s5 + $0x9c4] sm:$0xff]
  %v1286 = vld [vmem:[%s5 + $0x9cc] sm:$0xff]
  %v1287 = vld [vmem:[%s5 + $0x9d4] sm:$0xf]
  %v1288 = vld [vmem:[%s5 + $0x9d8] sm:$0xff]
  %v1289 = vld [vmem:[%s5 + $0x9e0] sm:$0xff]
  %v1290 = vld [vmem:[%s5 + $0x9e8] sm:$0xf]
  %v1291 = vld [vmem:[%s5 + $0x9ec] sm:$0xff]
  %v1292 = vld [vmem:[%s5 + $0x9f4] sm:$0xff]
  %v1293 = vld [vmem:[%s5 + $0x9fc] sm:$0xf]
  %v1294 = vld [vmem:[%s6] sm:$0x1f]
  %v1296 = vlaneseq
  %v1297 = vshrl.u32 %v1296, 7
  %v1298 = vsub.s32 0, %v1297
  %v1299 = vrot.slane %v1294, %v1298
  %v1300 = vlaneseq
  %v1301 = vshrl.u32 %v1300, 7
  %v1302 = vsub.s32 1, %v1301
  %v1303 = vrot.slane %v1294, %v1302
  %v1304 = vlaneseq
  %v1305 = vshrl.u32 %v1304, 7
  %v1306 = vsub.s32 2, %v1305
  %v1307 = vrot.slane %v1294, %v1306
  %v1308 = vlaneseq
  %v1309 = vshrl.u32 %v1308, 7
  %v1310 = vsub.s32 3, %v1309
  %v1311 = vrot.slane %v1294, %v1310
  %v1312 = vlaneseq
  %v1313 = vshrl.u32 %v1312, 7
  %v1314 = vsub.s32 4, %v1313
  %v1315 = vrot.slane %v1294, %v1314
  %v1705 = vunpack.c.l.b16 %v910
  %v1706 = vunpack.c.h.b16 %v910
  %v1707 = vunpack.c.l.b16 %v911
  %v1708 = vunpack.c.h.b16 %v911
  %v1709 = vunpack.c.l.b16 %v912
  %v1710 = vunpack.c.l.b16 %v913
  %v1711 = vunpack.c.h.b16 %v913
  %v1712 = vunpack.c.l.b16 %v914
  %v1713 = vunpack.c.h.b16 %v914
  %v1714 = vunpack.c.l.b16 %v915
  %v1715 = vunpack.c.l.b16 %v916
  %v1716 = vunpack.c.h.b16 %v916
  %v1717 = vunpack.c.l.b16 %v917
  %v1718 = vunpack.c.h.b16 %v917
  %v1719 = vunpack.c.l.b16 %v918
  %v1720 = vunpack.c.l.b16 %v919
  %v1721 = vunpack.c.h.b16 %v919
  %v1722 = vunpack.c.l.b16 %v920
  %v1723 = vunpack.c.h.b16 %v920
  %v1724 = vunpack.c.l.b16 %v921
  %v1725 = vunpack.c.l.b16 %v922
  %v1726 = vunpack.c.h.b16 %v922
  %v1727 = vunpack.c.l.b16 %v923
  %v1728 = vunpack.c.h.b16 %v923
  %v1729 = vunpack.c.l.b16 %v924
  %v1730 = vunpack.c.l.b16 %v925
  %v1731 = vunpack.c.h.b16 %v925
  %v1732 = vunpack.c.l.b16 %v926
  %v1733 = vunpack.c.h.b16 %v926
  %v1734 = vunpack.c.l.b16 %v927
  %v1735 = vunpack.c.l.b16 %v928
  %v1736 = vunpack.c.h.b16 %v928
  %v1737 = vunpack.c.l.b16 %v929
  %v1738 = vunpack.c.h.b16 %v929
  %v1739 = vunpack.c.l.b16 %v930
  %v1740 = vunpack.c.l.b16 %v931
  %v1741 = vunpack.c.h.b16 %v931
  %v1742 = vunpack.c.l.b16 %v932
  %v1743 = vunpack.c.h.b16 %v932
  %v1744 = vunpack.c.l.b16 %v933
  %v1745 = vunpack.c.l.b16 %v934
  %v1746 = vunpack.c.h.b16 %v934
  %v1747 = vunpack.c.l.b16 %v935
  %v1748 = vunpack.c.h.b16 %v935
  %v1749 = vunpack.c.l.b16 %v936
  %v1750 = vunpack.c.l.b16 %v937
  %v1751 = vunpack.c.h.b16 %v937
  %v1752 = vunpack.c.l.b16 %v938
  %v1753 = vunpack.c.h.b16 %v938
  %v1754 = vunpack.c.l.b16 %v939
  %v1755 = vunpack.c.l.b16 %v940
  %v1756 = vunpack.c.h.b16 %v940
  %v1757 = vunpack.c.l.b16 %v941
  %v1758 = vunpack.c.h.b16 %v941
  %v1759 = vunpack.c.l.b16 %v942
  %v1760 = vunpack.c.l.b16 %v943
  %v1761 = vunpack.c.h.b16 %v943
  %v1762 = vunpack.c.l.b16 %v944
  %v1763 = vunpack.c.h.b16 %v944
  %v1764 = vunpack.c.l.b16 %v945
  %v1765 = vunpack.c.l.b16 %v946
  %v1766 = vunpack.c.h.b16 %v946
  %v1767 = vunpack.c.l.b16 %v947
  %v1768 = vunpack.c.h.b16 %v947
  %v1769 = vunpack.c.l.b16 %v948
  %v1770 = vunpack.c.l.b16 %v949
  %v1771 = vunpack.c.h.b16 %v949
  %v1772 = vunpack.c.l.b16 %v950
  %v1773 = vunpack.c.h.b16 %v950
  %v1774 = vunpack.c.l.b16 %v951
  %v1775 = vunpack.c.l.b16 %v952
  %v1776 = vunpack.c.h.b16 %v952
  %v1777 = vunpack.c.l.b16 %v953
  %v1778 = vunpack.c.h.b16 %v953
  %v1779 = vunpack.c.l.b16 %v954
  %v1780 = vunpack.c.l.b16 %v955
  %v1781 = vunpack.c.h.b16 %v955
  %v1782 = vunpack.c.l.b16 %v956
  %v1783 = vunpack.c.h.b16 %v956
  %v1784 = vunpack.c.l.b16 %v957
  %v1785 = vunpack.c.l.b16 %v958
  %v1786 = vunpack.c.h.b16 %v958
  %v1787 = vunpack.c.l.b16 %v959
  %v1788 = vunpack.c.h.b16 %v959
  %v1789 = vunpack.c.l.b16 %v960
  %v1790 = vunpack.c.l.b16 %v961
  %v1791 = vunpack.c.h.b16 %v961
  %v1792 = vunpack.c.l.b16 %v962
  %v1793 = vunpack.c.h.b16 %v962
  %v1794 = vunpack.c.l.b16 %v963
  %v1795 = vunpack.c.l.b16 %v964
  %v1796 = vunpack.c.h.b16 %v964
  %v1797 = vunpack.c.l.b16 %v965
  %v1798 = vunpack.c.h.b16 %v965
  %v1799 = vunpack.c.l.b16 %v966
  %v1800 = vunpack.c.l.b16 %v967
  %v1801 = vunpack.c.h.b16 %v967
  %v1802 = vunpack.c.l.b16 %v968
  %v1803 = vunpack.c.h.b16 %v968
  %v1804 = vunpack.c.l.b16 %v969
  %v1805 = vunpack.c.l.b16 %v970
  %v1806 = vunpack.c.h.b16 %v970
  %v1807 = vunpack.c.l.b16 %v971
  %v1808 = vunpack.c.h.b16 %v971
  %v1809 = vunpack.c.l.b16 %v972
  %v1810 = vunpack.c.l.b16 %v973
  %v1811 = vunpack.c.h.b16 %v973
  %v1812 = vunpack.c.l.b16 %v974
  %v1813 = vunpack.c.h.b16 %v974
  %v1814 = vunpack.c.l.b16 %v975
  %v1815 = vunpack.c.l.b16 %v976
  %v1816 = vunpack.c.h.b16 %v976
  %v1817 = vunpack.c.l.b16 %v977
  %v1818 = vunpack.c.h.b16 %v977
  %v1819 = vunpack.c.l.b16 %v978
  %v1820 = vunpack.c.l.b16 %v979
  %v1821 = vunpack.c.h.b16 %v979
  %v1822 = vunpack.c.l.b16 %v980
  %v1823 = vunpack.c.h.b16 %v980
  %v1824 = vunpack.c.l.b16 %v981
  %v1825 = vunpack.c.l.b16 %v982
  %v1826 = vunpack.c.h.b16 %v982
  %v1827 = vunpack.c.l.b16 %v983
  %v1828 = vunpack.c.h.b16 %v983
  %v1829 = vunpack.c.l.b16 %v984
  %v1830 = vunpack.c.l.b16 %v985
  %v1831 = vunpack.c.h.b16 %v985
  %v1832 = vunpack.c.l.b16 %v986
  %v1833 = vunpack.c.h.b16 %v986
  %v1834 = vunpack.c.l.b16 %v987
  %v1835 = vunpack.c.l.b16 %v988
  %v1836 = vunpack.c.h.b16 %v988
  %v1837 = vunpack.c.l.b16 %v989
  %v1838 = vunpack.c.h.b16 %v989
  %v1839 = vunpack.c.l.b16 %v990
  %v1840 = vunpack.c.l.b16 %v991
  %v1841 = vunpack.c.h.b16 %v991
  %v1842 = vunpack.c.l.b16 %v992
  %v1843 = vunpack.c.h.b16 %v992
  %v1844 = vunpack.c.l.b16 %v993
  %v1845 = vunpack.c.l.b16 %v994
  %v1846 = vunpack.c.h.b16 %v994
  %v1847 = vunpack.c.l.b16 %v995
  %v1848 = vunpack.c.h.b16 %v995
  %v1849 = vunpack.c.l.b16 %v996
  %v1850 = vunpack.c.l.b16 %v997
  %v1851 = vunpack.c.h.b16 %v997
  %v1852 = vunpack.c.l.b16 %v998
  %v1853 = vunpack.c.h.b16 %v998
  %v1854 = vunpack.c.l.b16 %v999
  %v1855 = vunpack.c.l.b16 %v1000
  %v1856 = vunpack.c.h.b16 %v1000
  %v1857 = vunpack.c.l.b16 %v1001
  %v1858 = vunpack.c.h.b16 %v1001
  %v1859 = vunpack.c.l.b16 %v1002
  %v1860 = vunpack.c.l.b16 %v1003
  %v1861 = vunpack.c.h.b16 %v1003
  %v1862 = vunpack.c.l.b16 %v1004
  %v1863 = vunpack.c.h.b16 %v1004
  %v1864 = vunpack.c.l.b16 %v1005
  %v1865 = vunpack.c.l.b16 %v1006
  %v1866 = vunpack.c.h.b16 %v1006
  %v1867 = vunpack.c.l.b16 %v1007
  %v1868 = vunpack.c.h.b16 %v1007
  %v1869 = vunpack.c.l.b16 %v1008
  %v1870 = vunpack.c.l.b16 %v1009
  %v1871 = vunpack.c.h.b16 %v1009
  %v1872 = vunpack.c.l.b16 %v1010
  %v1873 = vunpack.c.h.b16 %v1010
  %v1874 = vunpack.c.l.b16 %v1011
  %v1875 = vunpack.c.l.b16 %v1012
  %v1876 = vunpack.c.h.b16 %v1012
  %v1877 = vunpack.c.l.b16 %v1013
  %v1878 = vunpack.c.h.b16 %v1013
  %v1879 = vunpack.c.l.b16 %v1014
  %v1880 = vunpack.c.l.b16 %v1015
  %v1881 = vunpack.c.h.b16 %v1015
  %v1882 = vunpack.c.l.b16 %v1016
  %v1883 = vunpack.c.h.b16 %v1016
  %v1884 = vunpack.c.l.b16 %v1017
  %v1885 = vunpack.c.l.b16 %v1018
  %v1886 = vunpack.c.h.b16 %v1018
  %v1887 = vunpack.c.l.b16 %v1019
  %v1888 = vunpack.c.h.b16 %v1019
  %v1889 = vunpack.c.l.b16 %v1020
  %v1890 = vunpack.c.l.b16 %v1021
  %v1891 = vunpack.c.h.b16 %v1021
  %v1892 = vunpack.c.l.b16 %v1022
  %v1893 = vunpack.c.h.b16 %v1022
  %v1894 = vunpack.c.l.b16 %v1023
  %v1895 = vunpack.c.l.b16 %v1024
  %v1896 = vunpack.c.h.b16 %v1024
  %v1897 = vunpack.c.l.b16 %v1025
  %v1898 = vunpack.c.h.b16 %v1025
  %v1899 = vunpack.c.l.b16 %v1026
  %v1900 = vunpack.c.l.b16 %v1027
  %v1901 = vunpack.c.h.b16 %v1027
  %v1902 = vunpack.c.l.b16 %v1028
  %v1903 = vunpack.c.h.b16 %v1028
  %v1904 = vunpack.c.l.b16 %v1029
  %v1905 = vunpack.c.l.b16 %v1030
  %v1906 = vunpack.c.h.b16 %v1030
  %v1907 = vunpack.c.l.b16 %v1031
  %v1908 = vunpack.c.h.b16 %v1031
  %v1909 = vunpack.c.l.b16 %v1032
  %v1910 = vunpack.c.l.b16 %v1033
  %v1911 = vunpack.c.h.b16 %v1033
  %v1912 = vunpack.c.l.b16 %v1034
  %v1913 = vunpack.c.h.b16 %v1034
  %v1914 = vunpack.c.l.b16 %v1035
  %v1915 = vunpack.c.l.b16 %v1036
  %v1916 = vunpack.c.h.b16 %v1036
  %v1917 = vunpack.c.l.b16 %v1037
  %v1918 = vunpack.c.h.b16 %v1037
  %v1919 = vunpack.c.l.b16 %v1038
  %v1920 = vunpack.c.l.b16 %v1039
  %v1921 = vunpack.c.h.b16 %v1039
  %v1922 = vunpack.c.l.b16 %v1040
  %v1923 = vunpack.c.h.b16 %v1040
  %v1924 = vunpack.c.l.b16 %v1041
  %v1925 = vunpack.c.l.b16 %v1042
  %v1926 = vunpack.c.h.b16 %v1042
  %v1927 = vunpack.c.l.b16 %v1043
  %v1928 = vunpack.c.h.b16 %v1043
  %v1929 = vunpack.c.l.b16 %v1044
  %v1930 = vunpack.c.l.b16 %v1045
  %v1931 = vunpack.c.h.b16 %v1045
  %v1932 = vunpack.c.l.b16 %v1046
  %v1933 = vunpack.c.h.b16 %v1046
  %v1934 = vunpack.c.l.b16 %v1047
  %v1935 = vunpack.c.l.b16 %v1048
  %v1936 = vunpack.c.h.b16 %v1048
  %v1937 = vunpack.c.l.b16 %v1049
  %v1938 = vunpack.c.h.b16 %v1049
  %v1939 = vunpack.c.l.b16 %v1050
  %v1940 = vunpack.c.l.b16 %v1051
  %v1941 = vunpack.c.h.b16 %v1051
  %v1942 = vunpack.c.l.b16 %v1052
  %v1943 = vunpack.c.h.b16 %v1052
  %v1944 = vunpack.c.l.b16 %v1053
  %v1945 = vunpack.c.l.b16 %v1054
  %v1946 = vunpack.c.h.b16 %v1054
  %v1947 = vunpack.c.l.b16 %v1055
  %v1948 = vunpack.c.h.b16 %v1055
  %v1949 = vunpack.c.l.b16 %v1056
  %v1950 = vunpack.c.l.b16 %v1057
  %v1951 = vunpack.c.h.b16 %v1057
  %v1952 = vunpack.c.l.b16 %v1058
  %v1953 = vunpack.c.h.b16 %v1058
  %v1954 = vunpack.c.l.b16 %v1059
  %v1955 = vunpack.c.l.b16 %v1060
  %v1956 = vunpack.c.h.b16 %v1060
  %v1957 = vunpack.c.l.b16 %v1061
  %v1958 = vunpack.c.h.b16 %v1061
  %v1959 = vunpack.c.l.b16 %v1062
  %v1960 = vunpack.c.l.b16 %v1063
  %v1961 = vunpack.c.h.b16 %v1063
  %v1962 = vunpack.c.l.b16 %v1064
  %v1963 = vunpack.c.h.b16 %v1064
  %v1964 = vunpack.c.l.b16 %v1065
  %v1965 = vunpack.c.l.b16 %v1066
  %v1966 = vunpack.c.h.b16 %v1066
  %v1967 = vunpack.c.l.b16 %v1067
  %v1968 = vunpack.c.h.b16 %v1067
  %v1969 = vunpack.c.l.b16 %v1068
  %v1970 = vunpack.c.l.b16 %v1069
  %v1971 = vunpack.c.h.b16 %v1069
  %v1972 = vunpack.c.l.b16 %v1070
  %v1973 = vunpack.c.h.b16 %v1070
  %v1974 = vunpack.c.l.b16 %v1071
  %v1975 = vunpack.c.l.b16 %v1072
  %v1976 = vunpack.c.h.b16 %v1072
  %v1977 = vunpack.c.l.b16 %v1073
  %v1978 = vunpack.c.h.b16 %v1073
  %v1979 = vunpack.c.l.b16 %v1074
  %v1980 = vunpack.c.l.b16 %v1075
  %v1981 = vunpack.c.h.b16 %v1075
  %v1982 = vunpack.c.l.b16 %v1076
  %v1983 = vunpack.c.h.b16 %v1076
  %v1984 = vunpack.c.l.b16 %v1077
  %v1985 = vunpack.c.l.b16 %v1078
  %v1986 = vunpack.c.h.b16 %v1078
  %v1987 = vunpack.c.l.b16 %v1079
  %v1988 = vunpack.c.h.b16 %v1079
  %v1989 = vunpack.c.l.b16 %v1080
  %v1990 = vunpack.c.l.b16 %v1081
  %v1991 = vunpack.c.h.b16 %v1081
  %v1992 = vunpack.c.l.b16 %v1082
  %v1993 = vunpack.c.h.b16 %v1082
  %v1994 = vunpack.c.l.b16 %v1083
  %v1995 = vunpack.c.l.b16 %v1084
  %v1996 = vunpack.c.h.b16 %v1084
  %v1997 = vunpack.c.l.b16 %v1085
  %v1998 = vunpack.c.h.b16 %v1085
  %v1999 = vunpack.c.l.b16 %v1086
  %v2000 = vunpack.c.l.b16 %v1087
  %v2001 = vunpack.c.h.b16 %v1087
  %v2002 = vunpack.c.l.b16 %v1088
  %v2003 = vunpack.c.h.b16 %v1088
  %v2004 = vunpack.c.l.b16 %v1089
  %v2005 = vunpack.c.l.b16 %v1090
  %v2006 = vunpack.c.h.b16 %v1090
  %v2007 = vunpack.c.l.b16 %v1091
  %v2008 = vunpack.c.h.b16 %v1091
  %v2009 = vunpack.c.l.b16 %v1092
  %v2010 = vunpack.c.l.b16 %v1093
  %v2011 = vunpack.c.h.b16 %v1093
  %v2012 = vunpack.c.l.b16 %v1094
  %v2013 = vunpack.c.h.b16 %v1094
  %v2014 = vunpack.c.l.b16 %v1095
  %v2015 = vunpack.c.l.b16 %v1096
  %v2016 = vunpack.c.h.b16 %v1096
  %v2017 = vunpack.c.l.b16 %v1097
  %v2018 = vunpack.c.h.b16 %v1097
  %v2019 = vunpack.c.l.b16 %v1098
  %v2020 = vunpack.c.l.b16 %v1099
  %v2021 = vunpack.c.h.b16 %v1099
  %v2022 = vunpack.c.l.b16 %v1100
  %v2023 = vunpack.c.h.b16 %v1100
  %v2024 = vunpack.c.l.b16 %v1101
  %v2025 = vunpack.c.l.b16 %v1102
  %v2026 = vunpack.c.h.b16 %v1102
  %v2027 = vunpack.c.l.b16 %v1103
  %v2028 = vunpack.c.h.b16 %v1103
  %v2029 = vunpack.c.l.b16 %v1104
  %v2030 = vunpack.c.l.b16 %v1105
  %v2031 = vunpack.c.h.b16 %v1105
  %v2032 = vunpack.c.l.b16 %v1106
  %v2033 = vunpack.c.h.b16 %v1106
  %v2034 = vunpack.c.l.b16 %v1107
  %v2035 = vunpack.c.l.b16 %v1108
  %v2036 = vunpack.c.h.b16 %v1108
  %v2037 = vunpack.c.l.b16 %v1109
  %v2038 = vunpack.c.h.b16 %v1109
  %v2039 = vunpack.c.l.b16 %v1110
  %v2040 = vunpack.c.l.b16 %v1111
  %v2041 = vunpack.c.h.b16 %v1111
  %v2042 = vunpack.c.l.b16 %v1112
  %v2043 = vunpack.c.h.b16 %v1112
  %v2044 = vunpack.c.l.b16 %v1113
  %v2045 = vunpack.c.l.b16 %v1114
  %v2046 = vunpack.c.h.b16 %v1114
  %v2047 = vunpack.c.l.b16 %v1115
  %v2048 = vunpack.c.h.b16 %v1115
  %v2049 = vunpack.c.l.b16 %v1116
  %v2050 = vunpack.c.l.b16 %v1117
  %v2051 = vunpack.c.h.b16 %v1117
  %v2052 = vunpack.c.l.b16 %v1118
  %v2053 = vunpack.c.h.b16 %v1118
  %v2054 = vunpack.c.l.b16 %v1119
  %v2055 = vunpack.c.l.b16 %v1120
  %v2056 = vunpack.c.h.b16 %v1120
  %v2057 = vunpack.c.l.b16 %v1121
  %v2058 = vunpack.c.h.b16 %v1121
  %v2059 = vunpack.c.l.b16 %v1122
  %v2060 = vunpack.c.l.b16 %v1123
  %v2061 = vunpack.c.h.b16 %v1123
  %v2062 = vunpack.c.l.b16 %v1124
  %v2063 = vunpack.c.h.b16 %v1124
  %v2064 = vunpack.c.l.b16 %v1125
  %v2065 = vunpack.c.l.b16 %v1126
  %v2066 = vunpack.c.h.b16 %v1126
  %v2067 = vunpack.c.l.b16 %v1127
  %v2068 = vunpack.c.h.b16 %v1127
  %v2069 = vunpack.c.l.b16 %v1128
  %v2070 = vunpack.c.l.b16 %v1129
  %v2071 = vunpack.c.h.b16 %v1129
  %v2072 = vunpack.c.l.b16 %v1130
  %v2073 = vunpack.c.h.b16 %v1130
  %v2074 = vunpack.c.l.b16 %v1131
  %v2075 = vunpack.c.l.b16 %v1132
  %v2076 = vunpack.c.h.b16 %v1132
  %v2077 = vunpack.c.l.b16 %v1133
  %v2078 = vunpack.c.h.b16 %v1133
  %v2079 = vunpack.c.l.b16 %v1134
  %v2080 = vunpack.c.l.b16 %v1135
  %v2081 = vunpack.c.h.b16 %v1135
  %v2082 = vunpack.c.l.b16 %v1136
  %v2083 = vunpack.c.h.b16 %v1136
  %v2084 = vunpack.c.l.b16 %v1137
  %v2085 = vunpack.c.l.b16 %v1138
  %v2086 = vunpack.c.h.b16 %v1138
  %v2087 = vunpack.c.l.b16 %v1139
  %v2088 = vunpack.c.h.b16 %v1139
  %v2089 = vunpack.c.l.b16 %v1140
  %v2090 = vunpack.c.l.b16 %v1141
  %v2091 = vunpack.c.h.b16 %v1141
  %v2092 = vunpack.c.l.b16 %v1142
  %v2093 = vunpack.c.h.b16 %v1142
  %v2094 = vunpack.c.l.b16 %v1143
  %v2095 = vunpack.c.l.b16 %v1144
  %v2096 = vunpack.c.h.b16 %v1144
  %v2097 = vunpack.c.l.b16 %v1145
  %v2098 = vunpack.c.h.b16 %v1145
  %v2099 = vunpack.c.l.b16 %v1146
  %v2100 = vunpack.c.l.b16 %v1147
  %v2101 = vunpack.c.h.b16 %v1147
  %v2102 = vunpack.c.l.b16 %v1148
  %v2103 = vunpack.c.h.b16 %v1148
  %v2104 = vunpack.c.l.b16 %v1149
  %v2105 = vunpack.c.l.b16 %v1150
  %v2106 = vunpack.c.h.b16 %v1150
  %v2107 = vunpack.c.l.b16 %v1151
  %v2108 = vunpack.c.h.b16 %v1151
  %v2109 = vunpack.c.l.b16 %v1152
  %v2110 = vunpack.c.l.b16 %v1153
  %v2111 = vunpack.c.h.b16 %v1153
  %v2112 = vunpack.c.l.b16 %v1154
  %v2113 = vunpack.c.h.b16 %v1154
  %v2114 = vunpack.c.l.b16 %v1155
  %v2115 = vunpack.c.l.b16 %v1156
  %v2116 = vunpack.c.h.b16 %v1156
  %v2117 = vunpack.c.l.b16 %v1157
  %v2118 = vunpack.c.h.b16 %v1157
  %v2119 = vunpack.c.l.b16 %v1158
  %v2120 = vunpack.c.l.b16 %v1159
  %v2121 = vunpack.c.h.b16 %v1159
  %v2122 = vunpack.c.l.b16 %v1160
  %v2123 = vunpack.c.h.b16 %v1160
  %v2124 = vunpack.c.l.b16 %v1161
  %v2125 = vunpack.c.l.b16 %v1162
  %v2126 = vunpack.c.h.b16 %v1162
  %v2127 = vunpack.c.l.b16 %v1163
  %v2128 = vunpack.c.h.b16 %v1163
  %v2129 = vunpack.c.l.b16 %v1164
  %v2130 = vunpack.c.l.b16 %v1165
  %v2131 = vunpack.c.h.b16 %v1165
  %v2132 = vunpack.c.l.b16 %v1166
  %v2133 = vunpack.c.h.b16 %v1166
  %v2134 = vunpack.c.l.b16 %v1167
  %v2135 = vunpack.c.l.b16 %v1168
  %v2136 = vunpack.c.h.b16 %v1168
  %v2137 = vunpack.c.l.b16 %v1169
  %v2138 = vunpack.c.h.b16 %v1169
  %v2139 = vunpack.c.l.b16 %v1170
  %v2140 = vunpack.c.l.b16 %v1171
  %v2141 = vunpack.c.h.b16 %v1171
  %v2142 = vunpack.c.l.b16 %v1172
  %v2143 = vunpack.c.h.b16 %v1172
  %v2144 = vunpack.c.l.b16 %v1173
  %v2145 = vunpack.c.l.b16 %v1174
  %v2146 = vunpack.c.h.b16 %v1174
  %v2147 = vunpack.c.l.b16 %v1175
  %v2148 = vunpack.c.h.b16 %v1175
  %v2149 = vunpack.c.l.b16 %v1176
  %v2150 = vunpack.c.l.b16 %v1177
  %v2151 = vunpack.c.h.b16 %v1177
  %v2152 = vunpack.c.l.b16 %v1178
  %v2153 = vunpack.c.h.b16 %v1178
  %v2154 = vunpack.c.l.b16 %v1179
  %v2155 = vunpack.c.l.b16 %v1180
  %v2156 = vunpack.c.h.b16 %v1180
  %v2157 = vunpack.c.l.b16 %v1181
  %v2158 = vunpack.c.h.b16 %v1181
  %v2159 = vunpack.c.l.b16 %v1182
  %v2160 = vunpack.c.l.b16 %v1183
  %v2161 = vunpack.c.h.b16 %v1183
  %v2162 = vunpack.c.l.b16 %v1184
  %v2163 = vunpack.c.h.b16 %v1184
  %v2164 = vunpack.c.l.b16 %v1185
  %v2165 = vunpack.c.l.b16 %v1186
  %v2166 = vunpack.c.h.b16 %v1186
  %v2167 = vunpack.c.l.b16 %v1187
  %v2168 = vunpack.c.h.b16 %v1187
  %v2169 = vunpack.c.l.b16 %v1188
  %v2170 = vunpack.c.l.b16 %v1189
  %v2171 = vunpack.c.h.b16 %v1189
  %v2172 = vunpack.c.l.b16 %v1190
  %v2173 = vunpack.c.h.b16 %v1190
  %v2174 = vunpack.c.l.b16 %v1191
  %v2175 = vunpack.c.l.b16 %v1192
  %v2176 = vunpack.c.h.b16 %v1192
  %v2177 = vunpack.c.l.b16 %v1193
  %v2178 = vunpack.c.h.b16 %v1193
  %v2179 = vunpack.c.l.b16 %v1194
  %v2180 = vunpack.c.l.b16 %v1195
  %v2181 = vunpack.c.h.b16 %v1195
  %v2182 = vunpack.c.l.b16 %v1196
  %v2183 = vunpack.c.h.b16 %v1196
  %v2184 = vunpack.c.l.b16 %v1197
  %v2185 = vunpack.c.l.b16 %v1198
  %v2186 = vunpack.c.h.b16 %v1198
  %v2187 = vunpack.c.l.b16 %v1199
  %v2188 = vunpack.c.h.b16 %v1199
  %v2189 = vunpack.c.l.b16 %v1200
  %v2190 = vunpack.c.l.b16 %v1201
  %v2191 = vunpack.c.h.b16 %v1201
  %v2192 = vunpack.c.l.b16 %v1202
  %v2193 = vunpack.c.h.b16 %v1202
  %v2194 = vunpack.c.l.b16 %v1203
  %v2195 = vunpack.c.l.b16 %v1204
  %v2196 = vunpack.c.h.b16 %v1204
  %v2197 = vunpack.c.l.b16 %v1205
  %v2198 = vunpack.c.h.b16 %v1205
  %v2199 = vunpack.c.l.b16 %v1206
  %v2200 = vunpack.c.l.b16 %v1207
  %v2201 = vunpack.c.h.b16 %v1207
  %v2202 = vunpack.c.l.b16 %v1208
  %v2203 = vunpack.c.h.b16 %v1208
  %v2204 = vunpack.c.l.b16 %v1209
  %v2205 = vunpack.c.l.b16 %v1210
  %v2206 = vunpack.c.h.b16 %v1210
  %v2207 = vunpack.c.l.b16 %v1211
  %v2208 = vunpack.c.h.b16 %v1211
  %v2209 = vunpack.c.l.b16 %v1212
  %v2210 = vunpack.c.l.b16 %v1213
  %v2211 = vunpack.c.h.b16 %v1213
  %v2212 = vunpack.c.l.b16 %v1214
  %v2213 = vunpack.c.h.b16 %v1214
  %v2214 = vunpack.c.l.b16 %v1215
  %v2215 = vunpack.c.l.b16 %v1216
  %v2216 = vunpack.c.h.b16 %v1216
  %v2217 = vunpack.c.l.b16 %v1217
  %v2218 = vunpack.c.h.b16 %v1217
  %v2219 = vunpack.c.l.b16 %v1218
  %v2220 = vunpack.c.l.b16 %v1219
  %v2221 = vunpack.c.h.b16 %v1219
  %v2222 = vunpack.c.l.b16 %v1220
  %v2223 = vunpack.c.h.b16 %v1220
  %v2224 = vunpack.c.l.b16 %v1221
  %v2225 = vunpack.c.l.b16 %v1222
  %v2226 = vunpack.c.h.b16 %v1222
  %v2227 = vunpack.c.l.b16 %v1223
  %v2228 = vunpack.c.h.b16 %v1223
  %v2229 = vunpack.c.l.b16 %v1224
  %v2230 = vunpack.c.l.b16 %v1225
  %v2231 = vunpack.c.h.b16 %v1225
  %v2232 = vunpack.c.l.b16 %v1226
  %v2233 = vunpack.c.h.b16 %v1226
  %v2234 = vunpack.c.l.b16 %v1227
  %v2235 = vunpack.c.l.b16 %v1228
  %v2236 = vunpack.c.h.b16 %v1228
  %v2237 = vunpack.c.l.b16 %v1229
  %v2238 = vunpack.c.h.b16 %v1229
  %v2239 = vunpack.c.l.b16 %v1230
  %v2240 = vunpack.c.l.b16 %v1231
  %v2241 = vunpack.c.h.b16 %v1231
  %v2242 = vunpack.c.l.b16 %v1232
  %v2243 = vunpack.c.h.b16 %v1232
  %v2244 = vunpack.c.l.b16 %v1233
  %v2245 = vunpack.c.l.b16 %v1234
  %v2246 = vunpack.c.h.b16 %v1234
  %v2247 = vunpack.c.l.b16 %v1235
  %v2248 = vunpack.c.h.b16 %v1235
  %v2249 = vunpack.c.l.b16 %v1236
  %v2250 = vunpack.c.l.b16 %v1237
  %v2251 = vunpack.c.h.b16 %v1237
  %v2252 = vunpack.c.l.b16 %v1238
  %v2253 = vunpack.c.h.b16 %v1238
  %v2254 = vunpack.c.l.b16 %v1239
  %v2255 = vunpack.c.l.b16 %v1240
  %v2256 = vunpack.c.h.b16 %v1240
  %v2257 = vunpack.c.l.b16 %v1241
  %v2258 = vunpack.c.h.b16 %v1241
  %v2259 = vunpack.c.l.b16 %v1242
  %v2260 = vunpack.c.l.b16 %v1243
  %v2261 = vunpack.c.h.b16 %v1243
  %v2262 = vunpack.c.l.b16 %v1244
  %v2263 = vunpack.c.h.b16 %v1244
  %v2264 = vunpack.c.l.b16 %v1245
  %v2265 = vunpack.c.l.b16 %v1246
  %v2266 = vunpack.c.h.b16 %v1246
  %v2267 = vunpack.c.l.b16 %v1247
  %v2268 = vunpack.c.h.b16 %v1247
  %v2269 = vunpack.c.l.b16 %v1248
  %v2270 = vunpack.c.l.b16 %v1249
  %v2271 = vunpack.c.h.b16 %v1249
  %v2272 = vunpack.c.l.b16 %v1250
  %v2273 = vunpack.c.h.b16 %v1250
  %v2274 = vunpack.c.l.b16 %v1251
  %v2275 = vunpack.c.l.b16 %v1252
  %v2276 = vunpack.c.h.b16 %v1252
  %v2277 = vunpack.c.l.b16 %v1253
  %v2278 = vunpack.c.h.b16 %v1253
  %v2279 = vunpack.c.l.b16 %v1254
  %v2280 = vunpack.c.l.b16 %v1255
  %v2281 = vunpack.c.h.b16 %v1255
  %v2282 = vunpack.c.l.b16 %v1256
  %v2283 = vunpack.c.h.b16 %v1256
  %v2284 = vunpack.c.l.b16 %v1257
  %v2285 = vunpack.c.l.b16 %v1258
  %v2286 = vunpack.c.h.b16 %v1258
  %v2287 = vunpack.c.l.b16 %v1259
  %v2288 = vunpack.c.h.b16 %v1259
  %v2289 = vunpack.c.l.b16 %v1260
  %v2290 = vunpack.c.l.b16 %v1261
  %v2291 = vunpack.c.h.b16 %v1261
  %v2292 = vunpack.c.l.b16 %v1262
  %v2293 = vunpack.c.h.b16 %v1262
  %v2294 = vunpack.c.l.b16 %v1263
  %v2295 = vunpack.c.l.b16 %v1264
  %v2296 = vunpack.c.h.b16 %v1264
  %v2297 = vunpack.c.l.b16 %v1265
  %v2298 = vunpack.c.h.b16 %v1265
  %v2299 = vunpack.c.l.b16 %v1266
  %v2300 = vunpack.c.l.b16 %v1267
  %v2301 = vunpack.c.h.b16 %v1267
  %v2302 = vunpack.c.l.b16 %v1268
  %v2303 = vunpack.c.h.b16 %v1268
  %v2304 = vunpack.c.l.b16 %v1269
  %v2305 = vunpack.c.l.b16 %v1270
  %v2306 = vunpack.c.h.b16 %v1270
  %v2307 = vunpack.c.l.b16 %v1271
  %v2308 = vunpack.c.h.b16 %v1271
  %v2309 = vunpack.c.l.b16 %v1272
  %v2310 = vunpack.c.l.b16 %v1273
  %v2311 = vunpack.c.h.b16 %v1273
  %v2312 = vunpack.c.l.b16 %v1274
  %v2313 = vunpack.c.h.b16 %v1274
  %v2314 = vunpack.c.l.b16 %v1275
  %v2315 = vunpack.c.l.b16 %v1276
  %v2316 = vunpack.c.h.b16 %v1276
  %v2317 = vunpack.c.l.b16 %v1277
  %v2318 = vunpack.c.h.b16 %v1277
  %v2319 = vunpack.c.l.b16 %v1278
  %v2320 = vunpack.c.l.b16 %v1279
  %v2321 = vunpack.c.h.b16 %v1279
  %v2322 = vunpack.c.l.b16 %v1280
  %v2323 = vunpack.c.h.b16 %v1280
  %v2324 = vunpack.c.l.b16 %v1281
  %v2325 = vunpack.c.l.b16 %v1282
  %v2326 = vunpack.c.h.b16 %v1282
  %v2327 = vunpack.c.l.b16 %v1283
  %v2328 = vunpack.c.h.b16 %v1283
  %v2329 = vunpack.c.l.b16 %v1284
  %v2330 = vunpack.c.l.b16 %v1285
  %v2331 = vunpack.c.h.b16 %v1285
  %v2332 = vunpack.c.l.b16 %v1286
  %v2333 = vunpack.c.h.b16 %v1286
  %v2334 = vunpack.c.l.b16 %v1287
  %v2335 = vunpack.c.l.b16 %v1288
  %v2336 = vunpack.c.h.b16 %v1288
  %v2337 = vunpack.c.l.b16 %v1289
  %v2338 = vunpack.c.h.b16 %v1289
  %v2339 = vunpack.c.l.b16 %v1290
  %v2340 = vunpack.c.l.b16 %v1291
  %v2341 = vunpack.c.h.b16 %v1291
  %v2342 = vunpack.c.l.b16 %v1292
  %v2343 = vunpack.c.h.b16 %v1292
  %v2344 = vunpack.c.l.b16 %v1293
  %v2345 = vpack.c.b16 %v1710, %v1705
  %v2346 = vpack.c.b16 %v1711, %v1706
  %v2347 = vpack.c.b16 %v1712, %v1707
  %v2348 = vpack.c.b16 %v1713, %v1708
  %v2349 = vpack.c.b16 %v1714, %v1709
  %v2350 = vpack.c.b16 %v1720, %v1715
  %v2351 = vpack.c.b16 %v1721, %v1716
  %v2352 = vpack.c.b16 %v1722, %v1717
  %v2353 = vpack.c.b16 %v1723, %v1718
  %v2354 = vpack.c.b16 %v1724, %v1719
  %v2355 = vpack.c.b16 %v1730, %v1725
  %v2356 = vpack.c.b16 %v1731, %v1726
  %v2357 = vpack.c.b16 %v1732, %v1727
  %v2358 = vpack.c.b16 %v1733, %v1728
  %v2359 = vpack.c.b16 %v1734, %v1729
  %v2360 = vpack.c.b16 %v1740, %v1735
  %v2361 = vpack.c.b16 %v1741, %v1736
  %v2362 = vpack.c.b16 %v1742, %v1737
  %v2363 = vpack.c.b16 %v1743, %v1738
  %v2364 = vpack.c.b16 %v1744, %v1739
  %v2365 = vpack.c.b16 %v1750, %v1745
  %v2366 = vpack.c.b16 %v1751, %v1746
  %v2367 = vpack.c.b16 %v1752, %v1747
  %v2368 = vpack.c.b16 %v1753, %v1748
  %v2369 = vpack.c.b16 %v1754, %v1749
  %v2370 = vpack.c.b16 %v1760, %v1755
  %v2371 = vpack.c.b16 %v1761, %v1756
  %v2372 = vpack.c.b16 %v1762, %v1757
  %v2373 = vpack.c.b16 %v1763, %v1758
  %v2374 = vpack.c.b16 %v1764, %v1759
  %v2375 = vpack.c.b16 %v1770, %v1765
  %v2376 = vpack.c.b16 %v1771, %v1766
  %v2377 = vpack.c.b16 %v1772, %v1767
  %v2378 = vpack.c.b16 %v1773, %v1768
  %v2379 = vpack.c.b16 %v1774, %v1769
  %v2380 = vpack.c.b16 %v1780, %v1775
  %v2381 = vpack.c.b16 %v1781, %v1776
  %v2382 = vpack.c.b16 %v1782, %v1777
  %v2383 = vpack.c.b16 %v1783, %v1778
  %v2384 = vpack.c.b16 %v1784, %v1779
  %v2385 = vpack.c.b16 %v1790, %v1785
  %v2386 = vpack.c.b16 %v1791, %v1786
  %v2387 = vpack.c.b16 %v1792, %v1787
  %v2388 = vpack.c.b16 %v1793, %v1788
  %v2389 = vpack.c.b16 %v1794, %v1789
  %v2390 = vpack.c.b16 %v1800, %v1795
  %v2391 = vpack.c.b16 %v1801, %v1796
  %v2392 = vpack.c.b16 %v1802, %v1797
  %v2393 = vpack.c.b16 %v1803, %v1798
  %v2394 = vpack.c.b16 %v1804, %v1799
  %v2395 = vpack.c.b16 %v1810, %v1805
  %v2396 = vpack.c.b16 %v1811, %v1806
  %v2397 = vpack.c.b16 %v1812, %v1807
  %v2398 = vpack.c.b16 %v1813, %v1808
  %v2399 = vpack.c.b16 %v1814, %v1809
  %v2400 = vpack.c.b16 %v1820, %v1815
  %v2401 = vpack.c.b16 %v1821, %v1816
  %v2402 = vpack.c.b16 %v1822, %v1817
  %v2403 = vpack.c.b16 %v1823, %v1818
  %v2404 = vpack.c.b16 %v1824, %v1819
  %v2405 = vpack.c.b16 %v1830, %v1825
  %v2406 = vpack.c.b16 %v1831, %v1826
  %v2407 = vpack.c.b16 %v1832, %v1827
  %v2408 = vpack.c.b16 %v1833, %v1828
  %v2409 = vpack.c.b16 %v1834, %v1829
  %v2410 = vpack.c.b16 %v1840, %v1835
  %v2411 = vpack.c.b16 %v1841, %v1836
  %v2412 = vpack.c.b16 %v1842, %v1837
  %v2413 = vpack.c.b16 %v1843, %v1838
  %v2414 = vpack.c.b16 %v1844, %v1839
  %v2415 = vpack.c.b16 %v1850, %v1845
  %v2416 = vpack.c.b16 %v1851, %v1846
  %v2417 = vpack.c.b16 %v1852, %v1847
  %v2418 = vpack.c.b16 %v1853, %v1848
  %v2419 = vpack.c.b16 %v1854, %v1849
  %v2420 = vpack.c.b16 %v1860, %v1855
  %v2421 = vpack.c.b16 %v1861, %v1856
  %v2422 = vpack.c.b16 %v1862, %v1857
  %v2423 = vpack.c.b16 %v1863, %v1858
  %v2424 = vpack.c.b16 %v1864, %v1859
  %v2425 = vpack.c.b16 %v1870, %v1865
  %v2426 = vpack.c.b16 %v1871, %v1866
  %v2427 = vpack.c.b16 %v1872, %v1867
  %v2428 = vpack.c.b16 %v1873, %v1868
  %v2429 = vpack.c.b16 %v1874, %v1869
  %v2430 = vpack.c.b16 %v1880, %v1875
  %v2431 = vpack.c.b16 %v1881, %v1876
  %v2432 = vpack.c.b16 %v1882, %v1877
  %v2433 = vpack.c.b16 %v1883, %v1878
  %v2434 = vpack.c.b16 %v1884, %v1879
  %v2435 = vpack.c.b16 %v1890, %v1885
  %v2436 = vpack.c.b16 %v1891, %v1886
  %v2437 = vpack.c.b16 %v1892, %v1887
  %v2438 = vpack.c.b16 %v1893, %v1888
  %v2439 = vpack.c.b16 %v1894, %v1889
  %v2440 = vpack.c.b16 %v1900, %v1895
  %v2441 = vpack.c.b16 %v1901, %v1896
  %v2442 = vpack.c.b16 %v1902, %v1897
  %v2443 = vpack.c.b16 %v1903, %v1898
  %v2444 = vpack.c.b16 %v1904, %v1899
  %v2445 = vpack.c.b16 %v1910, %v1905
  %v2446 = vpack.c.b16 %v1911, %v1906
  %v2447 = vpack.c.b16 %v1912, %v1907
  %v2448 = vpack.c.b16 %v1913, %v1908
  %v2449 = vpack.c.b16 %v1914, %v1909
  %v2450 = vpack.c.b16 %v1920, %v1915
  %v2451 = vpack.c.b16 %v1921, %v1916
  %v2452 = vpack.c.b16 %v1922, %v1917
  %v2453 = vpack.c.b16 %v1923, %v1918
  %v2454 = vpack.c.b16 %v1924, %v1919
  %v2455 = vpack.c.b16 %v1930, %v1925
  %v2456 = vpack.c.b16 %v1931, %v1926
  %v2457 = vpack.c.b16 %v1932, %v1927
  %v2458 = vpack.c.b16 %v1933, %v1928
  %v2459 = vpack.c.b16 %v1934, %v1929
  %v2460 = vpack.c.b16 %v1940, %v1935
  %v2461 = vpack.c.b16 %v1941, %v1936
  %v2462 = vpack.c.b16 %v1942, %v1937
  %v2463 = vpack.c.b16 %v1943, %v1938
  %v2464 = vpack.c.b16 %v1944, %v1939
  %v2465 = vpack.c.b16 %v1950, %v1945
  %v2466 = vpack.c.b16 %v1951, %v1946
  %v2467 = vpack.c.b16 %v1952, %v1947
  %v2468 = vpack.c.b16 %v1953, %v1948
  %v2469 = vpack.c.b16 %v1954, %v1949
  %v2470 = vpack.c.b16 %v1960, %v1955
  %v2471 = vpack.c.b16 %v1961, %v1956
  %v2472 = vpack.c.b16 %v1962, %v1957
  %v2473 = vpack.c.b16 %v1963, %v1958
  %v2474 = vpack.c.b16 %v1964, %v1959
  %v2475 = vpack.c.b16 %v1970, %v1965
  %v2476 = vpack.c.b16 %v1971, %v1966
  %v2477 = vpack.c.b16 %v1972, %v1967
  %v2478 = vpack.c.b16 %v1973, %v1968
  %v2479 = vpack.c.b16 %v1974, %v1969
  %v2480 = vpack.c.b16 %v1980, %v1975
  %v2481 = vpack.c.b16 %v1981, %v1976
  %v2482 = vpack.c.b16 %v1982, %v1977
  %v2483 = vpack.c.b16 %v1983, %v1978
  %v2484 = vpack.c.b16 %v1984, %v1979
  %v2485 = vpack.c.b16 %v1990, %v1985
  %v2486 = vpack.c.b16 %v1991, %v1986
  %v2487 = vpack.c.b16 %v1992, %v1987
  %v2488 = vpack.c.b16 %v1993, %v1988
  %v2489 = vpack.c.b16 %v1994, %v1989
  %v2490 = vpack.c.b16 %v2000, %v1995
  %v2491 = vpack.c.b16 %v2001, %v1996
  %v2492 = vpack.c.b16 %v2002, %v1997
  %v2493 = vpack.c.b16 %v2003, %v1998
  %v2494 = vpack.c.b16 %v2004, %v1999
  %v2495 = vpack.c.b16 %v2010, %v2005
  %v2496 = vpack.c.b16 %v2011, %v2006
  %v2497 = vpack.c.b16 %v2012, %v2007
  %v2498 = vpack.c.b16 %v2013, %v2008
  %v2499 = vpack.c.b16 %v2014, %v2009
  %v2500 = vpack.c.b16 %v2020, %v2015
  %v2501 = vpack.c.b16 %v2021, %v2016
  %v2502 = vpack.c.b16 %v2022, %v2017
  %v2503 = vpack.c.b16 %v2023, %v2018
  %v2504 = vpack.c.b16 %v2024, %v2019
  %v2505 = vpack.c.b16 %v2030, %v2025
  %v2506 = vpack.c.b16 %v2031, %v2026
  %v2507 = vpack.c.b16 %v2032, %v2027
  %v2508 = vpack.c.b16 %v2033, %v2028
  %v2509 = vpack.c.b16 %v2034, %v2029
  %v2510 = vpack.c.b16 %v2040, %v2035
  %v2511 = vpack.c.b16 %v2041, %v2036
  %v2512 = vpack.c.b16 %v2042, %v2037
  %v2513 = vpack.c.b16 %v2043, %v2038
  %v2514 = vpack.c.b16 %v2044, %v2039
  %v2515 = vpack.c.b16 %v2050, %v2045
  %v2516 = vpack.c.b16 %v2051, %v2046
  %v2517 = vpack.c.b16 %v2052, %v2047
  %v2518 = vpack.c.b16 %v2053, %v2048
  %v2519 = vpack.c.b16 %v2054, %v2049
  %v2520 = vpack.c.b16 %v2060, %v2055
  %v2521 = vpack.c.b16 %v2061, %v2056
  %v2522 = vpack.c.b16 %v2062, %v2057
  %v2523 = vpack.c.b16 %v2063, %v2058
  %v2524 = vpack.c.b16 %v2064, %v2059
  %v2525 = vpack.c.b16 %v2070, %v2065
  %v2526 = vpack.c.b16 %v2071, %v2066
  %v2527 = vpack.c.b16 %v2072, %v2067
  %v2528 = vpack.c.b16 %v2073, %v2068
  %v2529 = vpack.c.b16 %v2074, %v2069
  %v2530 = vpack.c.b16 %v2080, %v2075
  %v2531 = vpack.c.b16 %v2081, %v2076
  %v2532 = vpack.c.b16 %v2082, %v2077
  %v2533 = vpack.c.b16 %v2083, %v2078
  %v2534 = vpack.c.b16 %v2084, %v2079
  %v2535 = vpack.c.b16 %v2090, %v2085
  %v2536 = vpack.c.b16 %v2091, %v2086
  %v2537 = vpack.c.b16 %v2092, %v2087
  %v2538 = vpack.c.b16 %v2093, %v2088
  %v2539 = vpack.c.b16 %v2094, %v2089
  %v2540 = vpack.c.b16 %v2100, %v2095
  %v2541 = vpack.c.b16 %v2101, %v2096
  %v2542 = vpack.c.b16 %v2102, %v2097
  %v2543 = vpack.c.b16 %v2103, %v2098
  %v2544 = vpack.c.b16 %v2104, %v2099
  %v2545 = vpack.c.b16 %v2110, %v2105
  %v2546 = vpack.c.b16 %v2111, %v2106
  %v2547 = vpack.c.b16 %v2112, %v2107
  %v2548 = vpack.c.b16 %v2113, %v2108
  %v2549 = vpack.c.b16 %v2114, %v2109
  %v2550 = vpack.c.b16 %v2120, %v2115
  %v2551 = vpack.c.b16 %v2121, %v2116
  %v2552 = vpack.c.b16 %v2122, %v2117
  %v2553 = vpack.c.b16 %v2123, %v2118
  %v2554 = vpack.c.b16 %v2124, %v2119
  %v2555 = vpack.c.b16 %v2130, %v2125
  %v2556 = vpack.c.b16 %v2131, %v2126
  %v2557 = vpack.c.b16 %v2132, %v2127
  %v2558 = vpack.c.b16 %v2133, %v2128
  %v2559 = vpack.c.b16 %v2134, %v2129
  %v2560 = vpack.c.b16 %v2140, %v2135
  %v2561 = vpack.c.b16 %v2141, %v2136
  %v2562 = vpack.c.b16 %v2142, %v2137
  %v2563 = vpack.c.b16 %v2143, %v2138
  %v2564 = vpack.c.b16 %v2144, %v2139
  %v2565 = vpack.c.b16 %v2150, %v2145
  %v2566 = vpack.c.b16 %v2151, %v2146
  %v2567 = vpack.c.b16 %v2152, %v2147
  %v2568 = vpack.c.b16 %v2153, %v2148
  %v2569 = vpack.c.b16 %v2154, %v2149
  %v2570 = vpack.c.b16 %v2160, %v2155
  %v2571 = vpack.c.b16 %v2161, %v2156
  %v2572 = vpack.c.b16 %v2162, %v2157
  %v2573 = vpack.c.b16 %v2163, %v2158
  %v2574 = vpack.c.b16 %v2164, %v2159
  %v2575 = vpack.c.b16 %v2170, %v2165
  %v2576 = vpack.c.b16 %v2171, %v2166
  %v2577 = vpack.c.b16 %v2172, %v2167
  %v2578 = vpack.c.b16 %v2173, %v2168
  %v2579 = vpack.c.b16 %v2174, %v2169
  %v2580 = vpack.c.b16 %v2180, %v2175
  %v2581 = vpack.c.b16 %v2181, %v2176
  %v2582 = vpack.c.b16 %v2182, %v2177
  %v2583 = vpack.c.b16 %v2183, %v2178
  %v2584 = vpack.c.b16 %v2184, %v2179
  %v2585 = vpack.c.b16 %v2190, %v2185
  %v2586 = vpack.c.b16 %v2191, %v2186
  %v2587 = vpack.c.b16 %v2192, %v2187
  %v2588 = vpack.c.b16 %v2193, %v2188
  %v2589 = vpack.c.b16 %v2194, %v2189
  %v2590 = vpack.c.b16 %v2200, %v2195
  %v2591 = vpack.c.b16 %v2201, %v2196
  %v2592 = vpack.c.b16 %v2202, %v2197
  %v2593 = vpack.c.b16 %v2203, %v2198
  %v2594 = vpack.c.b16 %v2204, %v2199
  %v2595 = vpack.c.b16 %v2210, %v2205
  %v2596 = vpack.c.b16 %v2211, %v2206
  %v2597 = vpack.c.b16 %v2212, %v2207
  %v2598 = vpack.c.b16 %v2213, %v2208
  %v2599 = vpack.c.b16 %v2214, %v2209
  %v2600 = vpack.c.b16 %v2220, %v2215
  %v2601 = vpack.c.b16 %v2221, %v2216
  %v2602 = vpack.c.b16 %v2222, %v2217
  %v2603 = vpack.c.b16 %v2223, %v2218
  %v2604 = vpack.c.b16 %v2224, %v2219
  %v2605 = vpack.c.b16 %v2230, %v2225
  %v2606 = vpack.c.b16 %v2231, %v2226
  %v2607 = vpack.c.b16 %v2232, %v2227
  %v2608 = vpack.c.b16 %v2233, %v2228
  %v2609 = vpack.c.b16 %v2234, %v2229
  %v2610 = vpack.c.b16 %v2240, %v2235
  %v2611 = vpack.c.b16 %v2241, %v2236
  %v2612 = vpack.c.b16 %v2242, %v2237
  %v2613 = vpack.c.b16 %v2243, %v2238
  %v2614 = vpack.c.b16 %v2244, %v2239
  %v2615 = vpack.c.b16 %v2250, %v2245
  %v2616 = vpack.c.b16 %v2251, %v2246
  %v2617 = vpack.c.b16 %v2252, %v2247
  %v2618 = vpack.c.b16 %v2253, %v2248
  %v2619 = vpack.c.b16 %v2254, %v2249
  %v2620 = vpack.c.b16 %v2260, %v2255
  %v2621 = vpack.c.b16 %v2261, %v2256
  %v2622 = vpack.c.b16 %v2262, %v2257
  %v2623 = vpack.c.b16 %v2263, %v2258
  %v2624 = vpack.c.b16 %v2264, %v2259
  %v2625 = vpack.c.b16 %v2270, %v2265
  %v2626 = vpack.c.b16 %v2271, %v2266
  %v2627 = vpack.c.b16 %v2272, %v2267
  %v2628 = vpack.c.b16 %v2273, %v2268
  %v2629 = vpack.c.b16 %v2274, %v2269
  %v2630 = vpack.c.b16 %v2280, %v2275
  %v2631 = vpack.c.b16 %v2281, %v2276
  %v2632 = vpack.c.b16 %v2282, %v2277
  %v2633 = vpack.c.b16 %v2283, %v2278
  %v2634 = vpack.c.b16 %v2284, %v2279
  %v2635 = vpack.c.b16 %v2290, %v2285
  %v2636 = vpack.c.b16 %v2291, %v2286
  %v2637 = vpack.c.b16 %v2292, %v2287
  %v2638 = vpack.c.b16 %v2293, %v2288
  %v2639 = vpack.c.b16 %v2294, %v2289
  %v2640 = vpack.c.b16 %v2300, %v2295
  %v2641 = vpack.c.b16 %v2301, %v2296
  %v2642 = vpack.c.b16 %v2302, %v2297
  %v2643 = vpack.c.b16 %v2303, %v2298
  %v2644 = vpack.c.b16 %v2304, %v2299
  %v2645 = vpack.c.b16 %v2310, %v2305
  %v2646 = vpack.c.b16 %v2311, %v2306
  %v2647 = vpack.c.b16 %v2312, %v2307
  %v2648 = vpack.c.b16 %v2313, %v2308
  %v2649 = vpack.c.b16 %v2314, %v2309
  %v2650 = vpack.c.b16 %v2320, %v2315
  %v2651 = vpack.c.b16 %v2321, %v2316
  %v2652 = vpack.c.b16 %v2322, %v2317
  %v2653 = vpack.c.b16 %v2323, %v2318
  %v2654 = vpack.c.b16 %v2324, %v2319
  %v2655 = vpack.c.b16 %v2330, %v2325
  %v2656 = vpack.c.b16 %v2331, %v2326
  %v2657 = vpack.c.b16 %v2332, %v2327
  %v2658 = vpack.c.b16 %v2333, %v2328
  %v2659 = vpack.c.b16 %v2334, %v2329
  %v2660 = vpack.c.b16 %v2340, %v2335
  %v2661 = vpack.c.b16 %v2341, %v2336
  %v2662 = vpack.c.b16 %v2342, %v2337
  %v2663 = vpack.c.b16 %v2343, %v2338
  %v2664 = vpack.c.b16 %v2344, %v2339
  %2985 = vmatprep.subr.bf16.mxu0 %v2346
  %2986 = vmatpush1.bf16.msra.mxu0 %v2345
  %2987 = vmatprep.subr.bf16.mxu0 %v2351
  %2988 = vmatpush1.bf16.msra.mxu0 %v2350
  %2989 = vmatprep.subr.bf16.mxu0 %v2356
  %2990 = vmatpush1.bf16.msra.mxu0 %v2355
  %2991 = vmatprep.subr.bf16.mxu0 %v2361
  %2992 = vmatpush1.bf16.msra.mxu0 %v2360
  %2993 = vmatprep.subr.bf16.mxu0 %v2366
  %2994 = vmatpush1.bf16.msra.mxu0 %v2365
  %2995 = vmatprep.subr.bf16.mxu0 %v2371
  %2996 = vmatpush1.bf16.msra.mxu0 %v2370
  %2997 = vmatprep.subr.bf16.mxu0 %v2376
  %2998 = vmatpush1.bf16.msra.mxu0 %v2375
  %2999 = vmatprep.subr.bf16.mxu0 %v2381
  %3000 = vmatpush1.bf16.msra.mxu0 %v2380
  %3001 = vmatprep.subr.bf16.mxu0 %v2386
  %3002 = vmatpush1.bf16.msra.mxu0 %v2385
  %3003 = vmatprep.subr.bf16.mxu0 %v2391
  %3004 = vmatpush1.bf16.msra.mxu0 %v2390
  %3005 = vmatprep.subr.bf16.mxu0 %v2396
  %3006 = vmatpush1.bf16.msra.mxu0 %v2395
  %3007 = vmatprep.subr.bf16.mxu0 %v2401
  %3008 = vmatpush1.bf16.msra.mxu0 %v2400
  %3009 = vmatprep.subr.bf16.mxu0 %v2406
  %3010 = vmatpush1.bf16.msra.mxu0 %v2405
  %3011 = vmatprep.subr.bf16.mxu0 %v2411
  %3012 = vmatpush1.bf16.msra.mxu0 %v2410
  %3013 = vmatprep.subr.bf16.mxu0 %v2416
  %3014 = vmatpush1.bf16.msra.mxu0 %v2415
  %3015 = vmatprep.subr.bf16.mxu0 %v2421
  %3016 = vmatpush1.bf16.msra.mxu0 %v2420
  %3017 = vmatprep.mubr.bf16.mxu0 %v903
  %3018 = vmatmul.mubr.bf16.gmra.mrb[0].mxu0 %v902
  %v3019 = vpop.f32.mrb[0].mxu0
  %v3020 = vadd.f32 %v1299, %v3019
  %v3021 = vpop.f32.mrb[0].mxu0
  %v3022 = vadd.f32 %v1303, %v3021
  %v3023 = vpop.f32.mrb[0].mxu0
  %v3024 = vpop.f32.mrb[0].mxu0
  %3025 = vdwg.mxu0
  %3026 = vmatprep.subr.bf16.mxu0 %v2426
  %3027 = vmatpush1.bf16.msra.mxu0 %v2425
  %3028 = vmatprep.subr.bf16.mxu0 %v2431
  %3029 = vmatpush1.bf16.msra.mxu0 %v2430
  %3030 = vmatprep.subr.bf16.mxu0 %v2436
  %3031 = vmatpush1.bf16.msra.mxu0 %v2435
  %3032 = vmatprep.subr.bf16.mxu0 %v2441
  %3033 = vmatpush1.bf16.msra.mxu0 %v2440
  %3034 = vmatprep.subr.bf16.mxu0 %v2446
  %3035 = vmatpush1.bf16.msra.mxu0 %v2445
  %3036 = vmatprep.subr.bf16.mxu0 %v2451
  %3037 = vmatpush1.bf16.msra.mxu0 %v2450
  %3038 = vmatprep.subr.bf16.mxu0 %v2456
  %3039 = vmatpush1.bf16.msra.mxu0 %v2455
  %3040 = vmatprep.subr.bf16.mxu0 %v2461
  %3041 = vmatpush1.bf16.msra.mxu0 %v2460
  %3042 = vmatprep.subr.bf16.mxu0 %v2466
  %3043 = vmatpush1.bf16.msra.mxu0 %v2465
  %3044 = vmatprep.subr.bf16.mxu0 %v2471
  %3045 = vmatpush1.bf16.msra.mxu0 %v2470
  %3046 = vmatprep.subr.bf16.mxu0 %v2476
  %3047 = vmatpush1.bf16.msra.mxu0 %v2475
  %3048 = vmatprep.subr.bf16.mxu0 %v2481
  %3049 = vmatpush1.bf16.msra.mxu0 %v2480
  %3050 = vmatprep.subr.bf16.mxu0 %v2486
  %3051 = vmatpush1.bf16.msra.mxu0 %v2485
  %3052 = vmatprep.subr.bf16.mxu0 %v2491
  %3053 = vmatpush1.bf16.msra.mxu0 %v2490
  %3054 = vmatprep.subr.bf16.mxu0 %v2496
  %3055 = vmatpush1.bf16.msra.mxu0 %v2495
  %3056 = vmatprep.subr.bf16.mxu0 %v2501
  %3057 = vmatpush1.bf16.msra.mxu0 %v2500
  %3058 = vmatprep.mubr.bf16.mxu0 %v905
  %3059 = vmatmul.mubr.bf16.gmra.mrb[0].mxu0 %v904
  %v3060 = vpop.f32.mrb[0].mxu0
  %v3061 = vadd.f32 %v3020, %v3060
  %v3062 = vpop.f32.mrb[0].mxu0
  %v3063 = vadd.f32 %v3022, %v3062
  %v3064 = vpop.f32.mrb[0].mxu0
  %v3065 = vpop.f32.mrb[0].mxu0
  %3066 = vdwg.mxu0
  %3067 = vmatprep.subr.bf16.mxu0 %v2506
  %3068 = vmatpush1.bf16.msra.mxu0 %v2505
  %3069 = vmatprep.subr.bf16.mxu0 %v2511
  %3070 = vmatpush1.bf16.msra.mxu0 %v2510
  %3071 = vmatprep.subr.bf16.mxu0 %v2516
  %3072 = vmatpush1.bf16.msra.mxu0 %v2515
  %3073 = vmatprep.subr.bf16.mxu0 %v2521
  %3074 = vmatpush1.bf16.msra.mxu0 %v2520
  %3075 = vmatprep.subr.bf16.mxu0 %v2526
  %3076 = vmatpush1.bf16.msra.mxu0 %v2525
  %3077 = vmatprep.subr.bf16.mxu0 %v2531
  %3078 = vmatpush1.bf16.msra.mxu0 %v2530
  %3079 = vmatprep.subr.bf16.mxu0 %v2536
  %3080 = vmatpush1.bf16.msra.mxu0 %v2535
  %3081 = vmatprep.subr.bf16.mxu0 %v2541
  %3082 = vmatpush1.bf16.msra.mxu0 %v2540
  %3083 = vmatprep.subr.bf16.mxu0 %v2546
  %3084 = vmatpush1.bf16.msra.mxu0 %v2545
  %3085 = vmatprep.subr.bf16.mxu0 %v2551
  %3086 = vmatpush1.bf16.msra.mxu0 %v2550
  %3087 = vmatprep.subr.bf16.mxu0 %v2556
  %3088 = vmatpush1.bf16.msra.mxu0 %v2555
  %3089 = vmatprep.subr.bf16.mxu0 %v2561
  %3090 = vmatpush1.bf16.msra.mxu0 %v2560
  %3091 = vmatprep.subr.bf16.mxu0 %v2566
  %3092 = vmatpush1.bf16.msra.mxu0 %v2565
  %3093 = vmatprep.subr.bf16.mxu0 %v2571
  %3094 = vmatpush1.bf16.msra.mxu0 %v2570
  %3095 = vmatprep.subr.bf16.mxu0 %v2576
  %3096 = vmatpush1.bf16.msra.mxu0 %v2575
  %3097 = vmatprep.subr.bf16.mxu0 %v2581
  %3098 = vmatpush1.bf16.msra.mxu0 %v2580
  %3099 = vmatprep.mubr.bf16.mxu0 %v907
  %3100 = vmatmul.mubr.bf16.gmra.mrb[0].mxu0 %v906
  %v3101 = vpop.f32.mrb[0].mxu0
  %v3102 = vadd.f32 %v3061, %v3101
  %v3103 = vpop.f32.mrb[0].mxu0
  %v3104 = vadd.f32 %v3063, %v3103
  %v3105 = vpop.f32.mrb[0].mxu0
  %v3106 = vpop.f32.mrb[0].mxu0
  %3107 = vdwg.mxu0
  %3108 = vmatprep.subr.bf16.mxu0 %v2586
  %3109 = vmatpush1.bf16.msra.mxu0 %v2585
  %3110 = vmatprep.subr.bf16.mxu0 %v2591
  %3111 = vmatpush1.bf16.msra.mxu0 %v2590
  %3112 = vmatprep.subr.bf16.mxu0 %v2596
  %3113 = vmatpush1.bf16.msra.mxu0 %v2595
  %3114 = vmatprep.subr.bf16.mxu0 %v2601
  %3115 = vmatpush1.bf16.msra.mxu0 %v2600
  %3116 = vmatprep.subr.bf16.mxu0 %v2606
  %3117 = vmatpush1.bf16.msra.mxu0 %v2605
  %3118 = vmatprep.subr.bf16.mxu0 %v2611
  %3119 = vmatpush1.bf16.msra.mxu0 %v2610
  %3120 = vmatprep.subr.bf16.mxu0 %v2616
  %3121 = vmatpush1.bf16.msra.mxu0 %v2615
  %3122 = vmatprep.subr.bf16.mxu0 %v2621
  %3123 = vmatpush1.bf16.msra.mxu0 %v2620
  %3124 = vmatprep.subr.bf16.mxu0 %v2626
  %3125 = vmatpush1.bf16.msra.mxu0 %v2625
  %3126 = vmatprep.subr.bf16.mxu0 %v2631
  %3127 = vmatpush1.bf16.msra.mxu0 %v2630
  %3128 = vmatprep.subr.bf16.mxu0 %v2636
  %3129 = vmatpush1.bf16.msra.mxu0 %v2635
  %3130 = vmatprep.subr.bf16.mxu0 %v2641
  %3131 = vmatpush1.bf16.msra.mxu0 %v2640
  %3132 = vmatprep.subr.bf16.mxu0 %v2646
  %3133 = vmatpush1.bf16.msra.mxu0 %v2645
  %3134 = vmatprep.subr.bf16.mxu0 %v2651
  %3135 = vmatpush1.bf16.msra.mxu0 %v2650
  %3136 = vmatprep.subr.bf16.mxu0 %v2656
  %3137 = vmatpush1.bf16.msra.mxu0 %v2655
  %3138 = vmatprep.subr.bf16.mxu0 %v2661
  %3139 = vmatpush1.bf16.msra.mxu0 %v2660
  %3140 = vmatprep.mubr.bf16.mxu0 %v909
  %3141 = vmatmul.mubr.bf16.gmra.mrb[0].mxu0 %v908
  %v3142 = vpop.f32.mrb[0].mxu0
  %v3143 = vadd.f32 %v3102, %v3142
  %v3144 = vpop.f32.mrb[0].mxu0
  %v3145 = vadd.f32 %v3104, %v3144
  %v3146 = vpop.f32.mrb[0].mxu0
  %v3147 = vpop.f32.mrb[0].mxu0
  %3148 = vdwg.mxu0
  %3149 = vmatprep.subr.bf16.mxu0 %v2348
  %3150 = vmatpush1.bf16.msra.mxu0 %v2347
  %3151 = vmatprep.subr.bf16.mxu0 %v2353
  %3152 = vmatpush1.bf16.msra.mxu0 %v2352
  %3153 = vmatprep.subr.bf16.mxu0 %v2358
  %3154 = vmatpush1.bf16.msra.mxu0 %v2357
  %3155 = vmatprep.subr.bf16.mxu0 %v2363
  %3156 = vmatpush1.bf16.msra.mxu0 %v2362
  %3157 = vmatprep.subr.bf16.mxu0 %v2368
  %3158 = vmatpush1.bf16.msra.mxu0 %v2367
  %3159 = vmatprep.subr.bf16.mxu0 %v2373
  %3160 = vmatpush1.bf16.msra.mxu0 %v2372
  %3161 = vmatprep.subr.bf16.mxu0 %v2378
  %3162 = vmatpush1.bf16.msra.mxu0 %v2377
  %3163 = vmatprep.subr.bf16.mxu0 %v2383
  %3164 = vmatpush1.bf16.msra.mxu0 %v2382
  %3165 = vmatprep.subr.bf16.mxu0 %v2388
  %3166 = vmatpush1.bf16.msra.mxu0 %v2387
  %3167 = vmatprep.subr.bf16.mxu0 %v2393
  %3168 = vmatpush1.bf16.msra.mxu0 %v2392
  %3169 = vmatprep.subr.bf16.mxu0 %v2398
  %3170 = vmatpush1.bf16.msra.mxu0 %v2397
  %3171 = vmatprep.subr.bf16.mxu0 %v2403
  %3172 = vmatpush1.bf16.msra.mxu0 %v2402
  %3173 = vmatprep.subr.bf16.mxu0 %v2408
  %3174 = vmatpush1.bf16.msra.mxu0 %v2407
  %3175 = vmatprep.subr.bf16.mxu0 %v2413
  %3176 = vmatpush1.bf16.msra.mxu0 %v2412
  %3177 = vmatprep.subr.bf16.mxu0 %v2418
  %3178 = vmatpush1.bf16.msra.mxu0 %v2417
  %3179 = vmatprep.subr.bf16.mxu0 %v2423
  %3180 = vmatpush1.bf16.msra.mxu0 %v2422
  %3181 = vmatprep.mubr.bf16.mxu0 %v903
  %3182 = vmatmul.mubr.bf16.gmra.mrb[0].mxu0 %v902
  %v3183 = vpop.f32.mrb[0].mxu0
  %v3184 = vadd.f32 %v1307, %v3183
  %v3185 = vpop.f32.mrb[0].mxu0
  %v3186 = vadd.f32 %v1311, %v3185
  %v3187 = vpop.f32.mrb[0].mxu0
  %v3188 = vpop.f32.mrb[0].mxu0
  %3189 = vdwg.mxu0
  %3190 = vmatprep.subr.bf16.mxu0 %v2428
  %3191 = vmatpush1.bf16.msra.mxu0 %v2427
  %3192 = vmatprep.subr.bf16.mxu0 %v2433
  %3193 = vmatpush1.bf16.msra.mxu0 %v2432
  %3194 = vmatprep.subr.bf16.mxu0 %v2438
  %3195 = vmatpush1.bf16.msra.mxu0 %v2437
  %3196 = vmatprep.subr.bf16.mxu0 %v2443
  %3197 = vmatpush1.bf16.msra.mxu0 %v2442
  %3198 = vmatprep.subr.bf16.mxu0 %v2448
  %3199 = vmatpush1.bf16.msra.mxu0 %v2447
  %3200 = vmatprep.subr.bf16.mxu0 %v2453
  %3201 = vmatpush1.bf16.msra.mxu0 %v2452
  %3202 = vmatprep.subr.bf16.mxu0 %v2458
  %3203 = vmatpush1.bf16.msra.mxu0 %v2457
  %3204 = vmatprep.subr.bf16.mxu0 %v2463
  %3205 = vmatpush1.bf16.msra.mxu0 %v2462
  %3206 = vmatprep.subr.bf16.mxu0 %v2468
  %3207 = vmatpush1.bf16.msra.mxu0 %v2467
  %3208 = vmatprep.subr.bf16.mxu0 %v2473
  %3209 = vmatpush1.bf16.msra.mxu0 %v2472
  %3210 = vmatprep.subr.bf16.mxu0 %v2478
  %3211 = vmatpush1.bf16.msra.mxu0 %v2477
  %3212 = vmatprep.subr.bf16.mxu0 %v2483
  %3213 = vmatpush1.bf16.msra.mxu0 %v2482
  %3214 = vmatprep.subr.bf16.mxu0 %v2488
  %3215 = vmatpush1.bf16.msra.mxu0 %v2487
  %3216 = vmatprep.subr.bf16.mxu0 %v2493
  %3217 = vmatpush1.bf16.msra.mxu0 %v2492
  %3218 = vmatprep.subr.bf16.mxu0 %v2498
  %3219 = vmatpush1.bf16.msra.mxu0 %v2497
  %3220 = vmatprep.subr.bf16.mxu0 %v2503
  %3221 = vmatpush1.bf16.msra.mxu0 %v2502
  %3222 = vmatprep.mubr.bf16.mxu0 %v905
  %3223 = vmatmul.mubr.bf16.gmra.mrb[0].mxu0 %v904
  %v3224 = vpop.f32.mrb[0].mxu0
  %v3225 = vadd.f32 %v3184, %v3224
  %v3226 = vpop.f32.mrb[0].mxu0
  %v3227 = vadd.f32 %v3186, %v3226
  %v3228 = vpop.f32.mrb[0].mxu0
  %v3229 = vpop.f32.mrb[0].mxu0
  %3230 = vdwg.mxu0
  %3231 = vmatprep.subr.bf16.mxu0 %v2508
  %3232 = vmatpush1.bf16.msra.mxu0 %v2507
  %3233 = vmatprep.subr.bf16.mxu0 %v2513
  %3234 = vmatpush1.bf16.msra.mxu0 %v2512
  %3235 = vmatprep.subr.bf16.mxu0 %v2518
  %3236 = vmatpush1.bf16.msra.mxu0 %v2517
  %3237 = vmatprep.subr.bf16.mxu0 %v2523
  %3238 = vmatpush1.bf16.msra.mxu0 %v2522
  %3239 = vmatprep.subr.bf16.mxu0 %v2528
  %3240 = vmatpush1.bf16.msra.mxu0 %v2527
  %3241 = vmatprep.subr.bf16.mxu0 %v2533
  %3242 = vmatpush1.bf16.msra.mxu0 %v2532
  %3243 = vmatprep.subr.bf16.mxu0 %v2538
  %3244 = vmatpush1.bf16.msra.mxu0 %v2537
  %3245 = vmatprep.subr.bf16.mxu0 %v2543
  %3246 = vmatpush1.bf16.msra.mxu0 %v2542
  %3247 = vmatprep.subr.bf16.mxu0 %v2548
  %3248 = vmatpush1.bf16.msra.mxu0 %v2547
  %3249 = vmatprep.subr.bf16.mxu0 %v2553
  %3250 = vmatpush1.bf16.msra.mxu0 %v2552
  %3251 = vmatprep.subr.bf16.mxu0 %v2558
  %3252 = vmatpush1.bf16.msra.mxu0 %v2557
  %3253 = vmatprep.subr.bf16.mxu0 %v2563
  %3254 = vmatpush1.bf16.msra.mxu0 %v2562
  %3255 = vmatprep.subr.bf16.mxu0 %v2568
  %3256 = vmatpush1.bf16.msra.mxu0 %v2567
  %3257 = vmatprep.subr.bf16.mxu0 %v2573
  %3258 = vmatpush1.bf16.msra.mxu0 %v2572
  %3259 = vmatprep.subr.bf16.mxu0 %v2578
  %3260 = vmatpush1.bf16.msra.mxu0 %v2577
  %3261 = vmatprep.subr.bf16.mxu0 %v2583
  %3262 = vmatpush1.bf16.msra.mxu0 %v2582
  %3263 = vmatprep.mubr.bf16.mxu0 %v907
  %3264 = vmatmul.mubr.bf16.gmra.mrb[0].mxu0 %v906
  %v3265 = vpop.f32.mrb[0].mxu0
  %v3266 = vadd.f32 %v3225, %v3265
  %v3267 = vpop.f32.mrb[0].mxu0
  %v3268 = vadd.f32 %v3227, %v3267
  %v3269 = vpop.f32.mrb[0].mxu0
  %v3270 = vpop.f32.mrb[0].mxu0
  %3271 = vdwg.mxu0
  %3272 = vmatprep.subr.bf16.mxu0 %v2588
  %3273 = vmatpush1.bf16.msra.mxu0 %v2587
  %3274 = vmatprep.subr.bf16.mxu0 %v2593
  %3275 = vmatpush1.bf16.msra.mxu0 %v2592
  %3276 = vmatprep.subr.bf16.mxu0 %v2598
  %3277 = vmatpush1.bf16.msra.mxu0 %v2597
  %3278 = vmatprep.subr.bf16.mxu0 %v2603
  %3279 = vmatpush1.bf16.msra.mxu0 %v2602
  %3280 = vmatprep.subr.bf16.mxu0 %v2608
  %3281 = vmatpush1.bf16.msra.mxu0 %v2607
  %3282 = vmatprep.subr.bf16.mxu0 %v2613
  %3283 = vmatpush1.bf16.msra.mxu0 %v2612
  %3284 = vmatprep.subr.bf16.mxu0 %v2618
  %3285 = vmatpush1.bf16.msra.mxu0 %v2617
  %3286 = vmatprep.subr.bf16.mxu0 %v2623
  %3287 = vmatpush1.bf16.msra.mxu0 %v2622
  %3288 = vmatprep.subr.bf16.mxu0 %v2628
  %3289 = vmatpush1.bf16.msra.mxu0 %v2627
  %3290 = vmatprep.subr.bf16.mxu0 %v2633
  %3291 = vmatpush1.bf16.msra.mxu0 %v2632
  %3292 = vmatprep.subr.bf16.mxu0 %v2638
  %3293 = vmatpush1.bf16.msra.mxu0 %v2637
  %3294 = vmatprep.subr.bf16.mxu0 %v2643
  %3295 = vmatpush1.bf16.msra.mxu0 %v2642
  %3296 = vmatprep.subr.bf16.mxu0 %v2648
  %3297 = vmatpush1.bf16.msra.mxu0 %v2647
  %3298 = vmatprep.subr.bf16.mxu0 %v2653
  %3299 = vmatpush1.bf16.msra.mxu0 %v2652
  %3300 = vmatprep.subr.bf16.mxu0 %v2658
  %3301 = vmatpush1.bf16.msra.mxu0 %v2657
  %3302 = vmatprep.subr.bf16.mxu0 %v2663
  %3303 = vmatpush1.bf16.msra.mxu0 %v2662
  %3304 = vmatprep.mubr.bf16.mxu0 %v909
  %3305 = vmatmul.mubr.bf16.gmra.mrb[0].mxu0 %v908
  %v3306 = vpop.f32.mrb[0].mxu0
  %v3307 = vadd.f32 %v3266, %v3306
  %v3308 = vpop.f32.mrb[0].mxu0
  %v3309 = vadd.f32 %v3268, %v3308
  %v3310 = vpop.f32.mrb[0].mxu0
  %v3311 = vpop.f32.mrb[0].mxu0
  %3312 = vdwg.mxu0
  %3313 = vmatprep.subr.bf16.mxu0 0
  %3314 = vmatpush1.bf16.msra.mxu0 %v2349
  %3315 = vmatprep.subr.bf16.mxu0 0
  %3316 = vmatpush1.bf16.msra.mxu0 %v2354
  %3317 = vmatprep.subr.bf16.mxu0 0
  %3318 = vmatpush1.bf16.msra.mxu0 %v2359
  %3319 = vmatprep.subr.bf16.mxu0 0
  %3320 = vmatpush1.bf16.msra.mxu0 %v2364
  %3321 = vmatprep.subr.bf16.mxu0 0
  %3322 = vmatpush1.bf16.msra.mxu0 %v2369
  %3323 = vmatprep.subr.bf16.mxu0 0
  %3324 = vmatpush1.bf16.msra.mxu0 %v2374
  %3325 = vmatprep.subr.bf16.mxu0 0
  %3326 = vmatpush1.bf16.msra.mxu0 %v2379
  %3327 = vmatprep.subr.bf16.mxu0 0
  %3328 = vmatpush1.bf16.msra.mxu0 %v2384
  %3329 = vmatprep.subr.bf16.mxu0 0
  %3330 = vmatpush1.bf16.msra.mxu0 %v2389
  %3331 = vmatprep.subr.bf16.mxu0 0
  %3332 = vmatpush1.bf16.msra.mxu0 %v2394
  %3333 = vmatprep.subr.bf16.mxu0 0
  %3334 = vmatpush1.bf16.msra.mxu0 %v2399
  %3335 = vmatprep.subr.bf16.mxu0 0
  %3336 = vmatpush1.bf16.msra.mxu0 %v2404
  %3337 = vmatprep.subr.bf16.mxu0 0
  %3338 = vmatpush1.bf16.msra.mxu0 %v2409
  %3339 = vmatprep.subr.bf16.mxu0 0
  %3340 = vmatpush1.bf16.msra.mxu0 %v2414
  %3341 = vmatprep.subr.bf16.mxu0 0
  %3342 = vmatpush1.bf16.msra.mxu0 %v2419
  %3343 = vmatprep.subr.bf16.mxu0 0
  %3344 = vmatpush1.bf16.msra.mxu0 %v2424
  %3345 = vmatprep.mubr.bf16.mxu0 %v903
  %3346 = vmatmul.mubr.bf16.gmra.mrb[0].mxu0 %v902
  %v3347 = vpop.f32.mrb[0].mxu0
  %v3348 = vadd.f32 %v1315, %v3347
  %v3349 = vpop.f32.mrb[0].mxu0
  %v3350 = vpop.f32.mrb[0].mxu0
  %v3351 = vpop.f32.mrb[0].mxu0
  %3352 = vdwg.mxu0
  %3353 = vmatprep.subr.bf16.mxu0 0
  %3354 = vmatpush1.bf16.msra.mxu0 %v2429
  %3355 = vmatprep.subr.bf16.mxu0 0
  %3356 = vmatpush1.bf16.msra.mxu0 %v2434
  %3357 = vmatprep.subr.bf16.mxu0 0
  %3358 = vmatpush1.bf16.msra.mxu0 %v2439
  %3359 = vmatprep.subr.bf16.mxu0 0
  %3360 = vmatpush1.bf16.msra.mxu0 %v2444
  %3361 = vmatprep.subr.bf16.mxu0 0
  %3362 = vmatpush1.bf16.msra.mxu0 %v2449
  %3363 = vmatprep.subr.bf16.mxu0 0
  %3364 = vmatpush1.bf16.msra.mxu0 %v2454
  %3365 = vmatprep.subr.bf16.mxu0 0
  %3366 = vmatpush1.bf16.msra.mxu0 %v2459
  %3367 = vmatprep.subr.bf16.mxu0 0
  %3368 = vmatpush1.bf16.msra.mxu0 %v2464
  %3369 = vmatprep.subr.bf16.mxu0 0
  %3370 = vmatpush1.bf16.msra.mxu0 %v2469
  %3371 = vmatprep.subr.bf16.mxu0 0
  %3372 = vmatpush1.bf16.msra.mxu0 %v2474
  %3373 = vmatprep.subr.bf16.mxu0 0
  %3374 = vmatpush1.bf16.msra.mxu0 %v2479
  %3375 = vmatprep.subr.bf16.mxu0 0
  %3376 = vmatpush1.bf16.msra.mxu0 %v2484
  %3377 = vmatprep.subr.bf16.mxu0 0
  %3378 = vmatpush1.bf16.msra.mxu0 %v2489
  %3379 = vmatprep.subr.bf16.mxu0 0
  %3380 = vmatpush1.bf16.msra.mxu0 %v2494
  %3381 = vmatprep.subr.bf16.mxu0 0
  %3382 = vmatpush1.bf16.msra.mxu0 %v2499
  %3383 = vmatprep.subr.bf16.mxu0 0
  %3384 = vmatpush1.bf16.msra.mxu0 %v2504
  %3385 = vmatprep.mubr.bf16.mxu0 %v905
  %3386 = vmatmul.mubr.bf16.gmra.mrb[0].mxu0 %v904
  %v3387 = vpop.f32.mrb[0].mxu0
  %v3388 = vadd.f32 %v3348, %v3387
  %v3389 = vpop.f32.mrb[0].mxu0
  %v3390 = vpop.f32.mrb[0].mxu0
  %v3391 = vpop.f32.mrb[0].mxu0
  %3392 = vdwg.mxu0
  %3393 = vmatprep.subr.bf16.mxu0 0
  %3394 = vmatpush1.bf16.msra.mxu0 %v2509
  %3395 = vmatprep.subr.bf16.mxu0 0
  %3396 = vmatpush1.bf16.msra.mxu0 %v2514
  %3397 = vmatprep.subr.bf16.mxu0 0
  %3398 = vmatpush1.bf16.msra.mxu0 %v2519
  %3399 = vmatprep.subr.bf16.mxu0 0
  %3400 = vmatpush1.bf16.msra.mxu0 %v2524
  %3401 = vmatprep.subr.bf16.mxu0 0
  %3402 = vmatpush1.bf16.msra.mxu0 %v2529
  %3403 = vmatprep.subr.bf16.mxu0 0
  %3404 = vmatpush1.bf16.msra.mxu0 %v2534
  %3405 = vmatprep.subr.bf16.mxu0 0
  %3406 = vmatpush1.bf16.msra.mxu0 %v2539
  %3407 = vmatprep.subr.bf16.mxu0 0
  %3408 = vmatpush1.bf16.msra.mxu0 %v2544
  %3409 = vmatprep.subr.bf16.mxu0 0
  %3410 = vmatpush1.bf16.msra.mxu0 %v2549
  %3411 = vmatprep.subr.bf16.mxu0 0
  %3412 = vmatpush1.bf16.msra.mxu0 %v2554
  %3413 = vmatprep.subr.bf16.mxu0 0
  %3414 = vmatpush1.bf16.msra.mxu0 %v2559
  %3415 = vmatprep.subr.bf16.mxu0 0
  %3416 = vmatpush1.bf16.msra.mxu0 %v2564
  %3417 = vmatprep.subr.bf16.mxu0 0
  %3418 = vmatpush1.bf16.msra.mxu0 %v2569
  %3419 = vmatprep.subr.bf16.mxu0 0
  %3420 = vmatpush1.bf16.msra.mxu0 %v2574
  %3421 = vmatprep.subr.bf16.mxu0 0
  %3422 = vmatpush1.bf16.msra.mxu0 %v2579
  %3423 = vmatprep.subr.bf16.mxu0 0
  %3424 = vmatpush1.bf16.msra.mxu0 %v2584
  %3425 = vmatprep.mubr.bf16.mxu0 %v907
  %3426 = vmatmul.mubr.bf16.gmra.mrb[0].mxu0 %v906
  %v3427 = vpop.f32.mrb[0].mxu0
  %v3428 = vadd.f32 %v3388, %v3427
  %v3429 = vpop.f32.mrb[0].mxu0
  %v3430 = vpop.f32.mrb[0].mxu0
  %v3431 = vpop.f32.mrb[0].mxu0
  %3432 = vdwg.mxu0
  %3433 = vmatprep.subr.bf16.mxu0 0
  %3434 = vmatpush1.bf16.msra.mxu0 %v2589
  %3435 = vmatprep.subr.bf16.mxu0 0
  %3436 = vmatpush1.bf16.msra.mxu0 %v2594
  %3437 = vmatprep.subr.bf16.mxu0 0
  %3438 = vmatpush1.bf16.msra.mxu0 %v2599
  %3439 = vmatprep.subr.bf16.mxu0 0
  %3440 = vmatpush1.bf16.msra.mxu0 %v2604
  %3441 = vmatprep.subr.bf16.mxu0 0
  %3442 = vmatpush1.bf16.msra.mxu0 %v2609
  %3443 = vmatprep.subr.bf16.mxu0 0
  %3444 = vmatpush1.bf16.msra.mxu0 %v2614
  %3445 = vmatprep.subr.bf16.mxu0 0
  %3446 = vmatpush1.bf16.msra.mxu0 %v2619
  %3447 = vmatprep.subr.bf16.mxu0 0
  %3448 = vmatpush1.bf16.msra.mxu0 %v2624
  %3449 = vmatprep.subr.bf16.mxu0 0
  %3450 = vmatpush1.bf16.msra.mxu0 %v2629
  %3451 = vmatprep.subr.bf16.mxu0 0
  %3452 = vmatpush1.bf16.msra.mxu0 %v2634
  %3453 = vmatprep.subr.bf16.mxu0 0
  %3454 = vmatpush1.bf16.msra.mxu0 %v2639
  %3455 = vmatprep.subr.bf16.mxu0 0
  %3456 = vmatpush1.bf16.msra.mxu0 %v2644
  %3457 = vmatprep.subr.bf16.mxu0 0
  %3458 = vmatpush1.bf16.msra.mxu0 %v2649
  %3459 = vmatprep.subr.bf16.mxu0 0
  %3460 = vmatpush1.bf16.msra.mxu0 %v2654
  %3461 = vmatprep.subr.bf16.mxu0 0
  %3462 = vmatpush1.bf16.msra.mxu0 %v2659
  %3463 = vmatprep.subr.bf16.mxu0 0
  %3464 = vmatpush1.bf16.msra.mxu0 %v2664
  %3465 = vmatprep.mubr.bf16.mxu0 %v909
  %3466 = vmatmul.mubr.bf16.gmra.mrb[0].mxu0 %v908
  %v3467 = vpop.f32.mrb[0].mxu0
  %v3468 = vadd.f32 %v3428, %v3467
  %v3469 = vpop.f32.mrb[0].mxu0
  %v3470 = vpop.f32.mrb[0].mxu0
  %v3471 = vpop.f32.mrb[0].mxu0
  %3472 = vdwg.mxu0
  %v3473 = vadd.f32 %v3143, %v3145
  %v3474 = vadd.f32 %v3473, %v3307
  %v3475 = vadd.f32 %v3474, %v3309
  %v3476 = vmul.f32 %v3475, 0.25
  %v3477 = vlaneseq
  %v3478 = vand.u32 %v3477, 127
  %vm3479 = vcmp.lt.s32.totalorder %v3478, 51
  %v3480 = vsub.f32 %v3143, %v3476
  %v3481 = vadd.f32 %v3480, %v3468
  %v3482 = vsel %vm3479, %v3481, -1e+30
  %vm3483 = vcmask 1041408
  %v3484 = vsel %vm3483, %v3482, -inf
  %3485 = vmax.xlane.f32.xlu0 %v3484
  %v3486 = vpop.xlane.xlu0 %3485
  %v3487 = vsub.f32 %v3482, %v3486
  %v3488 = vmul.f32 %v3487, 1.442695
  %v3489 = vpow.pop %v3488
  %v3490 = vsel %vm3479, %v3489, 0.0
  %v3491 = vsel %vm3483, %v3490, 0.0
  %3492 = vadd.xlane.f32.xlu0 %v3491
  %v3493 = vpop.xlane.xlu0 %3492
  %v3494 = vrcp.pop %v3493
  %v3495 = vmul.f32 %v3490, %v3494
  %3496 = vst [vmem:[%s7] sm:$0x3] %v3495
  %v3497 = vsub.f32 %v3145, %v3476
  %v3498 = vadd.f32 %v3497, %v3468
  %v3499 = vsel %vm3479, %v3498, -1e+30
  %v3500 = vsel %vm3483, %v3499, -inf
  %3501 = vmax.xlane.f32.xlu0 %v3500
  %v3502 = vpop.xlane.xlu0 %3501
  %v3503 = vsub.f32 %v3499, %v3502
  %v3504 = vmul.f32 %v3503, 1.442695
  %v3505 = vpow.pop %v3504
  %v3506 = vsel %vm3479, %v3505, 0.0
  %v3507 = vsel %vm3483, %v3506, 0.0
  %3508 = vadd.xlane.f32.xlu0 %v3507
  %v3509 = vpop.xlane.xlu0 %3508
  %v3510 = vrcp.pop %v3509
  %v3511 = vmul.f32 %v3506, %v3510
  %3512 = vst [vmem:[%s7 + $0x2] sm:$0x3] %v3511
  %v3513 = vsub.f32 %v3307, %v3476
  %v3514 = vadd.f32 %v3513, %v3468
  %v3515 = vsel %vm3479, %v3514, -1e+30
  %v3516 = vsel %vm3483, %v3515, -inf
  %3517 = vmax.xlane.f32.xlu0 %v3516
  %v3518 = vpop.xlane.xlu0 %3517
  %v3519 = vsub.f32 %v3515, %v3518
  %v3520 = vmul.f32 %v3519, 1.442695
  %v3521 = vpow.pop %v3520
  %v3522 = vsel %vm3479, %v3521, 0.0
  %v3523 = vsel %vm3483, %v3522, 0.0
  %3524 = vadd.xlane.f32.xlu0 %v3523
  %v3525 = vpop.xlane.xlu0 %3524
  %v3526 = vrcp.pop %v3525
  %v3527 = vmul.f32 %v3522, %v3526
  %3528 = vst [vmem:[%s7 + $0x4] sm:$0x3] %v3527
  %v3529 = vsub.f32 %v3309, %v3476
  %v3530 = vadd.f32 %v3529, %v3468
  %v3531 = vsel %vm3479, %v3530, -1e+30
  %v3532 = vsel %vm3483, %v3531, -inf
  %3533 = vmax.xlane.f32.xlu0 %v3532
  %v3534 = vpop.xlane.xlu0 %3533
  %v3535 = vsub.f32 %v3531, %v3534
  %v3536 = vmul.f32 %v3535, 1.442695
  %v3537 = vpow.pop %v3536
  %v3538 = vsel %vm3479, %v3537, 0.0
  %v3539 = vsel %vm3483, %v3538, 0.0
  %3540 = vadd.xlane.f32.xlu0 %v3539
  %v3541 = vpop.xlane.xlu0 %3540
  %v3542 = vrcp.pop %v3541
  %v3543 = vmul.f32 %v3538, %v3542
  %3544 = vst [vmem:[%s7 + $0x6] sm:$0x3] %v3543
  // Predicated region
  $region30: #{distributional_dueling_dqn_forward.5} parent=0 // pred_check
    _
  $region31: #{distributional_dueling_dqn_forward.5} parent=0 // pred_check_branch
    %3546 = sbr.rel (0) target = $region33
  $region32: #{distributional_dueling_dqn_forward.5} parent=0 // pred_region
    _
  $region33: #{distributional_dueling_dqn_forward.5} parent=0 // pred_fallthru
    _
  // Predicated region
  $region34: #{distributional_dueling_dqn_forward.5} parent=0 // pred_check
    _
  $region35: #{distributional_dueling_dqn_forward.5} parent=0 // pred_check_branch
    %3548 = sbr.rel (0) target = $region37
  $region36: #{distributional_dueling_dqn_forward.5} parent=0 // pred_region
    _
  $region37: #{distributional_dueling_dqn_forward.5} parent=0 // pred_fallthru
    _

</llo_original>
